<compile_context>
chip_gen: v7x
topology: tpu7x:2x2x1
jax: 0.10.0
libtpu: 0.0.40
codegen_flags: <defaults>
</compile_context>

<pallas_src>
import functools
import math

import jax
import jax.numpy as jnp
from jax.experimental import pallas as pl
from jax.experimental.pallas import tpu as pltpu

LANE = 128          # TPU lane width: channel dims are padded to a multiple of this.
TILE_M_MAX = 512    # row-tile cap for the flat (M, C) streaming kernels.


# ----------------------------- layout helpers --------------------------------

def _round_up(n, m):
    return ((n + m - 1) // m) * m


def _pad_last(x, target):
    pad = target - x.shape[-1]
    if pad == 0:
        return x
    return jnp.pad(x, [(0, 0)] * (x.ndim - 1) + [(0, pad)])


def _pad_weight_hwio(w, cin_p, cout_p):
    return jnp.pad(w, ((0, 0), (0, 0),
                       (0, cin_p - w.shape[2]), (0, cout_p - w.shape[3])))


def _choose_tm(m, cap=TILE_M_MAX):
    """Pick the largest row tile <= cap dividing m; else pad m up to a tile."""
    for t in (512, 256, 128, 64, 32, 16, 8):
        if t <= cap and m % t == 0:
            return t, m
    return cap, _round_up(m, cap)


# --------------------------- flat (M, C) kernels ------------------------------

def _matmul_bias_kernel(x_ref, w_ref, b_ref, o_ref, *, relu):
    acc = jnp.dot(x_ref[...], w_ref[...], preferred_element_type=jnp.float32)
    acc = acc + b_ref[...]
    if relu:
        acc = jnp.maximum(acc, 0.0)
    o_ref[...] = acc


def matmul_bias(x, w, b2d, relu=False):
    """(M, K) @ (K, N) + b [, ReLU].  Row tiles; M padded up if needed."""
    m, k = x.shape
    n = w.shape[1]
    tm, mp = _choose_tm(m)
    if mp != m:
        x = jnp.pad(x, ((0, mp - m), (0, 0)))
    out = pl.pallas_call(
        functools.partial(_matmul_bias_kernel, relu=relu),
        out_shape=jax.ShapeDtypeStruct((mp, n), jnp.float32),
        grid_spec=pltpu.PrefetchScalarGridSpec(
            num_scalar_prefetch=0,
            grid=(mp // tm,),
            in_specs=[pl.BlockSpec((tm, k), lambda i: (i, 0)),
                      pl.BlockSpec((k, n), lambda i: (0, 0)),
                      pl.BlockSpec((1, n), lambda i: (0, 0))],
            out_specs=pl.BlockSpec((tm, n), lambda i: (i, 0))),
        compiler_params=pltpu.CompilerParams(dimension_semantics=("parallel",)),
    )(x, w, b2d)
    return out[:m] if mp != m else out


def _scale_shift_relu_kernel(x_ref, s_ref, t_ref, o_ref):
    o_ref[...] = jnp.maximum(x_ref[...] * s_ref[...] + t_ref[...], 0.0)


def scale_shift_relu(x, scale2d, shift2d):
    """Per-channel x*scale + shift, ReLU over (M, C)."""
    m, c = x.shape
    tm, mp = _choose_tm(m)
    if mp != m:
        x = jnp.pad(x, ((0, mp - m), (0, 0)))
    out = pl.pallas_call(
        _scale_shift_relu_kernel,
        out_shape=jax.ShapeDtypeStruct((mp, c), jnp.float32),
        grid_spec=pltpu.PrefetchScalarGridSpec(
            num_scalar_prefetch=0,
            grid=(mp // tm,),
            in_specs=[pl.BlockSpec((tm, c), lambda i: (i, 0)),
                      pl.BlockSpec((1, c), lambda i: (0, 0)),
                      pl.BlockSpec((1, c), lambda i: (0, 0))],
            out_specs=pl.BlockSpec((tm, c), lambda i: (i, 0))),
        compiler_params=pltpu.CompilerParams(dimension_semantics=("parallel",)),
    )(x, scale2d, shift2d)
    return out[:m] if mp != m else out


# ----------- fused 3x3 conv (+BN-stats epilogue, +BN/ReLU prologue) -----------

def _row_index_map(n, h, *, kh):          # halo row h+kh of the spatially padded input
    return (n, h + kh, 0, 0)


def _const4_map(n, h):
    return (0, 0, 0, 0)


def _const2_map(n, h):
    return (0, 0)


def _out_pad_map(n, h):                   # write into a padded output frame (row h+1)
    return (n, h + 1, 0, 0)


def _out_map(n, h):
    return (n, h, 0, 0)


def _conv3x3_rows_kernel(*refs, n_inputs, has_prologue, pad_out, H, W, cout):
    # Ref layout: [rows(3) per input] ... [weight per input] ... [scale, shift]?
    #             [out, stats]
    idx = 0
    row_refs = []
    for _ in range(n_inputs):
        row_refs.append(refs[idx:idx + 3])
        idx += 3
    w_refs = refs[idx:idx + n_inputs]
    idx += n_inputs
    if has_prologue:
        scale_ref, shift_ref = refs[idx], refs[idx + 1]
        idx += 2
    out_ref, stats_ref = refs[idx], refs[idx + 1]

    h = pl.program_id(1)
    if has_prologue:
        col = jax.lax.broadcasted_iota(jnp.int32, (W + 2, 1), 0)
        col_valid = jnp.logical_and(col >= 1, col <= W)   # true at non-halo columns

    acc = jnp.zeros((W, cout), jnp.float32)
    for i in range(n_inputs):
        for kh in range(3):
            x = row_refs[i][kh][0, 0]                                # (W+2, Cin)
            if has_prologue:
                # Fused BN + ReLU of the *previous* layer, masked so that the
                # spatial zero-padding positions (including the never-written
                # halo rows of the padded activation frame) stay exactly zero,
                # matching pad-after-BN semantics of the reference module.
                xn = jnp.maximum(x * scale_ref[...] + shift_ref[...], 0.0)
                row_valid = jnp.logical_and(h + kh >= 1, h + kh <= H)
                x = jnp.where(jnp.logical_and(col_valid, row_valid), xn, 0.0)
            for kw in range(3):
                acc = acc + jnp.dot(x[kw:kw + W, :], w_refs[i][kh, kw, :, :],
                                    preferred_element_type=jnp.float32)

    if pad_out:
        # Write directly into a spatially padded frame so the *next* conv can
        # read halo rows without a separate jnp.pad pass over the activation.
        z = jnp.zeros((1, cout), jnp.float32)
        row = jnp.concatenate([z, acc, z], axis=0)                   # (W+2, cout)
        out_ref[...] = row.reshape(1, 1, W + 2, cout)
    else:
        out_ref[...] = acc.reshape(1, 1, W, cout)

    # BatchNorm batch statistics fused into the epilogue: accumulate per-channel
    # sum and sum-of-squares of the pre-BN conv output across the whole grid.
    @pl.when(jnp.logical_and(pl.program_id(0) == 0, h == 0))
    def _():
        stats_ref[...] = jnp.zeros_like(stats_ref)

    stats_ref[...] += jnp.concatenate(
        [jnp.sum(acc, axis=0, keepdims=True),
         jnp.sum(acc * acc, axis=0, keepdims=True)], axis=0)


def conv3x3_fused(inputs, *, H, W, cout, prologue=None, pad_out=False):
    """Direct 3x3 conv (stride 1, pad 1) over NHWC inputs with spatial halo.

    inputs   : list of (x_halo (N, H+2, W+2, Cin_p), w (3, 3, Cin_p, cout));
               multiple entries implement a virtual channel concat.
    prologue : optional (scale (1, Cin_p), shift (1, Cin_p)) applied (with ReLU
               and halo masking) to the rows of all inputs before the conv.
    pad_out  : write the result into a zero-bordered (N, H+2, W+2, cout) frame.
    Returns (conv_out_pre_BN, stats (2, cout) = [sum, sum_sq]).
    """
    n_inputs = len(inputs)
    n = inputs[0][0].shape[0]

    args, in_specs = [], []
    for x_hp, _ in inputs:
        cin = x_hp.shape[-1]
        for kh in range(3):
            args.append(x_hp)
            in_specs.append(pl.BlockSpec((1, 1, W + 2, cin),
                                         functools.partial(_row_index_map, kh=kh)))
    for _, w in inputs:
        args.append(w)
        in_specs.append(pl.BlockSpec(w.shape, _const4_map))
    if prologue is not None:
        for p in prologue:
            args.append(p)
            in_specs.append(pl.BlockSpec(p.shape, _const2_map))

    if pad_out:
        out_main = jax.ShapeDtypeStruct((n, H + 2, W + 2, cout), jnp.float32)
        out_main_spec = pl.BlockSpec((1, 1, W + 2, cout), _out_pad_map)
    else:
        out_main = jax.ShapeDtypeStruct((n, H, W, cout), jnp.float32)
        out_main_spec = pl.BlockSpec((1, 1, W, cout), _out_map)
    out_stats = jax.ShapeDtypeStruct((2, cout), jnp.float32)
    out_stats_spec = pl.BlockSpec((2, cout), _const2_map)

    kernel = functools.partial(_conv3x3_rows_kernel, n_inputs=n_inputs,
                               has_prologue=prologue is not None,
                               pad_out=pad_out, H=H, W=W, cout=cout)
    return pl.pallas_call(
        kernel,
        out_shape=(out_main, out_stats),
        grid_spec=pltpu.PrefetchScalarGridSpec(
            num_scalar_prefetch=0,
            grid=(n, H),
            in_specs=in_specs,
            out_specs=[out_main_spec, out_stats_spec]),
        # Both axes "arbitrary": the stats output is an accumulator revisited
        # across the whole grid.  (On v7x a 2-way partial-stat split would let
        # the grid shard across the 2 TensorCores.)
        compiler_params=pltpu.CompilerParams(
            dimension_semantics=("arbitrary", "arbitrary")),
    )(*args)


# ------------------------------- JAX glue -------------------------------------

def bilinear_upsample_x2_align_corners(x):
    """NHWC bilinear upsample by 2, align_corners=True (matches nn.Upsample)."""
    N, H, W, C = x.shape
    Ho, Wo = 2 * H, 2 * W

    def coords(out_size, in_size):
        if in_size == 1:
            z = jnp.zeros((out_size,), jnp.float32)
            return z, z.astype(jnp.int32), z.astype(jnp.int32)
        src = jnp.arange(out_size, dtype=jnp.float32) * (in_size - 1) / (out_size - 1)
        i0 = jnp.floor(src).astype(jnp.int32)
        i1 = jnp.minimum(i0 + 1, in_size - 1)
        return src - i0.astype(jnp.float32), i0, i1

    fh, h0, h1 = coords(Ho, H)
    fw, w0, w1 = coords(Wo, W)
    xh = (x[:, h0, :, :] * (1.0 - fh)[None, :, None, None]
          + x[:, h1, :, :] * fh[None, :, None, None])
    return (xh[:, :, w0, :] * (1.0 - fw)[None, None, :, None]
            + xh[:, :, w1, :] * fw[None, None, :, None])


def up_forward(x1_nchw, x2_nchw, params, eps=1e-5):
    """Forward pass of `up(in_ch, out_ch, Transpose=False)`; NCHW in, NCHW out."""
    # NCHW -> NHWC (channels-last = lane-dense) at the module boundary only.
    x1 = jnp.transpose(x1_nchw, (0, 2, 3, 1)).astype(jnp.float32)
    x2 = jnp.transpose(x2_nchw, (0, 2, 3, 1)).astype(jnp.float32)

    # ---- self.up -------------------------------------------------------------
    # Algebraic reorder: the 1x1 conv is per-pixel linear and align_corners
    # bilinear weights sum to 1, so conv1x1(upsample(x)) + b ==
    # upsample(conv1x1(x) + b) exactly.  Doing the conv at the low resolution
    # cuts its MACs 4x and halves the channels flowing through the upsample.
    # ReLU is applied after the upsample (fused by XLA into the final lerp).
    n, h1, w1_, cin = x1.shape
    half = params["w_up"].shape[1]
    kp = _round_up(cin, LANE)
    c1p = _round_up(half, LANE)
    w_up_p = jnp.pad(params["w_up"], ((0, kp - cin), (0, c1p - half)))
    b_up_p = _pad_last(params["b_up"], c1p).reshape(1, c1p)
    y = matmul_bias(_pad_last(x1, kp).reshape(n * h1 * w1_, kp), w_up_p, b_up_p,
                    relu=False)
    y = y.reshape(n, h1, w1_, c1p)   # padded channels are exactly 0
    x1u_p = jnp.maximum(bilinear_upsample_x2_align_corners(y), 0.0)
    hu, wu = 2 * h1, 2 * w1_

    # ---- F.pad x1 to x2's spatial size ----------------------------------------
    diff_y = x2.shape[1] - hu
    diff_x = x2.shape[2] - wu
    x1u_p = jnp.pad(x1u_p, ((0, 0),
                            (diff_y // 2, diff_y - diff_y // 2),
                            (diff_x // 2, diff_x - diff_x // 2),
                            (0, 0)))
    H, W = x2.shape[1], x2.shape[2]
    m_count = n * H * W

    # ---- conv1: 3x3 over the *virtual* concat [x2, x1u] -----------------------
    # w1 is split along its input-channel axis; the kernel accumulates two dot
    # sets into the same accumulator (no HBM concat).  Bias b1 is dropped: it is
    # exactly cancelled by the train-mode BatchNorm that follows.
    c2 = x2.shape[-1]
    c2p = _round_up(c2, LANE)
    mid = params["w1"].shape[-1]
    midp = _round_up(mid, LANE)
    x2_hp = jnp.pad(_pad_last(x2, c2p), ((0, 0), (1, 1), (1, 1), (0, 0)))
    x1u_hp = jnp.pad(x1u_p, ((0, 0), (1, 1), (1, 1), (0, 0)))
    w1a = _pad_weight_hwio(params["w1"][:, :, :c2, :], c2p, midp)
    w1b = _pad_weight_hwio(params["w1"][:, :, c2:, :], c1p, midp)
    h_raw_pad, stats1 = conv3x3_fused(
        [(x2_hp, w1a), (x1u_hp, w1b)], H=H, W=W, cout=midp,
        prologue=None, pad_out=True)

    # BN1 batch statistics (biased variance, PyTorch train mode).
    mean1 = stats1[0] / m_count
    var1 = jnp.maximum(stats1[1] / m_count - mean1 * mean1, 0.0)
    scale1 = _pad_last(params["g1"], midp) * jax.lax.rsqrt(var1 + eps)
    shift1 = _pad_last(params["be1"], midp) - mean1 * scale1

    # ---- conv2: 3x3 with BN1 + ReLU fused as a masked per-channel prologue ----
    cout = params["w2"].shape[-1]
    coutp = _round_up(cout, LANE)
    w2p = _pad_weight_hwio(params["w2"], midp, coutp)
    o_raw, stats2 = conv3x3_fused(
        [(h_raw_pad, w2p)], H=H, W=W, cout=coutp,
        prologue=(scale1.reshape(1, midp), shift1.reshape(1, midp)),
        pad_out=False)

    mean2 = stats2[0] / m_count
    var2 = jnp.maximum(stats2[1] / m_count - mean2 * mean2, 0.0)
    scale2 = _pad_last(params["g2"], coutp) * jax.lax.rsqrt(var2 + eps)
    shift2 = _pad_last(params["be2"], coutp) - mean2 * scale2

    # ---- BN2 + ReLU (module output, one streaming pass) ------------------------
    o = scale_shift_relu(o_raw.reshape(n * H * W, coutp),
                         scale2.reshape(1, coutp), shift2.reshape(1, coutp))
    o = o.reshape(n, H, W, coutp)[:, :, :, :cout]
    return jnp.transpose(o, (0, 3, 1, 2))       # back to NCHW


# ------------------------------ parameters ------------------------------------

def init_params(key, in_ch, out_ch):
    mid = out_ch
    k_up, k1, k2 = jax.random.split(key, 3)

    # 1x1 conv in self.up: xavier_normal, bias = 0.
    std_up = math.sqrt(2.0 / (in_ch + in_ch // 2))
    w_up = jax.random.normal(k_up, (in_ch, in_ch // 2), jnp.float32) * std_up
    b_up = jnp.zeros((in_ch // 2,), jnp.float32)

    # DoubleConv 3x3 convs, HWIO layout.  Their biases are kept for fidelity but
    # are mathematically cancelled by the train-mode BatchNorm that follows, so
    # the forward pass never reads them.
    std1 = math.sqrt(2.0 / (9 * in_ch))
    w1 = jax.random.normal(k1, (3, 3, in_ch, mid), jnp.float32) * std1
    b1 = jnp.zeros((mid,), jnp.float32)
    std2 = math.sqrt(2.0 / (9 * mid))
    w2 = jax.random.normal(k2, (3, 3, mid, out_ch), jnp.float32) * std2
    b2 = jnp.zeros((out_ch,), jnp.float32)

    # BatchNorm affine params (fresh module: gamma=1, beta=0).
    g1 = jnp.ones((mid,), jnp.float32)
    be1 = jnp.zeros((mid,), jnp.float32)
    g2 = jnp.ones((out_ch,), jnp.float32)
    be2 = jnp.zeros((out_ch,), jnp.float32)

    return dict(w_up=w_up, b_up=b_up, w1=w1, b1=b1, w2=w2, b2=b2,
                g1=g1, be1=be1, g2=g2, be2=be2)


# --------------------------------- main ----------------------------------------

if __name__ == "__main__":
    in_ch, out_ch = 4, 4
    N, H1, W1 = 2, 8, 8            # x1: low-res feature map with in_ch channels
    H2, W2 = 2 * H1, 2 * W1        # x2: skip connection with in_ch//2 channels

    key = jax.random.PRNGKey(0)
    kp, kx1, kx2 = jax.random.split(key, 3)
    params = init_params(kp, in_ch, out_ch)

    x1 = jax.random.normal(kx1, (N, in_ch, H1, W1), jnp.float32)       # NCHW
    x2 = jax.random.normal(kx2, (N, in_ch // 2, H2, W2), jnp.float32)  # NCHW

    fwd = jax.jit(up_forward)
    out = fwd(x1, x2, params)
    out = jax.block_until_ready(out)

    assert out.shape == (N, out_ch, H2, W2), out.shape
    assert bool(jnp.all(jnp.isfinite(out)))
    print("KERNEL_OK")
</pallas_src>

<mosaic_0001>
module attributes {stable_mosaic.version = 11 : i64} {
  func.func @_matmul_bias_kernel(%arg0: i32, %arg1: memref<128x128xf32, #tpu.memory_space<vmem>>, %arg2: memref<128x128xf32, #tpu.memory_space<vmem>>, %arg3: memref<1x128xf32, #tpu.memory_space<vmem>>, %arg4: memref<128x128xf32, #tpu.memory_space<vmem>>) attributes {dimension_semantics = [#tpu.dimension_semantics<parallel>], iteration_bounds = array<i64: 1>, scalar_prefetch = 0 : i64, scratch_operands = 0 : i64, tpu.core_type = #tpu.core_type<tc>, window_params = [{transform_indices = @transform_0, window_bounds = array<i64: 128, 128>}, {pipeline_mode = #tpu.pipeline_mode<synchronous>, transform_indices = @transform_1, window_bounds = array<i64: 128, 128>}, {pipeline_mode = #tpu.pipeline_mode<synchronous>, transform_indices = @transform_2, window_bounds = array<i64: 1, 128>}, {transform_indices = @transform_3, window_bounds = array<i64: 128, 128>}]} {
    %c0 = arith.constant 0 : index
    %c0_0 = arith.constant 0 : index
    %0 = vector.load %arg1[%c0, %c0_0] : memref<128x128xf32, #tpu.memory_space<vmem>>, vector<128x128xf32>
    %c0_1 = arith.constant 0 : index
    %c0_2 = arith.constant 0 : index
    %1 = vector.load %arg2[%c0_1, %c0_2] : memref<128x128xf32, #tpu.memory_space<vmem>>, vector<128x128xf32>
    %cst = arith.constant dense<0.000000e+00> : vector<128x128xf32>
    %2 = tpu.matmul %0, %1, %cst {dimension_numbers = #tpu.dot_dimension_numbers<[1], [0], [0], [1], [0, 0, 1, 1], [], []>} : vector<128x128xf32>, vector<128x128xf32>, vector<128x128xf32> -> vector<128x128xf32>
    %c0_3 = arith.constant 0 : index
    %c0_4 = arith.constant 0 : index
    %3 = vector.load %arg3[%c0_3, %c0_4] : memref<1x128xf32, #tpu.memory_space<vmem>>, vector<1x128xf32>
    %4 = vector.broadcast %3 : vector<1x128xf32> to vector<128x128xf32>
    %5 = arith.addf %2, %4 : vector<128x128xf32>
    %c0_5 = arith.constant 0 : index
    %c0_6 = arith.constant 0 : index
    %6 = vector.load %arg4[%c0_5, %c0_6] : memref<128x128xf32, #tpu.memory_space<vmem>>, vector<128x128xf32>
    tpu.vector_store %arg4[%c0_5, %c0_6], %5 {strides = array<i32>} : memref<128x128xf32, #tpu.memory_space<vmem>>, vector<128x128xf32>,
    return
  }
  func.func @transform_0(%arg0: i32) -> (i32, i32) {
    %c0_i32 = arith.constant 0 : i32
    %c0_i32_0 = arith.constant 0 : i32
    return %arg0, %c0_i32 : i32, i32
  }
  func.func @transform_1(%arg0: i32) -> (i32, i32) {
    %c0_i32 = arith.constant 0 : i32
    %c0_i32_0 = arith.constant 0 : i32
    %c0_i32_1 = arith.constant 0 : i32
    return %c0_i32, %c0_i32_0 : i32, i32
  }
  func.func @transform_2(%arg0: i32) -> (i32, i32) {
    %c0_i32 = arith.constant 0 : i32
    %c0_i32_0 = arith.constant 0 : i32
    %c0_i32_1 = arith.constant 0 : i32
    return %c0_i32, %c0_i32_0 : i32, i32
  }
  func.func @transform_3(%arg0: i32) -> (i32, i32) {
    %c0_i32 = arith.constant 0 : i32
    %c0_i32_0 = arith.constant 0 : i32
    return %arg0, %c0_i32 : i32, i32
  }
}

module attributes {stable_mosaic.version = 11 : i64} {
  func.func @_conv3x3_rows_kernel(%arg0: i32, %arg1: i32, %arg2: memref<1x1x18x128xf32, #tpu.memory_space<vmem>>, %arg3: memref<1x1x18x128xf32, #tpu.memory_space<vmem>>, %arg4: memref<1x1x18x128xf32, #tpu.memory_space<vmem>>, %arg5: memref<1x1x18x128xf32, #tpu.memory_space<vmem>>, %arg6: memref<1x1x18x128xf32, #tpu.memory_space<vmem>>, %arg7: memref<1x1x18x128xf32, #tpu.memory_space<vmem>>, %arg8: memref<3x3x128x128xf32, #tpu.memory_space<vmem>>, %arg9: memref<3x3x128x128xf32, #tpu.memory_space<vmem>>, %arg10: memref<1x1x18x128xf32, #tpu.memory_space<vmem>>, %arg11: memref<2x128xf32, #tpu.memory_space<vmem>>) attributes {dimension_semantics = [#tpu.dimension_semantics<arbitrary>, #tpu.dimension_semantics<arbitrary>], iteration_bounds = array<i64: 2, 16>, scalar_prefetch = 0 : i64, scratch_operands = 0 : i64, tpu.core_type = #tpu.core_type<tc>, window_params = [{transform_indices = @transform_0, window_bounds = array<i64: 1, 1, 18, 128>}, {transform_indices = @transform_1, window_bounds = array<i64: 1, 1, 18, 128>}, {transform_indices = @transform_2, window_bounds = array<i64: 1, 1, 18, 128>}, {transform_indices = @transform_3, window_bounds = array<i64: 1, 1, 18, 128>}, {transform_indices = @transform_4, window_bounds = array<i64: 1, 1, 18, 128>}, {transform_indices = @transform_5, window_bounds = array<i64: 1, 1, 18, 128>}, {pipeline_mode = #tpu.pipeline_mode<synchronous>, transform_indices = @transform_6, window_bounds = array<i64: 3, 3, 128, 128>}, {pipeline_mode = #tpu.pipeline_mode<synchronous>, transform_indices = @transform_7, window_bounds = array<i64: 3, 3, 128, 128>}, {transform_indices = @transform_8, window_bounds = array<i64: 1, 1, 18, 128>}, {pipeline_mode = #tpu.pipeline_mode<synchronous>, transform_indices = @transform_9, window_bounds = array<i64: 2, 128>}]} {
    %cst = arith.constant 0.000000e+00 : f32
    %0 = vector.broadcast %cst : f32 to vector<16x128xf32>
    %c0 = arith.constant 0 : index
    %c0_0 = arith.constant 0 : index
    %c0_1 = arith.constant 0 : index
    %c0_2 = arith.constant 0 : index
    %1 = vector.load %arg2[%c0, %c0_0, %c0_1, %c0_2] : memref<1x1x18x128xf32, #tpu.memory_space<vmem>>, vector<1x1x18x128xf32>
    %2 = vector.shape_cast %1 : vector<1x1x18x128xf32> to vector<18x128xf32>
    %3 = vector.extract_strided_slice %2 {offsets = [0, 0], sizes = [16, 128], strides = [1, 1]} : vector<18x128xf32> to vector<16x128xf32>
    %c0_3 = arith.constant 0 : index
    %c0_4 = arith.constant 0 : index
    %c0_5 = arith.constant 0 : index
    %c0_6 = arith.constant 0 : index
    %4 = vector.load %arg8[%c0_3, %c0_4, %c0_5, %c0_6] : memref<3x3x128x128xf32, #tpu.memory_space<vmem>>, vector<1x1x128x128xf32>
    %5 = vector.shape_cast %4 : vector<1x1x128x128xf32> to vector<128x128xf32>
    %cst_7 = arith.constant dense<0.000000e+00> : vector<16x128xf32>
    %6 = tpu.matmul %3, %5, %cst_7 {dimension_numbers = #tpu.dot_dimension_numbers<[1], [0], [0], [1], [0, 0, 1, 1], [], []>} : vector<16x128xf32>, vector<128x128xf32>, vector<16x128xf32> -> vector<16x128xf32>
    %7 = arith.addf %0, %6 : vector<16x128xf32>
    %8 = vector.extract_strided_slice %2 {offsets = [1, 0], sizes = [16, 128], strides = [1, 1]} : vector<18x128xf32> to vector<16x128xf32>
    %c0_8 = arith.constant 0 : index
    %c1 = arith.constant 1 : index
    %c0_9 = arith.constant 0 : index
    %c0_10 = arith.constant 0 : index
    %9 = vector.load %arg8[%c0_8, %c1, %c0_9, %c0_10] : memref<3x3x128x128xf32, #tpu.memory_space<vmem>>, vector<1x1x128x128xf32>
    %10 = vector.shape_cast %9 : vector<1x1x128x128xf32> to vector<128x128xf32>
    %cst_11 = arith.constant dense<0.000000e+00> : vector<16x128xf32>
    %11 = tpu.matmul %8, %10, %cst_11 {dimension_numbers = #tpu.dot_dimension_numbers<[1], [0], [0], [1], [0, 0, 1, 1], [], []>} : vector<16x128xf32>, vector<128x128xf32>, vector<16x128xf32> -> vector<16x128xf32>
    %12 = arith.addf %7, %11 : vector<16x128xf32>
    %13 = vector.extract_strided_slice %2 {offsets = [2, 0], sizes = [16, 128], strides = [1, 1]} : vector<18x128xf32> to vector<16x128xf32>
    %c0_12 = arith.constant 0 : index
    %c2 = arith.constant 2 : index
    %c0_13 = arith.constant 0 : index
    %c0_14 = arith.constant 0 : index
    %14 = vector.load %arg8[%c0_12, %c2, %c0_13, %c0_14] : memref<3x3x128x128xf32, #tpu.memory_space<vmem>>, vector<1x1x128x128xf32>
    %15 = vector.shape_cast %14 : vector<1x1x128x128xf32> to vector<128x128xf32>
    %cst_15 = arith.constant dense<0.000000e+00> : vector<16x128xf32>
    %16 = tpu.matmul %13, %15, %cst_15 {dimension_numbers = #tpu.dot_dimension_numbers<[1], [0], [0], [1], [0, 0, 1, 1], [], []>} : vector<16x128xf32>, vector<128x128xf32>, vector<16x128xf32> -> vector<16x128xf32>
    %17 = arith.addf %12, %16 : vector<16x128xf32>
    %c0_16 = arith.constant 0 : index
    %c0_17 = arith.constant 0 : index
    %c0_18 = arith.constant 0 : index
    %c0_19 = arith.constant 0 : index
    %18 = vector.load %arg3[%c0_16, %c0_17, %c0_18, %c0_19] : memref<1x1x18x128xf32, #tpu.memory_space<vmem>>, vector<1x1x18x128xf32>
    %19 = vector.shape_cast %18 : vector<1x1x18x128xf32> to vector<18x128xf32>
    %20 = vector.extract_strided_slice %19 {offsets = [0, 0], sizes = [16, 128], strides = [1, 1]} : vector<18x128xf32> to vector<16x128xf32>
    %c1_20 = arith.constant 1 : index
    %c0_21 = arith.constant 0 : index
    %c0_22 = arith.constant 0 : index
    %c0_23 = arith.constant 0 : index
    %21 = vector.load %arg8[%c1_20, %c0_21, %c0_22, %c0_23] : memref<3x3x128x128xf32, #tpu.memory_space<vmem>>, vector<1x1x128x128xf32>
    %22 = vector.shape_cast %21 : vector<1x1x128x128xf32> to vector<128x128xf32>
    %cst_24 = arith.constant dense<0.000000e+00> : vector<16x128xf32>
    %23 = tpu.matmul %20, %22, %cst_24 {dimension_numbers = #tpu.dot_dimension_numbers<[1], [0], [0], [1], [0, 0, 1, 1], [], []>} : vector<16x128xf32>, vector<128x128xf32>, vector<16x128xf32> -> vector<16x128xf32>
    %24 = arith.addf %17, %23 : vector<16x128xf32>
    %25 = vector.extract_strided_slice %19 {offsets = [1, 0], sizes = [16, 128], strides = [1, 1]} : vector<18x128xf32> to vector<16x128xf32>
    %c1_25 = arith.constant 1 : index
    %c1_26 = arith.constant 1 : index
    %c0_27 = arith.constant 0 : index
    %c0_28 = arith.constant 0 : index
    %26 = vector.load %arg8[%c1_25, %c1_26, %c0_27, %c0_28] : memref<3x3x128x128xf32, #tpu.memory_space<vmem>>, vector<1x1x128x128xf32>
    %27 = vector.shape_cast %26 : vector<1x1x128x128xf32> to vector<128x128xf32>
    %cst_29 = arith.constant dense<0.000000e+00> : vector<16x128xf32>
    %28 = tpu.matmul %25, %27, %cst_29 {dimension_numbers = #tpu.dot_dimension_numbers<[1], [0], [0], [1], [0, 0, 1, 1], [], []>} : vector<16x128xf32>, vector<128x128xf32>, vector<16x128xf32> -> vector<16x128xf32>
    %29 = arith.addf %24, %28 : vector<16x128xf32>
    %30 = vector.extract_strided_slice %19 {offsets = [2, 0], sizes = [16, 128], strides = [1, 1]} : vector<18x128xf32> to vector<16x128xf32>
    %c1_30 = arith.constant 1 : index
    %c2_31 = arith.constant 2 : index
    %c0_32 = arith.constant 0 : index
    %c0_33 = arith.constant 0 : index
    %31 = vector.load %arg8[%c1_30, %c2_31, %c0_32, %c0_33] : memref<3x3x128x128xf32, #tpu.memory_space<vmem>>, vector<1x1x128x128xf32>
    %32 = vector.shape_cast %31 : vector<1x1x128x128xf32> to vector<128x128xf32>
    %cst_34 = arith.constant dense<0.000000e+00> : vector<16x128xf32>
    %33 = tpu.matmul %30, %32, %cst_34 {dimension_numbers = #tpu.dot_dimension_numbers<[1], [0], [0], [1], [0, 0, 1, 1], [], []>} : vector<16x128xf32>, vector<128x128xf32>, vector<16x128xf32> -> vector<16x128xf32>
    %34 = arith.addf %29, %33 : vector<16x128xf32>
    %c0_35 = arith.constant 0 : index
    %c0_36 = arith.constant 0 : index
    %c0_37 = arith.constant 0 : index
    %c0_38 = arith.constant 0 : index
    %35 = vector.load %arg4[%c0_35, %c0_36, %c0_37, %c0_38] : memref<1x1x18x128xf32, #tpu.memory_space<vmem>>, vector<1x1x18x128xf32>
    %36 = vector.shape_cast %35 : vector<1x1x18x128xf32> to vector<18x128xf32>
    %37 = vector.extract_strided_slice %36 {offsets = [0, 0], sizes = [16, 128], strides = [1, 1]} : vector<18x128xf32> to vector<16x128xf32>
    %c2_39 = arith.constant 2 : index
    %c0_40 = arith.constant 0 : index
    %c0_41 = arith.constant 0 : index
    %c0_42 = arith.constant 0 : index
    %38 = vector.load %arg8[%c2_39, %c0_40, %c0_41, %c0_42] : memref<3x3x128x128xf32, #tpu.memory_space<vmem>>, vector<1x1x128x128xf32>
    %39 = vector.shape_cast %38 : vector<1x1x128x128xf32> to vector<128x128xf32>
    %cst_43 = arith.constant dense<0.000000e+00> : vector<16x128xf32>
    %40 = tpu.matmul %37, %39, %cst_43 {dimension_numbers = #tpu.dot_dimension_numbers<[1], [0], [0], [1], [0, 0, 1, 1], [], []>} : vector<16x128xf32>, vector<128x128xf32>, vector<16x128xf32> -> vector<16x128xf32>
    %41 = arith.addf %34, %40 : vector<16x128xf32>
    %42 = vector.extract_strided_slice %36 {offsets = [1, 0], sizes = [16, 128], strides = [1, 1]} : vector<18x128xf32> to vector<16x128xf32>
    %c2_44 = arith.constant 2 : index
    %c1_45 = arith.constant 1 : index
    %c0_46 = arith.constant 0 : index
    %c0_47 = arith.constant 0 : index
    %43 = vector.load %arg8[%c2_44, %c1_45, %c0_46, %c0_47] : memref<3x3x128x128xf32, #tpu.memory_space<vmem>>, vector<1x1x128x128xf32>
    %44 = vector.shape_cast %43 : vector<1x1x128x128xf32> to vector<128x128xf32>
    %cst_48 = arith.constant dense<0.000000e+00> : vector<16x128xf32>
    %45 = tpu.matmul %42, %44, %cst_48 {dimension_numbers = #tpu.dot_dimension_numbers<[1], [0], [0], [1], [0, 0, 1, 1], [], []>} : vector<16x128xf32>, vector<128x128xf32>, vector<16x128xf32> -> vector<16x128xf32>
    %46 = arith.addf %41, %45 : vector<16x128xf32>
    %47 = vector.extract_strided_slice %36 {offsets = [2, 0], sizes = [16, 128], strides = [1, 1]} : vector<18x128xf32> to vector<16x128xf32>
    %c2_49 = arith.constant 2 : index
    %c2_50 = arith.constant 2 : index
    %c0_51 = arith.constant 0 : index
    %c0_52 = arith.constant 0 : index
    %48 = vector.load %arg8[%c2_49, %c2_50, %c0_51, %c0_52] : memref<3x3x128x128xf32, #tpu.memory_space<vmem>>, vector<1x1x128x128xf32>
    %49 = vector.shape_cast %48 : vector<1x1x128x128xf32> to vector<128x128xf32>
    %cst_53 = arith.constant dense<0.000000e+00> : vector<16x128xf32>
    %50 = tpu.matmul %47, %49, %cst_53 {dimension_numbers = #tpu.dot_dimension_numbers<[1], [0], [0], [1], [0, 0, 1, 1], [], []>} : vector<16x128xf32>, vector<128x128xf32>, vector<16x128xf32> -> vector<16x128xf32>
    %51 = arith.addf %46, %50 : vector<16x128xf32>
    %c0_54 = arith.constant 0 : index
    %c0_55 = arith.constant 0 : index
    %c0_56 = arith.constant 0 : index
    %c0_57 = arith.constant 0 : index
    %52 = vector.load %arg5[%c0_54, %c0_55, %c0_56, %c0_57] : memref<1x1x18x128xf32, #tpu.memory_space<vmem>>, vector<1x1x18x128xf32>
    %53 = vector.shape_cast %52 : vector<1x1x18x128xf32> to vector<18x128xf32>
    %54 = vector.extract_strided_slice %53 {offsets = [0, 0], sizes = [16, 128], strides = [1, 1]} : vector<18x128xf32> to vector<16x128xf32>
    %c0_58 = arith.constant 0 : index
    %c0_59 = arith.constant 0 : index
    %c0_60 = arith.constant 0 : index
    %c0_61 = arith.constant 0 : index
    %55 = vector.load %arg9[%c0_58, %c0_59, %c0_60, %c0_61] : memref<3x3x128x128xf32, #tpu.memory_space<vmem>>, vector<1x1x128x128xf32>
    %56 = vector.shape_cast %55 : vector<1x1x128x128xf32> to vector<128x128xf32>
    %cst_62 = arith.constant dense<0.000000e+00> : vector<16x128xf32>
    %57 = tpu.matmul %54, %56, %cst_62 {dimension_numbers = #tpu.dot_dimension_numbers<[1], [0], [0], [1], [0, 0, 1, 1], [], []>} : vector<16x128xf32>, vector<128x128xf32>, vector<16x128xf32> -> vector<16x128xf32>
    %58 = arith.addf %51, %57 : vector<16x128xf32>
    %59 = vector.extract_strided_slice %53 {offsets = [1, 0], sizes = [16, 128], strides = [1, 1]} : vector<18x128xf32> to vector<16x128xf32>
    %c0_63 = arith.constant 0 : index
    %c1_64 = arith.constant 1 : index
    %c0_65 = arith.constant 0 : index
    %c0_66 = arith.constant 0 : index
    %60 = vector.load %arg9[%c0_63, %c1_64, %c0_65, %c0_66] : memref<3x3x128x128xf32, #tpu.memory_space<vmem>>, vector<1x1x128x128xf32>
    %61 = vector.shape_cast %60 : vector<1x1x128x128xf32> to vector<128x128xf32>
    %cst_67 = arith.constant dense<0.000000e+00> : vector<16x128xf32>
    %62 = tpu.matmul %59, %61, %cst_67 {dimension_numbers = #tpu.dot_dimension_numbers<[1], [0], [0], [1], [0, 0, 1, 1], [], []>} : vector<16x128xf32>, vector<128x128xf32>, vector<16x128xf32> -> vector<16x128xf32>
    %63 = arith.addf %58, %62 : vector<16x128xf32>
    %64 = vector.extract_strided_slice %53 {offsets = [2, 0], sizes = [16, 128], strides = [1, 1]} : vector<18x128xf32> to vector<16x128xf32>
    %c0_68 = arith.constant 0 : index
    %c2_69 = arith.constant 2 : index
    %c0_70 = arith.constant 0 : index
    %c0_71 = arith.constant 0 : index
    %65 = vector.load %arg9[%c0_68, %c2_69, %c0_70, %c0_71] : memref<3x3x128x128xf32, #tpu.memory_space<vmem>>, vector<1x1x128x128xf32>
    %66 = vector.shape_cast %65 : vector<1x1x128x128xf32> to vector<128x128xf32>
    %cst_72 = arith.constant dense<0.000000e+00> : vector<16x128xf32>
    %67 = tpu.matmul %64, %66, %cst_72 {dimension_numbers = #tpu.dot_dimension_numbers<[1], [0], [0], [1], [0, 0, 1, 1], [], []>} : vector<16x128xf32>, vector<128x128xf32>, vector<16x128xf32> -> vector<16x128xf32>
    %68 = arith.addf %63, %67 : vector<16x128xf32>
    %c0_73 = arith.constant 0 : index
    %c0_74 = arith.constant 0 : index
    %c0_75 = arith.constant 0 : index
    %c0_76 = arith.constant 0 : index
    %69 = vector.load %arg6[%c0_73, %c0_74, %c0_75, %c0_76] : memref<1x1x18x128xf32, #tpu.memory_space<vmem>>, vector<1x1x18x128xf32>
    %70 = vector.shape_cast %69 : vector<1x1x18x128xf32> to vector<18x128xf32>
    %71 = vector.extract_strided_slice %70 {offsets = [0, 0], sizes = [16, 128], strides = [1, 1]} : vector<18x128xf32> to vector<16x128xf32>
    %c1_77 = arith.constant 1 : index
    %c0_78 = arith.constant 0 : index
    %c0_79 = arith.constant 0 : index
    %c0_80 = arith.constant 0 : index
    %72 = vector.load %arg9[%c1_77, %c0_78, %c0_79, %c0_80] : memref<3x3x128x128xf32, #tpu.memory_space<vmem>>, vector<1x1x128x128xf32>
    %73 = vector.shape_cast %72 : vector<1x1x128x128xf32> to vector<128x128xf32>
    %cst_81 = arith.constant dense<0.000000e+00> : vector<16x128xf32>
    %74 = tpu.matmul %71, %73, %cst_81 {dimension_numbers = #tpu.dot_dimension_numbers<[1], [0], [0], [1], [0, 0, 1, 1], [], []>} : vector<16x128xf32>, vector<128x128xf32>, vector<16x128xf32> -> vector<16x128xf32>
    %75 = arith.addf %68, %74 : vector<16x128xf32>
    %76 = vector.extract_strided_slice %70 {offsets = [1, 0], sizes = [16, 128], strides = [1, 1]} : vector<18x128xf32> to vector<16x128xf32>
    %c1_82 = arith.constant 1 : index
    %c1_83 = arith.constant 1 : index
    %c0_84 = arith.constant 0 : index
    %c0_85 = arith.constant 0 : index
    %77 = vector.load %arg9[%c1_82, %c1_83, %c0_84, %c0_85] : memref<3x3x128x128xf32, #tpu.memory_space<vmem>>, vector<1x1x128x128xf32>
    %78 = vector.shape_cast %77 : vector<1x1x128x128xf32> to vector<128x128xf32>
    %cst_86 = arith.constant dense<0.000000e+00> : vector<16x128xf32>
    %79 = tpu.matmul %76, %78, %cst_86 {dimension_numbers = #tpu.dot_dimension_numbers<[1], [0], [0], [1], [0, 0, 1, 1], [], []>} : vector<16x128xf32>, vector<128x128xf32>, vector<16x128xf32> -> vector<16x128xf32>
    %80 = arith.addf %75, %79 : vector<16x128xf32>
    %81 = vector.extract_strided_slice %70 {offsets = [2, 0], sizes = [16, 128], strides = [1, 1]} : vector<18x128xf32> to vector<16x128xf32>
    %c1_87 = arith.constant 1 : index
    %c2_88 = arith.constant 2 : index
    %c0_89 = arith.constant 0 : index
    %c0_90 = arith.constant 0 : index
    %82 = vector.load %arg9[%c1_87, %c2_88, %c0_89, %c0_90] : memref<3x3x128x128xf32, #tpu.memory_space<vmem>>, vector<1x1x128x128xf32>
    %83 = vector.shape_cast %82 : vector<1x1x128x128xf32> to vector<128x128xf32>
    %cst_91 = arith.constant dense<0.000000e+00> : vector<16x128xf32>
    %84 = tpu.matmul %81, %83, %cst_91 {dimension_numbers = #tpu.dot_dimension_numbers<[1], [0], [0], [1], [0, 0, 1, 1], [], []>} : vector<16x128xf32>, vector<128x128xf32>, vector<16x128xf32> -> vector<16x128xf32>
    %85 = arith.addf %80, %84 : vector<16x128xf32>
    %c0_92 = arith.constant 0 : index
    %c0_93 = arith.constant 0 : index
    %c0_94 = arith.constant 0 : index
    %c0_95 = arith.constant 0 : index
    %86 = vector.load %arg7[%c0_92, %c0_93, %c0_94, %c0_95] : memref<1x1x18x128xf32, #tpu.memory_space<vmem>>, vector<1x1x18x128xf32>
    %87 = vector.shape_cast %86 : vector<1x1x18x128xf32> to vector<18x128xf32>
    %88 = vector.extract_strided_slice %87 {offsets = [0, 0], sizes = [16, 128], strides = [1, 1]} : vector<18x128xf32> to vector<16x128xf32>
    %c2_96 = arith.constant 2 : index
    %c0_97 = arith.constant 0 : index
    %c0_98 = arith.constant 0 : index
    %c0_99 = arith.constant 0 : index
    %89 = vector.load %arg9[%c2_96, %c0_97, %c0_98, %c0_99] : memref<3x3x128x128xf32, #tpu.memory_space<vmem>>, vector<1x1x128x128xf32>
    %90 = vector.shape_cast %89 : vector<1x1x128x128xf32> to vector<128x128xf32>
    %cst_100 = arith.constant dense<0.000000e+00> : vector<16x128xf32>
    %91 = tpu.matmul %88, %90, %cst_100 {dimension_numbers = #tpu.dot_dimension_numbers<[1], [0], [0], [1], [0, 0, 1, 1], [], []>} : vector<16x128xf32>, vector<128x128xf32>, vector<16x128xf32> -> vector<16x128xf32>
    %92 = arith.addf %85, %91 : vector<16x128xf32>
    %93 = vector.extract_strided_slice %87 {offsets = [1, 0], sizes = [16, 128], strides = [1, 1]} : vector<18x128xf32> to vector<16x128xf32>
    %c2_101 = arith.constant 2 : index
    %c1_102 = arith.constant 1 : index
    %c0_103 = arith.constant 0 : index
    %c0_104 = arith.constant 0 : index
    %94 = vector.load %arg9[%c2_101, %c1_102, %c0_103, %c0_104] : memref<3x3x128x128xf32, #tpu.memory_space<vmem>>, vector<1x1x128x128xf32>
    %95 = vector.shape_cast %94 : vector<1x1x128x128xf32> to vector<128x128xf32>
    %cst_105 = arith.constant dense<0.000000e+00> : vector<16x128xf32>
    %96 = tpu.matmul %93, %95, %cst_105 {dimension_numbers = #tpu.dot_dimension_numbers<[1], [0], [0], [1], [0, 0, 1, 1], [], []>} : vector<16x128xf32>, vector<128x128xf32>, vector<16x128xf32> -> vector<16x128xf32>
    %97 = arith.addf %92, %96 : vector<16x128xf32>
    %98 = vector.extract_strided_slice %87 {offsets = [2, 0], sizes = [16, 128], strides = [1, 1]} : vector<18x128xf32> to vector<16x128xf32>
    %c2_106 = arith.constant 2 : index
    %c2_107 = arith.constant 2 : index
    %c0_108 = arith.constant 0 : index
    %c0_109 = arith.constant 0 : index
    %99 = vector.load %arg9[%c2_106, %c2_107, %c0_108, %c0_109] : memref<3x3x128x128xf32, #tpu.memory_space<vmem>>, vector<1x1x128x128xf32>
    %100 = vector.shape_cast %99 : vector<1x1x128x128xf32> to vector<128x128xf32>
    %cst_110 = arith.constant dense<0.000000e+00> : vector<16x128xf32>
    %101 = tpu.matmul %98, %100, %cst_110 {dimension_numbers = #tpu.dot_dimension_numbers<[1], [0], [0], [1], [0, 0, 1, 1], [], []>} : vector<16x128xf32>, vector<128x128xf32>, vector<16x128xf32> -> vector<16x128xf32>
    %102 = arith.addf %97, %101 : vector<16x128xf32>
    %cst_111 = arith.constant 0.000000e+00 : f32
    %103 = vector.broadcast %cst_111 : f32 to vector<1x128xf32>
    %104 = tpu.concatenate %103, %102, %103 in 0 : vector<1x128xf32>, vector<16x128xf32>, vector<1x128xf32> -> vector<18x128xf32>
    %105 = vector.shape_cast %104 : vector<18x128xf32> to vector<1x1x18x128xf32>
    %c0_112 = arith.constant 0 : index
    %c0_113 = arith.constant 0 : index
    %c0_114 = arith.constant 0 : index
    %c0_115 = arith.constant 0 : index
    %106 = vector.load %arg10[%c0_112, %c0_113, %c0_114, %c0_115] : memref<1x1x18x128xf32, #tpu.memory_space<vmem>>, vector<1x1x18x128xf32>
    tpu.vector_store %arg10[%c0_112, %c0_113, %c0_114, %c0_115], %105 {strides = array<i32>} : memref<1x1x18x128xf32, #tpu.memory_space<vmem>>, vector<1x1x18x128xf32>,
    %c0_i32 = arith.constant 0 : i32
    %107 = arith.cmpi eq, %arg0, %c0_i32 : i32
    %c0_i32_116 = arith.constant 0 : i32
    %108 = arith.cmpi eq, %arg1, %c0_i32_116 : i32
    %109 = arith.andi %107, %108 : i1
    %110 = arith.extui %109 : i1 to i32
    %c0_i32_117 = arith.constant 0 : i32
    %111 = arith.cmpi ne, %110, %c0_i32_117 : i32
    scf.if %111 {
      %cst_124 = arith.constant 0.000000e+00 : f32
      %121 = vector.broadcast %cst_124 : f32 to vector<2x128xf32>
      %c0_125 = arith.constant 0 : index
      %c0_126 = arith.constant 0 : index
      %122 = vector.load %arg11[%c0_125, %c0_126] : memref<2x128xf32, #tpu.memory_space<vmem>>, vector<2x128xf32>
      tpu.vector_store %arg11[%c0_125, %c0_126], %121 {strides = array<i32>} : memref<2x128xf32, #tpu.memory_space<vmem>>, vector<2x128xf32>,
    } else {
    }
    %c0_118 = arith.constant 0 : index
    %c0_119 = arith.constant 0 : index
    %112 = vector.load %arg11[%c0_118, %c0_119] : memref<2x128xf32, #tpu.memory_space<vmem>>, vector<2x128xf32>
    %cst_120 = arith.constant dense<0.000000e+00> : vector<128xf32>
    %113 = vector.multi_reduction <add>, %102, %cst_120 [0] : vector<16x128xf32> to vector<128xf32>
    %114 = vector.shape_cast %113 : vector<128xf32> to vector<1x128xf32>
    %115 = arith.mulf %102, %102 : vector<16x128xf32>
    %cst_121 = arith.constant dense<0.000000e+00> : vector<128xf32>
    %116 = vector.multi_reduction <add>, %115, %cst_121 [0] : vector<16x128xf32> to vector<128xf32>
    %117 = vector.shape_cast %116 : vector<128xf32> to vector<1x128xf32>
    %118 = tpu.concatenate %114, %117 in 0 : vector<1x128xf32>, vector<1x128xf32> -> vector<2x128xf32>
    %119 = arith.addf %112, %118 : vector<2x128xf32>
    %c0_122 = arith.constant 0 : index
    %c0_123 = arith.constant 0 : index
    %120 = vector.load %arg11[%c0_122, %c0_123] : memref<2x128xf32, #tpu.memory_space<vmem>>, vector<2x128xf32>
    tpu.vector_store %arg11[%c0_122, %c0_123], %119 {strides = array<i32>} : memref<2x128xf32, #tpu.memory_space<vmem>>, vector<2x128xf32>,
    return
  }
  func.func @transform_0(%arg0: i32, %arg1: i32) -> (i32, i32, i32, i32) {
    %c0_i32 = arith.constant 0 : i32
    %0 = arith.addi %arg1, %c0_i32 : i32
    %c0_i32_0 = arith.constant 0 : i32
    %c0_i32_1 = arith.constant 0 : i32
    %c0_i32_2 = arith.constant 0 : i32
    return %arg0, %0, %c0_i32_0, %c0_i32_1 : i32, i32, i32, i32
  }
  func.func @transform_1(%arg0: i32, %arg1: i32) -> (i32, i32, i32, i32) {
    %c1_i32 = arith.constant 1 : i32
    %0 = arith.addi %arg1, %c1_i32 : i32
    %c0_i32 = arith.constant 0 : i32
    %c0_i32_0 = arith.constant 0 : i32
    %c0_i32_1 = arith.constant 0 : i32
    return %arg0, %0, %c0_i32, %c0_i32_0 : i32, i32, i32, i32
  }
  func.func @transform_2(%arg0: i32, %arg1: i32) -> (i32, i32, i32, i32) {
    %c2_i32 = arith.constant 2 : i32
    %0 = arith.addi %arg1, %c2_i32 : i32
    %c0_i32 = arith.constant 0 : i32
    %c0_i32_0 = arith.constant 0 : i32
    %c0_i32_1 = arith.constant 0 : i32
    return %arg0, %0, %c0_i32, %c0_i32_0 : i32, i32, i32, i32
  }
  func.func @transform_3(%arg0: i32, %arg1: i32) -> (i32, i32, i32, i32) {
    %c0_i32 = arith.constant 0 : i32
    %0 = arith.addi %arg1, %c0_i32 : i32
    %c0_i32_0 = arith.constant 0 : i32
    %c0_i32_1 = arith.constant 0 : i32
    %c0_i32_2 = arith.constant 0 : i32
    return %arg0, %0, %c0_i32_0, %c0_i32_1 : i32, i32, i32, i32
  }
  func.func @transform_4(%arg0: i32, %arg1: i32) -> (i32, i32, i32, i32) {
    %c1_i32 = arith.constant 1 : i32
    %0 = arith.addi %arg1, %c1_i32 : i32
    %c0_i32 = arith.constant 0 : i32
    %c0_i32_0 = arith.constant 0 : i32
    %c0_i32_1 = arith.constant 0 : i32
    return %arg0, %0, %c0_i32, %c0_i32_0 : i32, i32, i32, i32
  }
  func.func @transform_5(%arg0: i32, %arg1: i32) -> (i32, i32, i32, i32) {
    %c2_i32 = arith.constant 2 : i32
    %0 = arith.addi %arg1, %c2_i32 : i32
    %c0_i32 = arith.constant 0 : i32
    %c0_i32_0 = arith.constant 0 : i32
    %c0_i32_1 = arith.constant 0 : i32
    return %arg0, %0, %c0_i32, %c0_i32_0 : i32, i32, i32, i32
  }
  func.func @transform_6(%arg0: i32, %arg1: i32) -> (i32, i32, i32, i32) {
    %c0_i32 = arith.constant 0 : i32
    %c0_i32_0 = arith.constant 0 : i32
    %c0_i32_1 = arith.constant 0 : i32
    %c0_i32_2 = arith.constant 0 : i32
    %c0_i32_3 = arith.constant 0 : i32
    return %c0_i32, %c0_i32_0, %c0_i32_1, %c0_i32_2 : i32, i32, i32, i32
  }
  func.func @transform_7(%arg0: i32, %arg1: i32) -> (i32, i32, i32, i32) {
    %c0_i32 = arith.constant 0 : i32
    %c0_i32_0 = arith.constant 0 : i32
    %c0_i32_1 = arith.constant 0 : i32
    %c0_i32_2 = arith.constant 0 : i32
    %c0_i32_3 = arith.constant 0 : i32
    return %c0_i32, %c0_i32_0, %c0_i32_1, %c0_i32_2 : i32, i32, i32, i32
  }
  func.func @transform_8(%arg0: i32, %arg1: i32) -> (i32, i32, i32, i32) {
    %c1_i32 = arith.constant 1 : i32
    %0 = arith.addi %arg1, %c1_i32 : i32
    %c0_i32 = arith.constant 0 : i32
    %c0_i32_0 = arith.constant 0 : i32
    %c0_i32_1 = arith.constant 0 : i32
    return %arg0, %0, %c0_i32, %c0_i32_0 : i32, i32, i32, i32
  }
  func.func @transform_9(%arg0: i32, %arg1: i32) -> (i32, i32) {
    %c0_i32 = arith.constant 0 : i32
    %c0_i32_0 = arith.constant 0 : i32
    %c0_i32_1 = arith.constant 0 : i32
    return %c0_i32, %c0_i32_0 : i32, i32
  }
}

module attributes {stable_mosaic.version = 11 : i64} {
  func.func @_conv3x3_rows_kernel(%arg0: i32, %arg1: i32, %arg2: memref<1x1x18x128xf32, #tpu.memory_space<vmem>>, %arg3: memref<1x1x18x128xf32, #tpu.memory_space<vmem>>, %arg4: memref<1x1x18x128xf32, #tpu.memory_space<vmem>>, %arg5: memref<3x3x128x128xf32, #tpu.memory_space<vmem>>, %arg6: memref<1x128xf32, #tpu.memory_space<vmem>>, %arg7: memref<1x128xf32, #tpu.memory_space<vmem>>, %arg8: memref<1x1x16x128xf32, #tpu.memory_space<vmem>>, %arg9: memref<2x128xf32, #tpu.memory_space<vmem>>) attributes {dimension_semantics = [#tpu.dimension_semantics<arbitrary>, #tpu.dimension_semantics<arbitrary>], iteration_bounds = array<i64: 2, 16>, scalar_prefetch = 0 : i64, scratch_operands = 0 : i64, tpu.core_type = #tpu.core_type<tc>, window_params = [{transform_indices = @transform_0, window_bounds = array<i64: 1, 1, 18, 128>}, {transform_indices = @transform_1, window_bounds = array<i64: 1, 1, 18, 128>}, {transform_indices = @transform_2, window_bounds = array<i64: 1, 1, 18, 128>}, {pipeline_mode = #tpu.pipeline_mode<synchronous>, transform_indices = @transform_3, window_bounds = array<i64: 3, 3, 128, 128>}, {pipeline_mode = #tpu.pipeline_mode<synchronous>, transform_indices = @transform_4, window_bounds = array<i64: 1, 128>}, {pipeline_mode = #tpu.pipeline_mode<synchronous>, transform_indices = @transform_5, window_bounds = array<i64: 1, 128>}, {transform_indices = @transform_6, window_bounds = array<i64: 1, 1, 16, 128>}, {pipeline_mode = #tpu.pipeline_mode<synchronous>, transform_indices = @transform_7, window_bounds = array<i64: 2, 128>}]} {
    %0 = tpu.iota {dimensions = array<i32: 0>} : vector<18x1xi32>
    %c1_i32 = arith.constant 1 : i32
    %1 = vector.broadcast %c1_i32 : i32 to vector<18x1xi32>
    %2 = arith.cmpi sge, %0, %1 : vector<18x1xi32>
    %c16_i32 = arith.constant 16 : i32
    %3 = vector.broadcast %c16_i32 : i32 to vector<18x1xi32>
    %4 = arith.cmpi sle, %0, %3 : vector<18x1xi32>
    %5 = arith.andi %2, %4 : vector<18x1xi1>
    %cst = arith.constant 0.000000e+00 : f32
    %6 = vector.broadcast %cst : f32 to vector<16x128xf32>
    %c0 = arith.constant 0 : index
    %c0_0 = arith.constant 0 : index
    %c0_1 = arith.constant 0 : index
    %c0_2 = arith.constant 0 : index
    %7 = vector.load %arg2[%c0, %c0_0, %c0_1, %c0_2] : memref<1x1x18x128xf32, #tpu.memory_space<vmem>>, vector<1x1x18x128xf32>
    %8 = vector.shape_cast %7 : vector<1x1x18x128xf32> to vector<18x128xf32>
    %c0_3 = arith.constant 0 : index
    %c0_4 = arith.constant 0 : index
    %9 = vector.load %arg6[%c0_3, %c0_4] : memref<1x128xf32, #tpu.memory_space<vmem>>, vector<1x128xf32>
    %10 = vector.broadcast %9 : vector<1x128xf32> to vector<18x128xf32>
    %11 = arith.mulf %8, %10 : vector<18x128xf32>
    %c0_5 = arith.constant 0 : index
    %c0_6 = arith.constant 0 : index
    %12 = vector.load %arg7[%c0_5, %c0_6] : memref<1x128xf32, #tpu.memory_space<vmem>>, vector<1x128xf32>
    %13 = vector.broadcast %12 : vector<1x128xf32> to vector<18x128xf32>
    %14 = arith.addf %11, %13 : vector<18x128xf32>
    %cst_7 = arith.constant 0.000000e+00 : f32
    %15 = vector.broadcast %cst_7 : f32 to vector<18x128xf32>
    %16 = arith.maximumf %14, %15 : vector<18x128xf32>
    %c0_i32 = arith.constant 0 : i32
    %17 = arith.addi %arg1, %c0_i32 : i32
    %c1_i32_8 = arith.constant 1 : i32
    %18 = arith.cmpi sge, %17, %c1_i32_8 : i32
    %c0_i32_9 = arith.constant 0 : i32
    %19 = arith.addi %arg1, %c0_i32_9 : i32
    %c16_i32_10 = arith.constant 16 : i32
    %20 = arith.cmpi sle, %19, %c16_i32_10 : i32
    %21 = arith.andi %18, %20 : i1
    %22 = vector.broadcast %21 : i1 to vector<18x1xi1>
    %23 = arith.andi %5, %22 : vector<18x1xi1>
    %cst_11 = arith.constant 0.000000e+00 : f32
    %24 = vector.shape_cast %23 : vector<18x1xi1> to vector<18x1xi1>
    %25 = vector.broadcast %24 : vector<18x1xi1> to vector<18x128xi1>
    %26 = vector.broadcast %cst_11 : f32 to vector<18x128xf32>
    %27 = arith.select %25, %16, %26 : vector<18x128xi1>, vector<18x128xf32>
    %28 = vector.extract_strided_slice %27 {offsets = [0, 0], sizes = [16, 128], strides = [1, 1]} : vector<18x128xf32> to vector<16x128xf32>
    %c0_12 = arith.constant 0 : index
    %c0_13 = arith.constant 0 : index
    %c0_14 = arith.constant 0 : index
    %c0_15 = arith.constant 0 : index
    %29 = vector.load %arg5[%c0_12, %c0_13, %c0_14, %c0_15] : memref<3x3x128x128xf32, #tpu.memory_space<vmem>>, vector<1x1x128x128xf32>
    %30 = vector.shape_cast %29 : vector<1x1x128x128xf32> to vector<128x128xf32>
    %cst_16 = arith.constant dense<0.000000e+00> : vector<16x128xf32>
    %31 = tpu.matmul %28, %30, %cst_16 {dimension_numbers = #tpu.dot_dimension_numbers<[1], [0], [0], [1], [0, 0, 1, 1], [], []>} : vector<16x128xf32>, vector<128x128xf32>, vector<16x128xf32> -> vector<16x128xf32>
    %32 = arith.addf %6, %31 : vector<16x128xf32>
    %33 = vector.extract_strided_slice %27 {offsets = [1, 0], sizes = [16, 128], strides = [1, 1]} : vector<18x128xf32> to vector<16x128xf32>
    %c0_17 = arith.constant 0 : index
    %c1 = arith.constant 1 : index
    %c0_18 = arith.constant 0 : index
    %c0_19 = arith.constant 0 : index
    %34 = vector.load %arg5[%c0_17, %c1, %c0_18, %c0_19] : memref<3x3x128x128xf32, #tpu.memory_space<vmem>>, vector<1x1x128x128xf32>
    %35 = vector.shape_cast %34 : vector<1x1x128x128xf32> to vector<128x128xf32>
    %cst_20 = arith.constant dense<0.000000e+00> : vector<16x128xf32>
    %36 = tpu.matmul %33, %35, %cst_20 {dimension_numbers = #tpu.dot_dimension_numbers<[1], [0], [0], [1], [0, 0, 1, 1], [], []>} : vector<16x128xf32>, vector<128x128xf32>, vector<16x128xf32> -> vector<16x128xf32>
    %37 = arith.addf %32, %36 : vector<16x128xf32>
    %38 = vector.extract_strided_slice %27 {offsets = [2, 0], sizes = [16, 128], strides = [1, 1]} : vector<18x128xf32> to vector<16x128xf32>
    %c0_21 = arith.constant 0 : index
    %c2 = arith.constant 2 : index
    %c0_22 = arith.constant 0 : index
    %c0_23 = arith.constant 0 : index
    %39 = vector.load %arg5[%c0_21, %c2, %c0_22, %c0_23] : memref<3x3x128x128xf32, #tpu.memory_space<vmem>>, vector<1x1x128x128xf32>
    %40 = vector.shape_cast %39 : vector<1x1x128x128xf32> to vector<128x128xf32>
    %cst_24 = arith.constant dense<0.000000e+00> : vector<16x128xf32>
    %41 = tpu.matmul %38, %40, %cst_24 {dimension_numbers = #tpu.dot_dimension_numbers<[1], [0], [0], [1], [0, 0, 1, 1], [], []>} : vector<16x128xf32>, vector<128x128xf32>, vector<16x128xf32> -> vector<16x128xf32>
    %42 = arith.addf %37, %41 : vector<16x128xf32>
    %c0_25 = arith.constant 0 : index
    %c0_26 = arith.constant 0 : index
    %c0_27 = arith.constant 0 : index
    %c0_28 = arith.constant 0 : index
    %43 = vector.load %arg3[%c0_25, %c0_26, %c0_27, %c0_28] : memref<1x1x18x128xf32, #tpu.memory_space<vmem>>, vector<1x1x18x128xf32>
    %44 = vector.shape_cast %43 : vector<1x1x18x128xf32> to vector<18x128xf32>
    %c0_29 = arith.constant 0 : index
    %c0_30 = arith.constant 0 : index
    %45 = vector.load %arg6[%c0_29, %c0_30] : memref<1x128xf32, #tpu.memory_space<vmem>>, vector<1x128xf32>
    %46 = vector.broadcast %45 : vector<1x128xf32> to vector<18x128xf32>
    %47 = arith.mulf %44, %46 : vector<18x128xf32>
    %c0_31 = arith.constant 0 : index
    %c0_32 = arith.constant 0 : index
    %48 = vector.load %arg7[%c0_31, %c0_32] : memref<1x128xf32, #tpu.memory_space<vmem>>, vector<1x128xf32>
    %49 = vector.broadcast %48 : vector<1x128xf32> to vector<18x128xf32>
    %50 = arith.addf %47, %49 : vector<18x128xf32>
    %cst_33 = arith.constant 0.000000e+00 : f32
    %51 = vector.broadcast %cst_33 : f32 to vector<18x128xf32>
    %52 = arith.maximumf %50, %51 : vector<18x128xf32>
    %c1_i32_34 = arith.constant 1 : i32
    %53 = arith.addi %arg1, %c1_i32_34 : i32
    %c1_i32_35 = arith.constant 1 : i32
    %54 = arith.cmpi sge, %53, %c1_i32_35 : i32
    %c1_i32_36 = arith.constant 1 : i32
    %55 = arith.addi %arg1, %c1_i32_36 : i32
    %c16_i32_37 = arith.constant 16 : i32
    %56 = arith.cmpi sle, %55, %c16_i32_37 : i32
    %57 = arith.andi %54, %56 : i1
    %58 = vector.broadcast %57 : i1 to vector<18x1xi1>
    %59 = arith.andi %5, %58 : vector<18x1xi1>
    %cst_38 = arith.constant 0.000000e+00 : f32
    %60 = vector.shape_cast %59 : vector<18x1xi1> to vector<18x1xi1>
    %61 = vector.broadcast %60 : vector<18x1xi1> to vector<18x128xi1>
    %62 = vector.broadcast %cst_38 : f32 to vector<18x128xf32>
    %63 = arith.select %61, %52, %62 : vector<18x128xi1>, vector<18x128xf32>
    %64 = vector.extract_strided_slice %63 {offsets = [0, 0], sizes = [16, 128], strides = [1, 1]} : vector<18x128xf32> to vector<16x128xf32>
    %c1_39 = arith.constant 1 : index
    %c0_40 = arith.constant 0 : index
    %c0_41 = arith.constant 0 : index
    %c0_42 = arith.constant 0 : index
    %65 = vector.load %arg5[%c1_39, %c0_40, %c0_41, %c0_42] : memref<3x3x128x128xf32, #tpu.memory_space<vmem>>, vector<1x1x128x128xf32>
    %66 = vector.shape_cast %65 : vector<1x1x128x128xf32> to vector<128x128xf32>
    %cst_43 = arith.constant dense<0.000000e+00> : vector<16x128xf32>
    %67 = tpu.matmul %64, %66, %cst_43 {dimension_numbers = #tpu.dot_dimension_numbers<[1], [0], [0], [1], [0, 0, 1, 1], [], []>} : vector<16x128xf32>, vector<128x128xf32>, vector<16x128xf32> -> vector<16x128xf32>
    %68 = arith.addf %42, %67 : vector<16x128xf32>
    %69 = vector.extract_strided_slice %63 {offsets = [1, 0], sizes = [16, 128], strides = [1, 1]} : vector<18x128xf32> to vector<16x128xf32>
    %c1_44 = arith.constant 1 : index
    %c1_45 = arith.constant 1 : index
    %c0_46 = arith.constant 0 : index
    %c0_47 = arith.constant 0 : index
    %70 = vector.load %arg5[%c1_44, %c1_45, %c0_46, %c0_47] : memref<3x3x128x128xf32, #tpu.memory_space<vmem>>, vector<1x1x128x128xf32>
    %71 = vector.shape_cast %70 : vector<1x1x128x128xf32> to vector<128x128xf32>
    %cst_48 = arith.constant dense<0.000000e+00> : vector<16x128xf32>
    %72 = tpu.matmul %69, %71, %cst_48 {dimension_numbers = #tpu.dot_dimension_numbers<[1], [0], [0], [1], [0, 0, 1, 1], [], []>} : vector<16x128xf32>, vector<128x128xf32>, vector<16x128xf32> -> vector<16x128xf32>
    %73 = arith.addf %68, %72 : vector<16x128xf32>
    %74 = vector.extract_strided_slice %63 {offsets = [2, 0], sizes = [16, 128], strides = [1, 1]} : vector<18x128xf32> to vector<16x128xf32>
    %c1_49 = arith.constant 1 : index
    %c2_50 = arith.constant 2 : index
    %c0_51 = arith.constant 0 : index
    %c0_52 = arith.constant 0 : index
    %75 = vector.load %arg5[%c1_49, %c2_50, %c0_51, %c0_52] : memref<3x3x128x128xf32, #tpu.memory_space<vmem>>, vector<1x1x128x128xf32>
    %76 = vector.shape_cast %75 : vector<1x1x128x128xf32> to vector<128x128xf32>
    %cst_53 = arith.constant dense<0.000000e+00> : vector<16x128xf32>
    %77 = tpu.matmul %74, %76, %cst_53 {dimension_numbers = #tpu.dot_dimension_numbers<[1], [0], [0], [1], [0, 0, 1, 1], [], []>} : vector<16x128xf32>, vector<128x128xf32>, vector<16x128xf32> -> vector<16x128xf32>
    %78 = arith.addf %73, %77 : vector<16x128xf32>
    %c0_54 = arith.constant 0 : index
    %c0_55 = arith.constant 0 : index
    %c0_56 = arith.constant 0 : index
    %c0_57 = arith.constant 0 : index
    %79 = vector.load %arg4[%c0_54, %c0_55, %c0_56, %c0_57] : memref<1x1x18x128xf32, #tpu.memory_space<vmem>>, vector<1x1x18x128xf32>
    %80 = vector.shape_cast %79 : vector<1x1x18x128xf32> to vector<18x128xf32>
    %c0_58 = arith.constant 0 : index
    %c0_59 = arith.constant 0 : index
    %81 = vector.load %arg6[%c0_58, %c0_59] : memref<1x128xf32, #tpu.memory_space<vmem>>, vector<1x128xf32>
    %82 = vector.broadcast %81 : vector<1x128xf32> to vector<18x128xf32>
    %83 = arith.mulf %80, %82 : vector<18x128xf32>
    %c0_60 = arith.constant 0 : index
    %c0_61 = arith.constant 0 : index
    %84 = vector.load %arg7[%c0_60, %c0_61] : memref<1x128xf32, #tpu.memory_space<vmem>>, vector<1x128xf32>
    %85 = vector.broadcast %84 : vector<1x128xf32> to vector<18x128xf32>
    %86 = arith.addf %83, %85 : vector<18x128xf32>
    %cst_62 = arith.constant 0.000000e+00 : f32
    %87 = vector.broadcast %cst_62 : f32 to vector<18x128xf32>
    %88 = arith.maximumf %86, %87 : vector<18x128xf32>
    %c2_i32 = arith.constant 2 : i32
    %89 = arith.addi %arg1, %c2_i32 : i32
    %c1_i32_63 = arith.constant 1 : i32
    %90 = arith.cmpi sge, %89, %c1_i32_63 : i32
    %c2_i32_64 = arith.constant 2 : i32
    %91 = arith.addi %arg1, %c2_i32_64 : i32
    %c16_i32_65 = arith.constant 16 : i32
    %92 = arith.cmpi sle, %91, %c16_i32_65 : i32
    %93 = arith.andi %90, %92 : i1
    %94 = vector.broadcast %93 : i1 to vector<18x1xi1>
    %95 = arith.andi %5, %94 : vector<18x1xi1>
    %cst_66 = arith.constant 0.000000e+00 : f32
    %96 = vector.shape_cast %95 : vector<18x1xi1> to vector<18x1xi1>
    %97 = vector.broadcast %96 : vector<18x1xi1> to vector<18x128xi1>
    %98 = vector.broadcast %cst_66 : f32 to vector<18x128xf32>
    %99 = arith.select %97, %88, %98 : vector<18x128xi1>, vector<18x128xf32>
    %100 = vector.extract_strided_slice %99 {offsets = [0, 0], sizes = [16, 128], strides = [1, 1]} : vector<18x128xf32> to vector<16x128xf32>
    %c2_67 = arith.constant 2 : index
    %c0_68 = arith.constant 0 : index
    %c0_69 = arith.constant 0 : index
    %c0_70 = arith.constant 0 : index
    %101 = vector.load %arg5[%c2_67, %c0_68, %c0_69, %c0_70] : memref<3x3x128x128xf32, #tpu.memory_space<vmem>>, vector<1x1x128x128xf32>
    %102 = vector.shape_cast %101 : vector<1x1x128x128xf32> to vector<128x128xf32>
    %cst_71 = arith.constant dense<0.000000e+00> : vector<16x128xf32>
    %103 = tpu.matmul %100, %102, %cst_71 {dimension_numbers = #tpu.dot_dimension_numbers<[1], [0], [0], [1], [0, 0, 1, 1], [], []>} : vector<16x128xf32>, vector<128x128xf32>, vector<16x128xf32> -> vector<16x128xf32>
    %104 = arith.addf %78, %103 : vector<16x128xf32>
    %105 = vector.extract_strided_slice %99 {offsets = [1, 0], sizes = [16, 128], strides = [1, 1]} : vector<18x128xf32> to vector<16x128xf32>
    %c2_72 = arith.constant 2 : index
    %c1_73 = arith.constant 1 : index
    %c0_74 = arith.constant 0 : index
    %c0_75 = arith.constant 0 : index
    %106 = vector.load %arg5[%c2_72, %c1_73, %c0_74, %c0_75] : memref<3x3x128x128xf32, #tpu.memory_space<vmem>>, vector<1x1x128x128xf32>
    %107 = vector.shape_cast %106 : vector<1x1x128x128xf32> to vector<128x128xf32>
    %cst_76 = arith.constant dense<0.000000e+00> : vector<16x128xf32>
    %108 = tpu.matmul %105, %107, %cst_76 {dimension_numbers = #tpu.dot_dimension_numbers<[1], [0], [0], [1], [0, 0, 1, 1], [], []>} : vector<16x128xf32>, vector<128x128xf32>, vector<16x128xf32> -> vector<16x128xf32>
    %109 = arith.addf %104, %108 : vector<16x128xf32>
    %110 = vector.extract_strided_slice %99 {offsets = [2, 0], sizes = [16, 128], strides = [1, 1]} : vector<18x128xf32> to vector<16x128xf32>
    %c2_77 = arith.constant 2 : index
    %c2_78 = arith.constant 2 : index
    %c0_79 = arith.constant 0 : index
    %c0_80 = arith.constant 0 : index
    %111 = vector.load %arg5[%c2_77, %c2_78, %c0_79, %c0_80] : memref<3x3x128x128xf32, #tpu.memory_space<vmem>>, vector<1x1x128x128xf32>
    %112 = vector.shape_cast %111 : vector<1x1x128x128xf32> to vector<128x128xf32>
    %cst_81 = arith.constant dense<0.000000e+00> : vector<16x128xf32>
    %113 = tpu.matmul %110, %112, %cst_81 {dimension_numbers = #tpu.dot_dimension_numbers<[1], [0], [0], [1], [0, 0, 1, 1], [], []>} : vector<16x128xf32>, vector<128x128xf32>, vector<16x128xf32> -> vector<16x128xf32>
    %114 = arith.addf %109, %113 : vector<16x128xf32>
    %115 = vector.shape_cast %114 : vector<16x128xf32> to vector<1x1x16x128xf32>
    %c0_82 = arith.constant 0 : index
    %c0_83 = arith.constant 0 : index
    %c0_84 = arith.constant 0 : index
    %c0_85 = arith.constant 0 : index
    %116 = vector.load %arg8[%c0_82, %c0_83, %c0_84, %c0_85] : memref<1x1x16x128xf32, #tpu.memory_space<vmem>>, vector<1x1x16x128xf32>
    tpu.vector_store %arg8[%c0_82, %c0_83, %c0_84, %c0_85], %115 {strides = array<i32>} : memref<1x1x16x128xf32, #tpu.memory_space<vmem>>, vector<1x1x16x128xf32>,
    %c0_i32_86 = arith.constant 0 : i32
    %117 = arith.cmpi eq, %arg0, %c0_i32_86 : i32
    %c0_i32_87 = arith.constant 0 : i32
    %118 = arith.cmpi eq, %arg1, %c0_i32_87 : i32
    %119 = arith.andi %117, %118 : i1
    %120 = arith.extui %119 : i1 to i32
    %c0_i32_88 = arith.constant 0 : i32
    %121 = arith.cmpi ne, %120, %c0_i32_88 : i32
    scf.if %121 {
      %cst_95 = arith.constant 0.000000e+00 : f32
      %131 = vector.broadcast %cst_95 : f32 to vector<2x128xf32>
      %c0_96 = arith.constant 0 : index
      %c0_97 = arith.constant 0 : index
      %132 = vector.load %arg9[%c0_96, %c0_97] : memref<2x128xf32, #tpu.memory_space<vmem>>, vector<2x128xf32>
      tpu.vector_store %arg9[%c0_96, %c0_97], %131 {strides = array<i32>} : memref<2x128xf32, #tpu.memory_space<vmem>>, vector<2x128xf32>,
    } else {
    }
    %c0_89 = arith.constant 0 : index
    %c0_90 = arith.constant 0 : index
    %122 = vector.load %arg9[%c0_89, %c0_90] : memref<2x128xf32, #tpu.memory_space<vmem>>, vector<2x128xf32>
    %cst_91 = arith.constant dense<0.000000e+00> : vector<128xf32>
    %123 = vector.multi_reduction <add>, %114, %cst_91 [0] : vector<16x128xf32> to vector<128xf32>
    %124 = vector.shape_cast %123 : vector<128xf32> to vector<1x128xf32>
    %125 = arith.mulf %114, %114 : vector<16x128xf32>
    %cst_92 = arith.constant dense<0.000000e+00> : vector<128xf32>
    %126 = vector.multi_reduction <add>, %125, %cst_92 [0] : vector<16x128xf32> to vector<128xf32>
    %127 = vector.shape_cast %126 : vector<128xf32> to vector<1x128xf32>
    %128 = tpu.concatenate %124, %127 in 0 : vector<1x128xf32>, vector<1x128xf32> -> vector<2x128xf32>
    %129 = arith.addf %122, %128 : vector<2x128xf32>
    %c0_93 = arith.constant 0 : index
    %c0_94 = arith.constant 0 : index
    %130 = vector.load %arg9[%c0_93, %c0_94] : memref<2x128xf32, #tpu.memory_space<vmem>>, vector<2x128xf32>
    tpu.vector_store %arg9[%c0_93, %c0_94], %129 {strides = array<i32>} : memref<2x128xf32, #tpu.memory_space<vmem>>, vector<2x128xf32>,
    return
  }
  func.func @transform_0(%arg0: i32, %arg1: i32) -> (i32, i32, i32, i32) {
    %c0_i32 = arith.constant 0 : i32
    %0 = arith.addi %arg1, %c0_i32 : i32
    %c0_i32_0 = arith.constant 0 : i32
    %c0_i32_1 = arith.constant 0 : i32
    %c0_i32_2 = arith.constant 0 : i32
    return %arg0, %0, %c0_i32_0, %c0_i32_1 : i32, i32, i32, i32
  }
  func.func @transform_1(%arg0: i32, %arg1: i32) -> (i32, i32, i32, i32) {
    %c1_i32 = arith.constant 1 : i32
    %0 = arith.addi %arg1, %c1_i32 : i32
    %c0_i32 = arith.constant 0 : i32
    %c0_i32_0 = arith.constant 0 : i32
    %c0_i32_1 = arith.constant 0 : i32
    return %arg0, %0, %c0_i32, %c0_i32_0 : i32, i32, i32, i32
  }
  func.func @transform_2(%arg0: i32, %arg1: i32) -> (i32, i32, i32, i32) {
    %c2_i32 = arith.constant 2 : i32
    %0 = arith.addi %arg1, %c2_i32 : i32
    %c0_i32 = arith.constant 0 : i32
    %c0_i32_0 = arith.constant 0 : i32
    %c0_i32_1 = arith.constant 0 : i32
    return %arg0, %0, %c0_i32, %c0_i32_0 : i32, i32, i32, i32
  }
  func.func @transform_3(%arg0: i32, %arg1: i32) -> (i32, i32, i32, i32) {
    %c0_i32 = arith.constant 0 : i32
    %c0_i32_0 = arith.constant 0 : i32
    %c0_i32_1 = arith.constant 0 : i32
    %c0_i32_2 = arith.constant 0 : i32
    %c0_i32_3 = arith.constant 0 : i32
    return %c0_i32, %c0_i32_0, %c0_i32_1, %c0_i32_2 : i32, i32, i32, i32
  }
  func.func @transform_4(%arg0: i32, %arg1: i32) -> (i32, i32) {
    %c0_i32 = arith.constant 0 : i32
    %c0_i32_0 = arith.constant 0 : i32
    %c0_i32_1 = arith.constant 0 : i32
    return %c0_i32, %c0_i32_0 : i32, i32
  }
  func.func @transform_5(%arg0: i32, %arg1: i32) -> (i32, i32) {
    %c0_i32 = arith.constant 0 : i32
    %c0_i32_0 = arith.constant 0 : i32
    %c0_i32_1 = arith.constant 0 : i32
    return %c0_i32, %c0_i32_0 : i32, i32
  }
  func.func @transform_6(%arg0: i32, %arg1: i32) -> (i32, i32, i32, i32) {
    %c0_i32 = arith.constant 0 : i32
    %c0_i32_0 = arith.constant 0 : i32
    %c0_i32_1 = arith.constant 0 : i32
    return %arg0, %arg1, %c0_i32, %c0_i32_0 : i32, i32, i32, i32
  }
  func.func @transform_7(%arg0: i32, %arg1: i32) -> (i32, i32) {
    %c0_i32 = arith.constant 0 : i32
    %c0_i32_0 = arith.constant 0 : i32
    %c0_i32_1 = arith.constant 0 : i32
    return %c0_i32, %c0_i32_0 : i32, i32
  }
}

module attributes {stable_mosaic.version = 11 : i64} {
  func.func @_scale_shift_relu_kernel(%arg0: i32, %arg1: memref<512x128xf32, #tpu.memory_space<vmem>>, %arg2: memref<1x128xf32, #tpu.memory_space<vmem>>, %arg3: memref<1x128xf32, #tpu.memory_space<vmem>>, %arg4: memref<512x128xf32, #tpu.memory_space<vmem>>) attributes {dimension_semantics = [#tpu.dimension_semantics<parallel>], iteration_bounds = array<i64: 1>, scalar_prefetch = 0 : i64, scratch_operands = 0 : i64, tpu.core_type = #tpu.core_type<tc>, window_params = [{transform_indices = @transform_0, window_bounds = array<i64: 512, 128>}, {pipeline_mode = #tpu.pipeline_mode<synchronous>, transform_indices = @transform_1, window_bounds = array<i64: 1, 128>}, {pipeline_mode = #tpu.pipeline_mode<synchronous>, transform_indices = @transform_2, window_bounds = array<i64: 1, 128>}, {transform_indices = @transform_3, window_bounds = array<i64: 512, 128>}]} {
    %c0 = arith.constant 0 : index
    %c0_0 = arith.constant 0 : index
    %0 = vector.load %arg1[%c0, %c0_0] : memref<512x128xf32, #tpu.memory_space<vmem>>, vector<512x128xf32>
    %c0_1 = arith.constant 0 : index
    %c0_2 = arith.constant 0 : index
    %1 = vector.load %arg2[%c0_1, %c0_2] : memref<1x128xf32, #tpu.memory_space<vmem>>, vector<1x128xf32>
    %2 = vector.broadcast %1 : vector<1x128xf32> to vector<512x128xf32>
    %3 = arith.mulf %0, %2 : vector<512x128xf32>
    %c0_3 = arith.constant 0 : index
    %c0_4 = arith.constant 0 : index
    %4 = vector.load %arg3[%c0_3, %c0_4] : memref<1x128xf32, #tpu.memory_space<vmem>>, vector<1x128xf32>
    %5 = vector.broadcast %4 : vector<1x128xf32> to vector<512x128xf32>
    %6 = arith.addf %3, %5 : vector<512x128xf32>
    %cst = arith.constant 0.000000e+00 : f32
    %7 = vector.broadcast %cst : f32 to vector<512x128xf32>
    %8 = arith.maximumf %6, %7 : vector<512x128xf32>
    %c0_5 = arith.constant 0 : index
    %c0_6 = arith.constant 0 : index
    %9 = vector.load %arg4[%c0_5, %c0_6] : memref<512x128xf32, #tpu.memory_space<vmem>>, vector<512x128xf32>
    tpu.vector_store %arg4[%c0_5, %c0_6], %8 {strides = array<i32>} : memref<512x128xf32, #tpu.memory_space<vmem>>, vector<512x128xf32>,
    return
  }
  func.func @transform_0(%arg0: i32) -> (i32, i32) {
    %c0_i32 = arith.constant 0 : i32
    %c0_i32_0 = arith.constant 0 : i32
    return %arg0, %c0_i32 : i32, i32
  }
  func.func @transform_1(%arg0: i32) -> (i32, i32) {
    %c0_i32 = arith.constant 0 : i32
    %c0_i32_0 = arith.constant 0 : i32
    %c0_i32_1 = arith.constant 0 : i32
    return %c0_i32, %c0_i32_0 : i32, i32
  }
  func.func @transform_2(%arg0: i32) -> (i32, i32) {
    %c0_i32 = arith.constant 0 : i32
    %c0_i32_0 = arith.constant 0 : i32
    %c0_i32_1 = arith.constant 0 : i32
    return %c0_i32, %c0_i32_0 : i32, i32
  }
  func.func @transform_3(%arg0: i32) -> (i32, i32) {
    %c0_i32 = arith.constant 0 : i32
    %c0_i32_0 = arith.constant 0 : i32
    return %arg0, %c0_i32 : i32, i32
  }
}

</mosaic_0001>

<llo_original>
// kernel: up_forward.4
$region0: #{up_forward.4}
  #allocation0 [shape = 'u32[]', space=smem, size = 0x4, offset = 0x4, fixed_abs, tag = 'smem constant byte address 0x4 - core index']
  #allocation1 [shape = 'u32[144,128]{1,0:T(1,128)}', space=vmem, size = 0x12000, scoped, tag = 'internal scratch']
  %s0 = inlined_call_operand.vmem [shape: f32[128,128], index: 0, kind: input, shape index: {}]
  %s1 = inlined_call_operand.vmem [shape: f32[128,128], index: 1, kind: input, shape index: {}]
  %s2 = inlined_call_operand.vmem [shape: f32[1,128], index: 2, kind: input, shape index: {}]
  %s3 = inlined_call_operand.vmem [shape: f32[128,128], index: 3, kind: output, shape index: {}]
  %s4 = sld [smem:[#allocation0]]
  $region22: #{up_forward.4} parent=0
    _
  %s6 = ssub.s32 1, %s4
  %s7 = scalar_select 0, %s6, %s4
  // Predicated region
  $region2: #{up_forward.4} parent=0 // pred_check
    _
  $region3: #{up_forward.4} parent=0 // pred_check_branch
    %9 = sbr.rel (0) target = $region5
  $region4: #{up_forward.4} parent=0 // pred_region
    _
  $region5: #{up_forward.4} parent=0 // pred_fallthru
    _
  // Predicated region
  $region6: #{up_forward.4} parent=0 // pred_check
    _
  $region7: #{up_forward.4} parent=0 // pred_check_branch
    %11 = sbr.rel (0) target = $region9
  $region8: #{up_forward.4} parent=0 // pred_region
    _
  $region9: #{up_forward.4} parent=0 // pred_fallthru
    _
  // Predicated region
  $region10: #{up_forward.4} parent=0 // pred_check
    _
  $region11: #{up_forward.4} parent=0 // pred_check_branch
    %13 = sbr.rel (0) target = $region13
  $region12: #{up_forward.4} parent=0 // pred_region
    _
  $region13: #{up_forward.4} parent=0 // pred_fallthru
    _
  %v14 = vld [vmem:[%s0] sm:$0xff]
  %v15 = vld [vmem:[%s0 + $0x8] sm:$0xff]
  %v16 = vld [vmem:[%s0 + $0x10] sm:$0xff]
  %v17 = vld [vmem:[%s0 + $0x18] sm:$0xff]
  %v18 = vld [vmem:[%s0 + $0x20] sm:$0xff]
  %v19 = vld [vmem:[%s0 + $0x28] sm:$0xff]
  %v20 = vld [vmem:[%s0 + $0x30] sm:$0xff]
  %v21 = vld [vmem:[%s0 + $0x38] sm:$0xff]
  %v22 = vld [vmem:[%s0 + $0x40] sm:$0xff]
  %v23 = vld [vmem:[%s0 + $0x48] sm:$0xff]
  %v24 = vld [vmem:[%s0 + $0x50] sm:$0xff]
  %v25 = vld [vmem:[%s0 + $0x58] sm:$0xff]
  %v26 = vld [vmem:[%s0 + $0x60] sm:$0xff]
  %v27 = vld [vmem:[%s0 + $0x68] sm:$0xff]
  %v28 = vld [vmem:[%s0 + $0x70] sm:$0xff]
  %v29 = vld [vmem:[%s0 + $0x78] sm:$0xff]
  %v30 = vld [vmem:[%s1] sm:$0xff]
  %v31 = vld [vmem:[%s1 + $0x8] sm:$0xff]
  %v32 = vld [vmem:[%s1 + $0x10] sm:$0xff]
  %v33 = vld [vmem:[%s1 + $0x18] sm:$0xff]
  %v34 = vld [vmem:[%s1 + $0x20] sm:$0xff]
  %v35 = vld [vmem:[%s1 + $0x28] sm:$0xff]
  %v36 = vld [vmem:[%s1 + $0x30] sm:$0xff]
  %v37 = vld [vmem:[%s1 + $0x38] sm:$0xff]
  %v38 = vld [vmem:[%s1 + $0x40] sm:$0xff]
  %v39 = vld [vmem:[%s1 + $0x48] sm:$0xff]
  %v40 = vld [vmem:[%s1 + $0x50] sm:$0xff]
  %v41 = vld [vmem:[%s1 + $0x58] sm:$0xff]
  %v42 = vld [vmem:[%s1 + $0x60] sm:$0xff]
  %v43 = vld [vmem:[%s1 + $0x68] sm:$0xff]
  %v44 = vld [vmem:[%s1 + $0x70] sm:$0xff]
  %v45 = vld [vmem:[%s1 + $0x78] sm:$0xff]
  %v46 = vld [vmem:[%s2] sm:$0x1]
  %v48 = vlaneseq
  %v49 = vshrl.u32 %v48, 7
  %v50 = vsub.s32 0, %v49
  %v51 = vrot.slane %v46, %v50
  %53 = vmatprep.subr.mxu0 0.0
  %54 = vmatpush1.msra.mxu0 %v30
  %55 = vmatprep.subr.mxu0 0.0
  %56 = vmatpush1.msra.mxu0 %v31
  %57 = vmatprep.subr.mxu0 0.0
  %58 = vmatpush1.msra.mxu0 %v32
  %59 = vmatprep.subr.mxu0 0.0
  %60 = vmatpush1.msra.mxu0 %v33
  %61 = vmatprep.subr.mxu0 0.0
  %62 = vmatpush1.msra.mxu0 %v34
  %63 = vmatprep.subr.mxu0 0.0
  %64 = vmatpush1.msra.mxu0 %v35
  %65 = vmatprep.subr.mxu0 0.0
  %66 = vmatpush1.msra.mxu0 %v36
  %67 = vmatprep.subr.mxu0 0.0
  %68 = vmatpush1.msra.mxu0 %v37
  %69 = vmatprep.subr.mxu0 0.0
  %70 = vmatpush1.msra.mxu0 %v38
  %71 = vmatprep.subr.mxu0 0.0
  %72 = vmatpush1.msra.mxu0 %v39
  %73 = vmatprep.subr.mxu0 0.0
  %74 = vmatpush1.msra.mxu0 %v40
  %75 = vmatprep.subr.mxu0 0.0
  %76 = vmatpush1.msra.mxu0 %v41
  %77 = vmatprep.subr.mxu0 0.0
  %78 = vmatpush1.msra.mxu0 %v42
  %79 = vmatprep.subr.mxu0 0.0
  %80 = vmatpush1.msra.mxu0 %v43
  %81 = vmatprep.subr.mxu0 0.0
  %82 = vmatpush1.msra.mxu0 %v44
  %83 = vmatprep.subr.mxu0 0.0
  %84 = vmatpush1.msra.mxu0 %v45
  %85 = vmatprep.subr.mxu0 0.0
  %86 = vmatpush1.msra.mxu0 0.0
  %87 = vmatprep.subr.mxu0 0.0
  %88 = vmatpush1.msra.mxu0 0.0
  %89 = vmatprep.subr.mxu0 0.0
  %90 = vmatpush1.msra.mxu0 0.0
  %91 = vmatprep.subr.mxu0 0.0
  %92 = vmatpush1.msra.mxu0 0.0
  %93 = vmatprep.subr.mxu0 0.0
  %94 = vmatpush1.msra.mxu0 0.0
  %95 = vmatprep.subr.mxu0 0.0
  %96 = vmatpush1.msra.mxu0 0.0
  %97 = vmatprep.subr.mxu0 0.0
  %98 = vmatpush1.msra.mxu0 0.0
  %99 = vmatprep.subr.mxu0 0.0
  %100 = vmatpush1.msra.mxu0 0.0
  %101 = vmatprep.subr.mxu0 0.0
  %102 = vmatpush1.msra.mxu0 0.0
  %103 = vmatprep.subr.mxu0 0.0
  %104 = vmatpush1.msra.mxu0 0.0
  %105 = vmatprep.subr.mxu0 0.0
  %106 = vmatpush1.msra.mxu0 0.0
  %107 = vmatprep.subr.mxu0 0.0
  %108 = vmatpush1.msra.mxu0 0.0
  %109 = vmatprep.subr.mxu0 0.0
  %110 = vmatpush1.msra.mxu0 0.0
  %111 = vmatprep.subr.mxu0 0.0
  %112 = vmatpush1.msra.mxu0 0.0
  %113 = vmatprep.subr.mxu0 0.0
  %114 = vmatpush1.msra.mxu0 0.0
  %115 = vmatprep.subr.mxu0 0.0
  %116 = vmatpush1.msra.mxu0 0.0
  %117 = vmatprep.mubr.f32.mxu0 0.0
  %118 = vmatmul.mubr.f32.gmra.mrb[0].mxu0 %v14
  %v119 = vpop.f32.mrb[0].mxu0
  %v120 = vadd.f32 %v51, %v119
  %v121 = vpop.f32.mrb[0].mxu0
  %122 = vmatprep.mubr.f32.mxu0 0.0
  %123 = vmatmul.mubr.f32.gmra.mrb[0].mxu0 %v15
  %v124 = vpop.f32.mrb[0].mxu0
  %v125 = vadd.f32 %v51, %v124
  %v126 = vpop.f32.mrb[0].mxu0
  %127 = vmatprep.mubr.f32.mxu0 0.0
  %128 = vmatmul.mubr.f32.gmra.mrb[0].mxu0 %v16
  %v129 = vpop.f32.mrb[0].mxu0
  %v130 = vadd.f32 %v51, %v129
  %v131 = vpop.f32.mrb[0].mxu0
  %132 = vmatprep.mubr.f32.mxu0 0.0
  %133 = vmatmul.mubr.f32.gmra.mrb[0].mxu0 %v17
  %v134 = vpop.f32.mrb[0].mxu0
  %v135 = vadd.f32 %v51, %v134
  %v136 = vpop.f32.mrb[0].mxu0
  %137 = vmatprep.mubr.f32.mxu0 0.0
  %138 = vmatmul.mubr.f32.gmra.mrb[0].mxu0 %v18
  %v139 = vpop.f32.mrb[0].mxu0
  %v140 = vadd.f32 %v51, %v139
  %v141 = vpop.f32.mrb[0].mxu0
  %142 = vmatprep.mubr.f32.mxu0 0.0
  %143 = vmatmul.mubr.f32.gmra.mrb[0].mxu0 %v19
  %v144 = vpop.f32.mrb[0].mxu0
  %v145 = vadd.f32 %v51, %v144
  %v146 = vpop.f32.mrb[0].mxu0
  %147 = vmatprep.mubr.f32.mxu0 0.0
  %148 = vmatmul.mubr.f32.gmra.mrb[0].mxu0 %v20
  %v149 = vpop.f32.mrb[0].mxu0
  %v150 = vadd.f32 %v51, %v149
  %v151 = vpop.f32.mrb[0].mxu0
  %152 = vmatprep.mubr.f32.mxu0 0.0
  %153 = vmatmul.mubr.f32.gmra.mrb[0].mxu0 %v21
  %v154 = vpop.f32.mrb[0].mxu0
  %v155 = vadd.f32 %v51, %v154
  %v156 = vpop.f32.mrb[0].mxu0
  %157 = vmatprep.mubr.f32.mxu0 0.0
  %158 = vmatmul.mubr.f32.gmra.mrb[0].mxu0 %v22
  %v159 = vpop.f32.mrb[0].mxu0
  %v160 = vadd.f32 %v51, %v159
  %v161 = vpop.f32.mrb[0].mxu0
  %162 = vmatprep.mubr.f32.mxu0 0.0
  %163 = vmatmul.mubr.f32.gmra.mrb[0].mxu0 %v23
  %v164 = vpop.f32.mrb[0].mxu0
  %v165 = vadd.f32 %v51, %v164
  %v166 = vpop.f32.mrb[0].mxu0
  %167 = vmatprep.mubr.f32.mxu0 0.0
  %168 = vmatmul.mubr.f32.gmra.mrb[0].mxu0 %v24
  %v169 = vpop.f32.mrb[0].mxu0
  %v170 = vadd.f32 %v51, %v169
  %v171 = vpop.f32.mrb[0].mxu0
  %172 = vmatprep.mubr.f32.mxu0 0.0
  %173 = vmatmul.mubr.f32.gmra.mrb[0].mxu0 %v25
  %v174 = vpop.f32.mrb[0].mxu0
  %v175 = vadd.f32 %v51, %v174
  %v176 = vpop.f32.mrb[0].mxu0
  %177 = vmatprep.mubr.f32.mxu0 0.0
  %178 = vmatmul.mubr.f32.gmra.mrb[0].mxu0 %v26
  %v179 = vpop.f32.mrb[0].mxu0
  %v180 = vadd.f32 %v51, %v179
  %v181 = vpop.f32.mrb[0].mxu0
  %182 = vmatprep.mubr.f32.mxu0 0.0
  %183 = vmatmul.mubr.f32.gmra.mrb[0].mxu0 %v27
  %v184 = vpop.f32.mrb[0].mxu0
  %v185 = vadd.f32 %v51, %v184
  %v186 = vpop.f32.mrb[0].mxu0
  %187 = vmatprep.mubr.f32.mxu0 0.0
  %188 = vmatmul.mubr.f32.gmra.mrb[0].mxu0 %v28
  %v189 = vpop.f32.mrb[0].mxu0
  %v190 = vadd.f32 %v51, %v189
  %v191 = vpop.f32.mrb[0].mxu0
  %192 = vmatprep.mubr.f32.mxu0 0.0
  %193 = vmatmul.mubr.f32.gmra.mrb[0].mxu0 %v29
  %v194 = vpop.f32.mrb[0].mxu0
  %v195 = vadd.f32 %v51, %v194
  %v196 = vpop.f32.mrb[0].mxu0
  %197 = vdwg.mxu0
  %198 = vst [vmem:[%s3] sm:$0xff] %v120
  %199 = vst [vmem:[%s3 + $0x8] sm:$0xff] %v125
  %200 = vst [vmem:[%s3 + $0x10] sm:$0xff] %v130
  %201 = vst [vmem:[%s3 + $0x18] sm:$0xff] %v135
  %202 = vst [vmem:[%s3 + $0x20] sm:$0xff] %v140
  %203 = vst [vmem:[%s3 + $0x28] sm:$0xff] %v145
  %204 = vst [vmem:[%s3 + $0x30] sm:$0xff] %v150
  %205 = vst [vmem:[%s3 + $0x38] sm:$0xff] %v155
  %206 = vst [vmem:[%s3 + $0x40] sm:$0xff] %v160
  %207 = vst [vmem:[%s3 + $0x48] sm:$0xff] %v165
  %208 = vst [vmem:[%s3 + $0x50] sm:$0xff] %v170
  %209 = vst [vmem:[%s3 + $0x58] sm:$0xff] %v175
  %210 = vst [vmem:[%s3 + $0x60] sm:$0xff] %v180
  %211 = vst [vmem:[%s3 + $0x68] sm:$0xff] %v185
  %212 = vst [vmem:[%s3 + $0x70] sm:$0xff] %v190
  %213 = vst [vmem:[%s3 + $0x78] sm:$0xff] %v195
  // Predicated region
  $region14: #{up_forward.4} parent=0 // pred_check
    _
  $region15: #{up_forward.4} parent=0 // pred_check_branch
    %215 = sbr.rel (0) target = $region17
  $region16: #{up_forward.4} parent=0 // pred_region
    _
  $region17: #{up_forward.4} parent=0 // pred_fallthru
    _
  // Predicated region
  $region18: #{up_forward.4} parent=0 // pred_check
    _
  $region19: #{up_forward.4} parent=0 // pred_check_branch
    %217 = sbr.rel (0) target = $region21
  $region20: #{up_forward.4} parent=0 // pred_region
    _
  $region21: #{up_forward.4} parent=0 // pred_fallthru
    _

// kernel: up_forward.7
$region0: #{up_forward.7}
  #allocation0 [shape = 'u32[]', space=smem, size = 0x4, offset = 0x4, fixed_abs, tag = 'smem constant byte address 0x4 - core index']
  #allocation1 [shape = 'u32[144,128]{1,0:T(1,128)}', space=vmem, size = 0x12000, scoped, tag = 'internal scratch']
  %s0 = inlined_call_operand.vmem [shape: f32[512,128], index: 0, kind: input, shape index: {}]
  %s1 = inlined_call_operand.vmem [shape: f32[1,128], index: 1, kind: input, shape index: {}]
  %s2 = inlined_call_operand.vmem [shape: f32[1,128], index: 2, kind: input, shape index: {}]
  %s3 = inlined_call_operand.vmem [shape: f32[512,128], index: 3, kind: output, shape index: {}]
  %s4 = sld [smem:[#allocation0]]
  $region22: #{up_forward.7} parent=0
    _
  %s6 = ssub.s32 1, %s4
  %s7 = scalar_select 0, %s6, %s4
  // Predicated region
  $region2: #{up_forward.7} parent=0 // pred_check
    _
  $region3: #{up_forward.7} parent=0 // pred_check_branch
    %9 = sbr.rel (0) target = $region5
  $region4: #{up_forward.7} parent=0 // pred_region
    _
  $region5: #{up_forward.7} parent=0 // pred_fallthru
    _
  // Predicated region
  $region6: #{up_forward.7} parent=0 // pred_check
    _
  $region7: #{up_forward.7} parent=0 // pred_check_branch
    %11 = sbr.rel (0) target = $region9
  $region8: #{up_forward.7} parent=0 // pred_region
    _
  $region9: #{up_forward.7} parent=0 // pred_fallthru
    _
  // Predicated region
  $region10: #{up_forward.7} parent=0 // pred_check
    _
  $region11: #{up_forward.7} parent=0 // pred_check_branch
    %13 = sbr.rel (0) target = $region13
  $region12: #{up_forward.7} parent=0 // pred_region
    _
  $region13: #{up_forward.7} parent=0 // pred_fallthru
    _
  %v14 = vld [vmem:[%s0] sm:$0xff]
  %v15 = vld [vmem:[%s0 + $0x8] sm:$0xff]
  %v16 = vld [vmem:[%s0 + $0x10] sm:$0xff]
  %v17 = vld [vmem:[%s0 + $0x18] sm:$0xff]
  %v18 = vld [vmem:[%s0 + $0x20] sm:$0xff]
  %v19 = vld [vmem:[%s0 + $0x28] sm:$0xff]
  %v20 = vld [vmem:[%s0 + $0x30] sm:$0xff]
  %v21 = vld [vmem:[%s0 + $0x38] sm:$0xff]
  %v22 = vld [vmem:[%s0 + $0x40] sm:$0xff]
  %v23 = vld [vmem:[%s0 + $0x48] sm:$0xff]
  %v24 = vld [vmem:[%s0 + $0x50] sm:$0xff]
  %v25 = vld [vmem:[%s0 + $0x58] sm:$0xff]
  %v26 = vld [vmem:[%s0 + $0x60] sm:$0xff]
  %v27 = vld [vmem:[%s0 + $0x68] sm:$0xff]
  %v28 = vld [vmem:[%s0 + $0x70] sm:$0xff]
  %v29 = vld [vmem:[%s0 + $0x78] sm:$0xff]
  %v30 = vld [vmem:[%s0 + $0x80] sm:$0xff]
  %v31 = vld [vmem:[%s0 + $0x88] sm:$0xff]
  %v32 = vld [vmem:[%s0 + $0x90] sm:$0xff]
  %v33 = vld [vmem:[%s0 + $0x98] sm:$0xff]
  %v34 = vld [vmem:[%s0 + $0xa0] sm:$0xff]
  %v35 = vld [vmem:[%s0 + $0xa8] sm:$0xff]
  %v36 = vld [vmem:[%s0 + $0xb0] sm:$0xff]
  %v37 = vld [vmem:[%s0 + $0xb8] sm:$0xff]
  %v38 = vld [vmem:[%s0 + $0xc0] sm:$0xff]
  %v39 = vld [vmem:[%s0 + $0xc8] sm:$0xff]
  %v40 = vld [vmem:[%s0 + $0xd0] sm:$0xff]
  %v41 = vld [vmem:[%s0 + $0xd8] sm:$0xff]
  %v42 = vld [vmem:[%s0 + $0xe0] sm:$0xff]
  %v43 = vld [vmem:[%s0 + $0xe8] sm:$0xff]
  %v44 = vld [vmem:[%s0 + $0xf0] sm:$0xff]
  %v45 = vld [vmem:[%s0 + $0xf8] sm:$0xff]
  %v46 = vld [vmem:[%s0 + $0x100] sm:$0xff]
  %v47 = vld [vmem:[%s0 + $0x108] sm:$0xff]
  %v48 = vld [vmem:[%s0 + $0x110] sm:$0xff]
  %v49 = vld [vmem:[%s0 + $0x118] sm:$0xff]
  %v50 = vld [vmem:[%s0 + $0x120] sm:$0xff]
  %v51 = vld [vmem:[%s0 + $0x128] sm:$0xff]
  %v52 = vld [vmem:[%s0 + $0x130] sm:$0xff]
  %v53 = vld [vmem:[%s0 + $0x138] sm:$0xff]
  %v54 = vld [vmem:[%s0 + $0x140] sm:$0xff]
  %v55 = vld [vmem:[%s0 + $0x148] sm:$0xff]
  %v56 = vld [vmem:[%s0 + $0x150] sm:$0xff]
  %v57 = vld [vmem:[%s0 + $0x158] sm:$0xff]
  %v58 = vld [vmem:[%s0 + $0x160] sm:$0xff]
  %v59 = vld [vmem:[%s0 + $0x168] sm:$0xff]
  %v60 = vld [vmem:[%s0 + $0x170] sm:$0xff]
  %v61 = vld [vmem:[%s0 + $0x178] sm:$0xff]
  %v62 = vld [vmem:[%s0 + $0x180] sm:$0xff]
  %v63 = vld [vmem:[%s0 + $0x188] sm:$0xff]
  %v64 = vld [vmem:[%s0 + $0x190] sm:$0xff]
  %v65 = vld [vmem:[%s0 + $0x198] sm:$0xff]
  %v66 = vld [vmem:[%s0 + $0x1a0] sm:$0xff]
  %v67 = vld [vmem:[%s0 + $0x1a8] sm:$0xff]
  %v68 = vld [vmem:[%s0 + $0x1b0] sm:$0xff]
  %v69 = vld [vmem:[%s0 + $0x1b8] sm:$0xff]
  %v70 = vld [vmem:[%s0 + $0x1c0] sm:$0xff]
  %v71 = vld [vmem:[%s0 + $0x1c8] sm:$0xff]
  %v72 = vld [vmem:[%s0 + $0x1d0] sm:$0xff]
  %v73 = vld [vmem:[%s0 + $0x1d8] sm:$0xff]
  %v74 = vld [vmem:[%s0 + $0x1e0] sm:$0xff]
  %v75 = vld [vmem:[%s0 + $0x1e8] sm:$0xff]
  %v76 = vld [vmem:[%s0 + $0x1f0] sm:$0xff]
  %v77 = vld [vmem:[%s0 + $0x1f8] sm:$0xff]
  %v78 = vld [vmem:[%s1] sm:$0x1]
  %v80 = vlaneseq
  %v81 = vshrl.u32 %v80, 7
  %v82 = vsub.s32 0, %v81
  %v83 = vrot.slane %v78, %v82
  %v85 = vmul.f32 %v14, %v83
  %v86 = vmul.f32 %v15, %v83
  %v87 = vmul.f32 %v16, %v83
  %v88 = vmul.f32 %v17, %v83
  %v89 = vmul.f32 %v18, %v83
  %v90 = vmul.f32 %v19, %v83
  %v91 = vmul.f32 %v20, %v83
  %v92 = vmul.f32 %v21, %v83
  %v93 = vmul.f32 %v22, %v83
  %v94 = vmul.f32 %v23, %v83
  %v95 = vmul.f32 %v24, %v83
  %v96 = vmul.f32 %v25, %v83
  %v97 = vmul.f32 %v26, %v83
  %v98 = vmul.f32 %v27, %v83
  %v99 = vmul.f32 %v28, %v83
  %v100 = vmul.f32 %v29, %v83
  %v101 = vmul.f32 %v30, %v83
  %v102 = vmul.f32 %v31, %v83
  %v103 = vmul.f32 %v32, %v83
  %v104 = vmul.f32 %v33, %v83
  %v105 = vmul.f32 %v34, %v83
  %v106 = vmul.f32 %v35, %v83
  %v107 = vmul.f32 %v36, %v83
  %v108 = vmul.f32 %v37, %v83
  %v109 = vmul.f32 %v38, %v83
  %v110 = vmul.f32 %v39, %v83
  %v111 = vmul.f32 %v40, %v83
  %v112 = vmul.f32 %v41, %v83
  %v113 = vmul.f32 %v42, %v83
  %v114 = vmul.f32 %v43, %v83
  %v115 = vmul.f32 %v44, %v83
  %v116 = vmul.f32 %v45, %v83
  %v117 = vmul.f32 %v46, %v83
  %v118 = vmul.f32 %v47, %v83
  %v119 = vmul.f32 %v48, %v83
  %v120 = vmul.f32 %v49, %v83
  %v121 = vmul.f32 %v50, %v83
  %v122 = vmul.f32 %v51, %v83
  %v123 = vmul.f32 %v52, %v83
  %v124 = vmul.f32 %v53, %v83
  %v125 = vmul.f32 %v54, %v83
  %v126 = vmul.f32 %v55, %v83
  %v127 = vmul.f32 %v56, %v83
  %v128 = vmul.f32 %v57, %v83
  %v129 = vmul.f32 %v58, %v83
  %v130 = vmul.f32 %v59, %v83
  %v131 = vmul.f32 %v60, %v83
  %v132 = vmul.f32 %v61, %v83
  %v133 = vmul.f32 %v62, %v83
  %v134 = vmul.f32 %v63, %v83
  %v135 = vmul.f32 %v64, %v83
  %v136 = vmul.f32 %v65, %v83
  %v137 = vmul.f32 %v66, %v83
  %v138 = vmul.f32 %v67, %v83
  %v139 = vmul.f32 %v68, %v83
  %v140 = vmul.f32 %v69, %v83
  %v141 = vmul.f32 %v70, %v83
  %v142 = vmul.f32 %v71, %v83
  %v143 = vmul.f32 %v72, %v83
  %v144 = vmul.f32 %v73, %v83
  %v145 = vmul.f32 %v74, %v83
  %v146 = vmul.f32 %v75, %v83
  %v147 = vmul.f32 %v76, %v83
  %v148 = vmul.f32 %v77, %v83
  %v149 = vld [vmem:[%s2] sm:$0x1]
  %v151 = vlaneseq
  %v152 = vshrl.u32 %v151, 7
  %v153 = vsub.s32 0, %v152
  %v154 = vrot.slane %v149, %v153
  %v156 = vadd.f32 %v85, %v154
  %v157 = vadd.f32 %v86, %v154
  %v158 = vadd.f32 %v87, %v154
  %v159 = vadd.f32 %v88, %v154
  %v160 = vadd.f32 %v89, %v154
  %v161 = vadd.f32 %v90, %v154
  %v162 = vadd.f32 %v91, %v154
  %v163 = vadd.f32 %v92, %v154
  %v164 = vadd.f32 %v93, %v154
  %v165 = vadd.f32 %v94, %v154
  %v166 = vadd.f32 %v95, %v154
  %v167 = vadd.f32 %v96, %v154
  %v168 = vadd.f32 %v97, %v154
  %v169 = vadd.f32 %v98, %v154
  %v170 = vadd.f32 %v99, %v154
  %v171 = vadd.f32 %v100, %v154
  %v172 = vadd.f32 %v101, %v154
  %v173 = vadd.f32 %v102, %v154
  %v174 = vadd.f32 %v103, %v154
  %v175 = vadd.f32 %v104, %v154
  %v176 = vadd.f32 %v105, %v154
  %v177 = vadd.f32 %v106, %v154
  %v178 = vadd.f32 %v107, %v154
  %v179 = vadd.f32 %v108, %v154
  %v180 = vadd.f32 %v109, %v154
  %v181 = vadd.f32 %v110, %v154
  %v182 = vadd.f32 %v111, %v154
  %v183 = vadd.f32 %v112, %v154
  %v184 = vadd.f32 %v113, %v154
  %v185 = vadd.f32 %v114, %v154
  %v186 = vadd.f32 %v115, %v154
  %v187 = vadd.f32 %v116, %v154
  %v188 = vadd.f32 %v117, %v154
  %v189 = vadd.f32 %v118, %v154
  %v190 = vadd.f32 %v119, %v154
  %v191 = vadd.f32 %v120, %v154
  %v192 = vadd.f32 %v121, %v154
  %v193 = vadd.f32 %v122, %v154
  %v194 = vadd.f32 %v123, %v154
  %v195 = vadd.f32 %v124, %v154
  %v196 = vadd.f32 %v125, %v154
  %v197 = vadd.f32 %v126, %v154
  %v198 = vadd.f32 %v127, %v154
  %v199 = vadd.f32 %v128, %v154
  %v200 = vadd.f32 %v129, %v154
  %v201 = vadd.f32 %v130, %v154
  %v202 = vadd.f32 %v131, %v154
  %v203 = vadd.f32 %v132, %v154
  %v204 = vadd.f32 %v133, %v154
  %v205 = vadd.f32 %v134, %v154
  %v206 = vadd.f32 %v135, %v154
  %v207 = vadd.f32 %v136, %v154
  %v208 = vadd.f32 %v137, %v154
  %v209 = vadd.f32 %v138, %v154
  %v210 = vadd.f32 %v139, %v154
  %v211 = vadd.f32 %v140, %v154
  %v212 = vadd.f32 %v141, %v154
  %v213 = vadd.f32 %v142, %v154
  %v214 = vadd.f32 %v143, %v154
  %v215 = vadd.f32 %v144, %v154
  %v216 = vadd.f32 %v145, %v154
  %v217 = vadd.f32 %v146, %v154
  %v218 = vadd.f32 %v147, %v154
  %v219 = vadd.f32 %v148, %v154
  %v220 = vmax.f32 %v156, 0.0
  %v221 = vmax.f32 %v157, 0.0
  %v222 = vmax.f32 %v158, 0.0
  %v223 = vmax.f32 %v159, 0.0
  %v224 = vmax.f32 %v160, 0.0
  %v225 = vmax.f32 %v161, 0.0
  %v226 = vmax.f32 %v162, 0.0
  %v227 = vmax.f32 %v163, 0.0
  %v228 = vmax.f32 %v164, 0.0
  %v229 = vmax.f32 %v165, 0.0
  %v230 = vmax.f32 %v166, 0.0
  %v231 = vmax.f32 %v167, 0.0
  %v232 = vmax.f32 %v168, 0.0
  %v233 = vmax.f32 %v169, 0.0
  %v234 = vmax.f32 %v170, 0.0
  %v235 = vmax.f32 %v171, 0.0
  %v236 = vmax.f32 %v172, 0.0
  %v237 = vmax.f32 %v173, 0.0
  %v238 = vmax.f32 %v174, 0.0
  %v239 = vmax.f32 %v175, 0.0
  %v240 = vmax.f32 %v176, 0.0
  %v241 = vmax.f32 %v177, 0.0
  %v242 = vmax.f32 %v178, 0.0
  %v243 = vmax.f32 %v179, 0.0
  %v244 = vmax.f32 %v180, 0.0
  %v245 = vmax.f32 %v181, 0.0
  %v246 = vmax.f32 %v182, 0.0
  %v247 = vmax.f32 %v183, 0.0
  %v248 = vmax.f32 %v184, 0.0
  %v249 = vmax.f32 %v185, 0.0
  %v250 = vmax.f32 %v186, 0.0
  %v251 = vmax.f32 %v187, 0.0
  %v252 = vmax.f32 %v188, 0.0
  %v253 = vmax.f32 %v189, 0.0
  %v254 = vmax.f32 %v190, 0.0
  %v255 = vmax.f32 %v191, 0.0
  %v256 = vmax.f32 %v192, 0.0
  %v257 = vmax.f32 %v193, 0.0
  %v258 = vmax.f32 %v194, 0.0
  %v259 = vmax.f32 %v195, 0.0
  %v260 = vmax.f32 %v196, 0.0
  %v261 = vmax.f32 %v197, 0.0
  %v262 = vmax.f32 %v198, 0.0
  %v263 = vmax.f32 %v199, 0.0
  %v264 = vmax.f32 %v200, 0.0
  %v265 = vmax.f32 %v201, 0.0
  %v266 = vmax.f32 %v202, 0.0
  %v267 = vmax.f32 %v203, 0.0
  %v268 = vmax.f32 %v204, 0.0
  %v269 = vmax.f32 %v205, 0.0
  %v270 = vmax.f32 %v206, 0.0
  %v271 = vmax.f32 %v207, 0.0
  %v272 = vmax.f32 %v208, 0.0
  %v273 = vmax.f32 %v209, 0.0
  %v274 = vmax.f32 %v210, 0.0
  %v275 = vmax.f32 %v211, 0.0
  %v276 = vmax.f32 %v212, 0.0
  %v277 = vmax.f32 %v213, 0.0
  %v278 = vmax.f32 %v214, 0.0
  %v279 = vmax.f32 %v215, 0.0
  %v280 = vmax.f32 %v216, 0.0
  %v281 = vmax.f32 %v217, 0.0
  %v282 = vmax.f32 %v218, 0.0
  %v283 = vmax.f32 %v219, 0.0
  %284 = vst [vmem:[%s3] sm:$0xff] %v220
  %285 = vst [vmem:[%s3 + $0x8] sm:$0xff] %v221
  %286 = vst [vmem:[%s3 + $0x10] sm:$0xff] %v222
  %287 = vst [vmem:[%s3 + $0x18] sm:$0xff] %v223
  %288 = vst [vmem:[%s3 + $0x20] sm:$0xff] %v224
  %289 = vst [vmem:[%s3 + $0x28] sm:$0xff] %v225
  %290 = vst [vmem:[%s3 + $0x30] sm:$0xff] %v226
  %291 = vst [vmem:[%s3 + $0x38] sm:$0xff] %v227
  %292 = vst [vmem:[%s3 + $0x40] sm:$0xff] %v228
  %293 = vst [vmem:[%s3 + $0x48] sm:$0xff] %v229
  %294 = vst [vmem:[%s3 + $0x50] sm:$0xff] %v230
  %295 = vst [vmem:[%s3 + $0x58] sm:$0xff] %v231
  %296 = vst [vmem:[%s3 + $0x60] sm:$0xff] %v232
  %297 = vst [vmem:[%s3 + $0x68] sm:$0xff] %v233
  %298 = vst [vmem:[%s3 + $0x70] sm:$0xff] %v234
  %299 = vst [vmem:[%s3 + $0x78] sm:$0xff] %v235
  %300 = vst [vmem:[%s3 + $0x80] sm:$0xff] %v236
  %301 = vst [vmem:[%s3 + $0x88] sm:$0xff] %v237
  %302 = vst [vmem:[%s3 + $0x90] sm:$0xff] %v238
  %303 = vst [vmem:[%s3 + $0x98] sm:$0xff] %v239
  %304 = vst [vmem:[%s3 + $0xa0] sm:$0xff] %v240
  %305 = vst [vmem:[%s3 + $0xa8] sm:$0xff] %v241
  %306 = vst [vmem:[%s3 + $0xb0] sm:$0xff] %v242
  %307 = vst [vmem:[%s3 + $0xb8] sm:$0xff] %v243
  %308 = vst [vmem:[%s3 + $0xc0] sm:$0xff] %v244
  %309 = vst [vmem:[%s3 + $0xc8] sm:$0xff] %v245
  %310 = vst [vmem:[%s3 + $0xd0] sm:$0xff] %v246
  %311 = vst [vmem:[%s3 + $0xd8] sm:$0xff] %v247
  %312 = vst [vmem:[%s3 + $0xe0] sm:$0xff] %v248
  %313 = vst [vmem:[%s3 + $0xe8] sm:$0xff] %v249
  %314 = vst [vmem:[%s3 + $0xf0] sm:$0xff] %v250
  %315 = vst [vmem:[%s3 + $0xf8] sm:$0xff] %v251
  %316 = vst [vmem:[%s3 + $0x100] sm:$0xff] %v252
  %317 = vst [vmem:[%s3 + $0x108] sm:$0xff] %v253
  %318 = vst [vmem:[%s3 + $0x110] sm:$0xff] %v254
  %319 = vst [vmem:[%s3 + $0x118] sm:$0xff] %v255
  %320 = vst [vmem:[%s3 + $0x120] sm:$0xff] %v256
  %321 = vst [vmem:[%s3 + $0x128] sm:$0xff] %v257
  %322 = vst [vmem:[%s3 + $0x130] sm:$0xff] %v258
  %323 = vst [vmem:[%s3 + $0x138] sm:$0xff] %v259
  %324 = vst [vmem:[%s3 + $0x140] sm:$0xff] %v260
  %325 = vst [vmem:[%s3 + $0x148] sm:$0xff] %v261
  %326 = vst [vmem:[%s3 + $0x150] sm:$0xff] %v262
  %327 = vst [vmem:[%s3 + $0x158] sm:$0xff] %v263
  %328 = vst [vmem:[%s3 + $0x160] sm:$0xff] %v264
  %329 = vst [vmem:[%s3 + $0x168] sm:$0xff] %v265
  %330 = vst [vmem:[%s3 + $0x170] sm:$0xff] %v266
  %331 = vst [vmem:[%s3 + $0x178] sm:$0xff] %v267
  %332 = vst [vmem:[%s3 + $0x180] sm:$0xff] %v268
  %333 = vst [vmem:[%s3 + $0x188] sm:$0xff] %v269
  %334 = vst [vmem:[%s3 + $0x190] sm:$0xff] %v270
  %335 = vst [vmem:[%s3 + $0x198] sm:$0xff] %v271
  %336 = vst [vmem:[%s3 + $0x1a0] sm:$0xff] %v272
  %337 = vst [vmem:[%s3 + $0x1a8] sm:$0xff] %v273
  %338 = vst [vmem:[%s3 + $0x1b0] sm:$0xff] %v274
  %339 = vst [vmem:[%s3 + $0x1b8] sm:$0xff] %v275
  %340 = vst [vmem:[%s3 + $0x1c0] sm:$0xff] %v276
  %341 = vst [vmem:[%s3 + $0x1c8] sm:$0xff] %v277
  %342 = vst [vmem:[%s3 + $0x1d0] sm:$0xff] %v278
  %343 = vst [vmem:[%s3 + $0x1d8] sm:$0xff] %v279
  %344 = vst [vmem:[%s3 + $0x1e0] sm:$0xff] %v280
  %345 = vst [vmem:[%s3 + $0x1e8] sm:$0xff] %v281
  %346 = vst [vmem:[%s3 + $0x1f0] sm:$0xff] %v282
  %347 = vst [vmem:[%s3 + $0x1f8] sm:$0xff] %v283
  // Predicated region
  $region14: #{up_forward.7} parent=0 // pred_check
    _
  $region15: #{up_forward.7} parent=0 // pred_check_branch
    %349 = sbr.rel (0) target = $region17
  $region16: #{up_forward.7} parent=0 // pred_region
    _
  $region17: #{up_forward.7} parent=0 // pred_fallthru
    _
  // Predicated region
  $region18: #{up_forward.7} parent=0 // pred_check
    _
  $region19: #{up_forward.7} parent=0 // pred_check_branch
    %351 = sbr.rel (0) target = $region21
  $region20: #{up_forward.7} parent=0 // pred_region
    _
  $region21: #{up_forward.7} parent=0 // pred_fallthru
    _

// kernel: up_forward.6
$region0: #{up_forward.6}
  #allocation0 [shape = 'u32[]', space=smem, size = 0x4, offset = 0x4, fixed_abs, tag = 'smem constant byte address 0x4 - core index']
  #allocation1 [shape = 'u32[144,128]{1,0:T(1,128)}', space=vmem, size = 0x12000, scoped, tag = 'internal scratch']
  %s0 = inlined_call_operand.vmem [shape: f32[2,18,18,128], index: 0, kind: input, shape index: {}, may-alias: {0,1,2}]
  %s1 = inlined_call_operand.vmem [shape: f32[2,18,18,128], index: 1, kind: input, shape index: {}, may-alias: {0,1,2}]
  %s2 = inlined_call_operand.vmem [shape: f32[2,18,18,128], index: 2, kind: input, shape index: {}, may-alias: {0,1,2}]
  %s3 = inlined_call_operand.vmem [shape: f32[3,3,128,128], index: 3, kind: input, shape index: {}]
  %s4 = inlined_call_operand.vmem [shape: f32[1,128], index: 4, kind: input, shape index: {}]
  %s5 = inlined_call_operand.vmem [shape: f32[1,128], index: 5, kind: input, shape index: {}]
  %s6 = inlined_call_operand.vmem [shape: f32[2,16,16,128], index: 6, kind: output, shape index: {0}]
  %s7 = inlined_call_operand.vmem [shape: f32[2,128], index: 7, kind: output, shape index: {1}]
  %8 = xla_tuple %s6, %s7
  %s9 = sld [smem:[#allocation0]]
  $region69: #{up_forward.6} parent=0
    _
  %s11 = ssub.s32 1, %s9
  %s12 = scalar_select 0, %s11, %s9
  loop: start=0, step=1, limit=34
  $region2: #{up_forward.6} parent=0 // loop_pre_header
    _
  $region3: #{up_forward.6} parent=0 // loop_header
    %s14 = sphi 0, %s18
    %p15 = scmp.ge.s32.totalorder %s14, 34
    %s21 = sphi 0, %s33
    %s22 = sphi 0, %s29
    %s23 = sphi 0, %s21
    %s24 = sphi 0, %s22
    %s25 = sphi 0, %s23
    %s26 = sphi 0, %s24
    %s38 = sphi 0, %s40
    %s41 = sphi 0, %s38
    %s42 = sphi 0, %s41
    %s58 = sphi 0, %s42
    %s68 = sphi 0, %s70
    %s71 = sphi 0, %s68
    %s72 = sphi 0, %s71
    %s88 = sphi 0, %s72
    %s98 = sphi 0, %s100
    %s101 = sphi 0, %s98
    %s102 = sphi 0, %s101
    %s118 = sphi 0, %s102
    %s122 = sphi 0, %s122
    %s124 = sphi 0, %s122
    %s125 = sphi 0, %s124
    %s139 = sphi 0, %s125
    %s143 = sphi 0, %s143
    %s145 = sphi 0, %s143
    %s146 = sphi 0, %s145
    %s160 = sphi 0, %s146
    %s164 = sphi 0, %s164
    %s166 = sphi 0, %s164
    %s167 = sphi 0, %s166
    %s181 = sphi 0, %s167
    %s189 = sphi 0, %s191
    %s192 = sphi 0, %s189
    %s193 = sphi 0, %s192
    %s209 = sphi 0, %s193
    %s213 = sphi 0, %s213
    %s215 = sphi 0, %s213
    %s216 = sphi 0, %s215
    %s230 = sphi 0, %s216
  $region4: #{up_forward.6} parent=0 // loop_header_branch
    %17 = sbr.rel (%p15) target = $region8
  $region5: #{up_forward.6} parent=0 // loop_body
    %s19 = ssub.s32 %s14, 1
    %s20 = ssub.s32 %s14, 2
    %s27 = sadd.s32 1, %s22
    %p28 = scmp.ge.s32.totalorder %s27, 16
    %s29 = scalar_select %p28, 0, %s27
    %s30 = sadd.s32 1, %s21
    %s31 = scalar_select %p28, %s30, %s21
    %p32 = scmp.ge.s32.totalorder %s31, 2
    %s33 = scalar_select %p32, 0, %s31
    %s34 = ssub.s32 %s21, %s33
    %s35 = ssub.s32 %s22, %s29
    %s36 = sor.u32 %s34, %s35
    %p37 = scmp.eq.s32.totalorder %s36, 0
    %s39 = sadd.s32 %s38, 1
    %s40 = scalar_select %p37, %s38, %s39
    %p43 = pneg %p37
    %p44 = scmp.eq.s32.totalorder %s14, 31
    %p45 = por %p43, %p44
    %p46 = scmp.ne.s32.totalorder %s38, %s41
    %p47 = scmp.eq.s32.totalorder %s14, 0
    %p48 = por %p46, %p47
    %p49 = scmp.ne.s32.totalorder %s38, %s41
    %p50 = scmp.eq.s32.totalorder %s19, 31
    %p51 = por %p49, %p50
    %p52 = scmp.ne.s32.totalorder %s41, %s42
    %p53 = scmp.eq.s32.totalorder %s19, 0
    %p54 = por %p52, %p53
    %p55 = scmp.ne.s32.totalorder %s41, %s42
    %p56 = scmp.eq.s32.totalorder %s20, 31
    %p57 = por %p55, %p56
    %p59 = scmp.ne.s32.totalorder %s42, %s58
    %p60 = scmp.eq.s32.totalorder %s20, 0
    %p61 = por %p59, %p60
    %s62 = sadd.s32 %s22, 1
    %s63 = sadd.s32 %s29, 1
    %s64 = ssub.s32 %s21, %s33
    %s65 = ssub.s32 %s62, %s63
    %s66 = sor.u32 %s64, %s65
    %p67 = scmp.eq.s32.totalorder %s66, 0
    %s69 = sadd.s32 %s68, 1
    %s70 = scalar_select %p67, %s68, %s69
    %p73 = pneg %p67
    %p74 = scmp.eq.s32.totalorder %s14, 31
    %p75 = por %p73, %p74
    %p76 = scmp.ne.s32.totalorder %s68, %s71
    %p77 = scmp.eq.s32.totalorder %s14, 0
    %p78 = por %p76, %p77
    %p79 = scmp.ne.s32.totalorder %s68, %s71
    %p80 = scmp.eq.s32.totalorder %s19, 31
    %p81 = por %p79, %p80
    %p82 = scmp.ne.s32.totalorder %s71, %s72
    %p83 = scmp.eq.s32.totalorder %s19, 0
    %p84 = por %p82, %p83
    %p85 = scmp.ne.s32.totalorder %s71, %s72
    %p86 = scmp.eq.s32.totalorder %s20, 31
    %p87 = por %p85, %p86
    %p89 = scmp.ne.s32.totalorder %s72, %s88
    %p90 = scmp.eq.s32.totalorder %s20, 0
    %p91 = por %p89, %p90
    %s92 = sadd.s32 %s22, 2
    %s93 = sadd.s32 %s29, 2
    %s94 = ssub.s32 %s21, %s33
    %s95 = ssub.s32 %s92, %s93
    %s96 = sor.u32 %s94, %s95
    %p97 = scmp.eq.s32.totalorder %s96, 0
    %s99 = sadd.s32 %s98, 1
    %s100 = scalar_select %p97, %s98, %s99
    %p103 = pneg %p97
    %p104 = scmp.eq.s32.totalorder %s14, 31
    %p105 = por %p103, %p104
    %p106 = scmp.ne.s32.totalorder %s98, %s101
    %p107 = scmp.eq.s32.totalorder %s14, 0
    %p108 = por %p106, %p107
    %p109 = scmp.ne.s32.totalorder %s98, %s101
    %p110 = scmp.eq.s32.totalorder %s19, 31
    %p111 = por %p109, %p110
    %p112 = scmp.ne.s32.totalorder %s101, %s102
    %p113 = scmp.eq.s32.totalorder %s19, 0
    %p114 = por %p112, %p113
    %p115 = scmp.ne.s32.totalorder %s101, %s102
    %p116 = scmp.eq.s32.totalorder %s20, 31
    %p117 = por %p115, %p116
    %p119 = scmp.ne.s32.totalorder %s102, %s118
    %p120 = scmp.eq.s32.totalorder %s20, 0
    %p121 = por %p119, %p120
    %s123 = sadd.s32 %s122, 1
    %p126 = scmp.eq.s32.totalorder %s14, 31
    %p127 = scmp.ne.s32.totalorder %s122, %s124
    %p128 = scmp.eq.s32.totalorder %s14, 0
    %p129 = por %p127, %p128
    %p130 = scmp.ne.s32.totalorder %s122, %s124
    %p131 = scmp.eq.s32.totalorder %s19, 31
    %p132 = por %p130, %p131
    %p133 = scmp.ne.s32.totalorder %s124, %s125
    %p134 = scmp.eq.s32.totalorder %s19, 0
    %p135 = por %p133, %p134
    %p136 = scmp.ne.s32.totalorder %s124, %s125
    %p137 = scmp.eq.s32.totalorder %s20, 31
    %p138 = por %p136, %p137
    %p140 = scmp.ne.s32.totalorder %s125, %s139
    %p141 = scmp.eq.s32.totalorder %s20, 0
    %p142 = por %p140, %p141
    %s144 = sadd.s32 %s143, 1
    %p147 = scmp.eq.s32.totalorder %s14, 31
    %p148 = scmp.ne.s32.totalorder %s143, %s145
    %p149 = scmp.eq.s32.totalorder %s14, 0
    %p150 = por %p148, %p149
    %p151 = scmp.ne.s32.totalorder %s143, %s145
    %p152 = scmp.eq.s32.totalorder %s19, 31
    %p153 = por %p151, %p152
    %p154 = scmp.ne.s32.totalorder %s145, %s146
    %p155 = scmp.eq.s32.totalorder %s19, 0
    %p156 = por %p154, %p155
    %p157 = scmp.ne.s32.totalorder %s145, %s146
    %p158 = scmp.eq.s32.totalorder %s20, 31
    %p159 = por %p157, %p158
    %p161 = scmp.ne.s32.totalorder %s146, %s160
    %p162 = scmp.eq.s32.totalorder %s20, 0
    %p163 = por %p161, %p162
    %s165 = sadd.s32 %s164, 1
    %p168 = scmp.eq.s32.totalorder %s14, 31
    %p169 = scmp.ne.s32.totalorder %s164, %s166
    %p170 = scmp.eq.s32.totalorder %s14, 0
    %p171 = por %p169, %p170
    %p172 = scmp.ne.s32.totalorder %s164, %s166
    %p173 = scmp.eq.s32.totalorder %s19, 31
    %p174 = por %p172, %p173
    %p175 = scmp.ne.s32.totalorder %s166, %s167
    %p176 = scmp.eq.s32.totalorder %s19, 0
    %p177 = por %p175, %p176
    %p178 = scmp.ne.s32.totalorder %s166, %s167
    %p179 = scmp.eq.s32.totalorder %s20, 31
    %p180 = por %p178, %p179
    %p182 = scmp.ne.s32.totalorder %s167, %s181
    %p183 = scmp.eq.s32.totalorder %s20, 0
    %p184 = por %p182, %p183
    %s185 = ssub.s32 %s21, %s33
    %s186 = ssub.s32 %s22, %s29
    %s187 = sor.u32 %s185, %s186
    %p188 = scmp.eq.s32.totalorder %s187, 0
    %s190 = sadd.s32 %s189, 1
    %s191 = scalar_select %p188, %s189, %s190
    %p194 = pneg %p188
    %p195 = scmp.eq.s32.totalorder %s14, 31
    %p196 = por %p194, %p195
    %p197 = scmp.ne.s32.totalorder %s189, %s192
    %p198 = scmp.eq.s32.totalorder %s14, 0
    %p199 = por %p197, %p198
    %p200 = scmp.ne.s32.totalorder %s189, %s192
    %p201 = scmp.eq.s32.totalorder %s19, 31
    %p202 = por %p200, %p201
    %p203 = scmp.ne.s32.totalorder %s192, %s193
    %p204 = scmp.eq.s32.totalorder %s19, 0
    %p205 = por %p203, %p204
    %p206 = scmp.ne.s32.totalorder %s192, %s193
    %p207 = scmp.eq.s32.totalorder %s20, 31
    %p208 = por %p206, %p207
    %p210 = scmp.ne.s32.totalorder %s193, %s209
    %p211 = scmp.eq.s32.totalorder %s20, 0
    %p212 = por %p210, %p211
    %s214 = sadd.s32 %s213, 1
    %p217 = scmp.eq.s32.totalorder %s14, 31
    %p218 = scmp.ne.s32.totalorder %s213, %s215
    %p219 = scmp.eq.s32.totalorder %s14, 0
    %p220 = por %p218, %p219
    %p221 = scmp.ne.s32.totalorder %s213, %s215
    %p222 = scmp.eq.s32.totalorder %s19, 31
    %p223 = por %p221, %p222
    %p224 = scmp.ne.s32.totalorder %s215, %s216
    %p225 = scmp.eq.s32.totalorder %s19, 0
    %p226 = por %p224, %p225
    %p227 = scmp.ne.s32.totalorder %s215, %s216
    %p228 = scmp.eq.s32.totalorder %s20, 31
    %p229 = por %p227, %p228
    %p231 = scmp.ne.s32.totalorder %s216, %s230
    %p232 = scmp.eq.s32.totalorder %s20, 0
    %p233 = por %p231, %p232
    %p234 = scmp.le.s32.totalorder 1, %s14
    %p235 = scmp.lt.s32.totalorder %s14, 33
    %p236 = pnand %p234, %p235
    %p237 = pneg %p236
    // Predicated region
    $region9: #{up_forward.6} parent=5 // pred_check
      _
    $region10: #{up_forward.6} parent=5 // pred_check_branch
      %239 = sbr.rel (%p236) target = $region12
    $region11: #{up_forward.6} parent=5 // pred_region
      %s240 = ssub.s32 %s14, 1
      // Predicated region
      $region13: #{up_forward.6} parent=11 // pred_check
        %p241 = pneg %p135
      $region14: #{up_forward.6} parent=11 // pred_check_branch
        %243 = sbr.rel (%p241) target = $region16
      $region15: #{up_forward.6} parent=11 // pred_region
        _
      $region16: #{up_forward.6} parent=11 // pred_fallthru
        _
      // Predicated region
      $region17: #{up_forward.6} parent=11 // pred_check
        %p244 = pneg %p156
      $region18: #{up_forward.6} parent=11 // pred_check_branch
        %246 = sbr.rel (%p244) target = $region20
      $region19: #{up_forward.6} parent=11 // pred_region
        _
      $region20: #{up_forward.6} parent=11 // pred_fallthru
        _
      // Predicated region
      $region21: #{up_forward.6} parent=11 // pred_check
        %p247 = pneg %p177
      $region22: #{up_forward.6} parent=11 // pred_check_branch
        %249 = sbr.rel (%p247) target = $region24
      $region23: #{up_forward.6} parent=11 // pred_region
        _
      $region24: #{up_forward.6} parent=11 // pred_fallthru
        _
    $region12: #{up_forward.6} parent=5 // pred_fallthru
      _
    %p250 = scmp.lt.s32.totalorder %s14, 32
    // Predicated region
    $region25: #{up_forward.6} parent=5 // pred_check
      %p251 = pneg %p250
    $region26: #{up_forward.6} parent=5 // pred_check_branch
      %253 = sbr.rel (%p251) target = $region28
    $region27: #{up_forward.6} parent=5 // pred_region
      // Predicated region
      $region29: #{up_forward.6} parent=27 // pred_check
        %p254 = pneg %p48
      $region30: #{up_forward.6} parent=27 // pred_check_branch
        %256 = sbr.rel (%p254) target = $region32
      $region31: #{up_forward.6} parent=27 // pred_region
        %p257 = scmp.lt.s32.totalorder %s21, 1
        %s258 = scalar_select %p257, %s21, 1
        %p259 = scmp.lt.s32.totalorder %s22, 17
        %s260 = scalar_select %p259, %s22, 17
        %s261 = smul.addr %s260, 3
        %s262 = smul.addr %s258, 54
        %s263 = sadd.s32 %s261, %s262
        %s264 = smul.addr %s263, 8
        %s265 = scalar_lea.vmem %s0, %s264
      $region32: #{up_forward.6} parent=27 // pred_fallthru
        _
      // Predicated region
      $region33: #{up_forward.6} parent=27 // pred_check
        %p266 = pneg %p78
      $region34: #{up_forward.6} parent=27 // pred_check_branch
        %268 = sbr.rel (%p266) target = $region36
      $region35: #{up_forward.6} parent=27 // pred_region
        %s269 = sadd.s32 %s22, 1
        %p270 = scmp.lt.s32.totalorder %s21, 1
        %s271 = scalar_select %p270, %s21, 1
        %p272 = scmp.lt.s32.totalorder %s269, 17
        %s273 = scalar_select %p272, %s269, 17
        %s274 = smul.addr %s273, 3
        %s275 = smul.addr %s271, 54
        %s276 = sadd.s32 %s274, %s275
        %s277 = smul.addr %s276, 8
        %s278 = scalar_lea.vmem %s1, %s277
        %s279 = sadd.s32 %s22, 1
      $region36: #{up_forward.6} parent=27 // pred_fallthru
        _
      // Predicated region
      $region37: #{up_forward.6} parent=27 // pred_check
        %p280 = pneg %p108
      $region38: #{up_forward.6} parent=27 // pred_check_branch
        %282 = sbr.rel (%p280) target = $region40
      $region39: #{up_forward.6} parent=27 // pred_region
        %s283 = sadd.s32 %s22, 2
        %p284 = scmp.lt.s32.totalorder %s21, 1
        %s285 = scalar_select %p284, %s21, 1
        %p286 = scmp.lt.s32.totalorder %s283, 17
        %s287 = scalar_select %p286, %s283, 17
        %s288 = smul.addr %s287, 3
        %s289 = smul.addr %s285, 54
        %s290 = sadd.s32 %s288, %s289
        %s291 = smul.addr %s290, 8
        %s292 = scalar_lea.vmem %s2, %s291
        %s293 = sadd.s32 %s22, 2
      $region40: #{up_forward.6} parent=27 // pred_fallthru
        _
    $region28: #{up_forward.6} parent=5 // pred_fallthru
      _
    %p294 = scmp.le.s32.totalorder 1, %s14
    %p295 = scmp.lt.s32.totalorder %s14, 33
    %p296 = pnand %p294, %p295
    %p297 = pneg %p296
    // Predicated region
    $region41: #{up_forward.6} parent=5 // pred_check
      _
    $region42: #{up_forward.6} parent=5 // pred_check_branch
      %299 = sbr.rel (%p296) target = $region44
    $region43: #{up_forward.6} parent=5 // pred_region
      %s300 = ssub.s32 %s14, 1
      %p301 = scmp.lt.s32.totalorder %s23, 1
      %s302 = scalar_select %p301, %s23, 1
      %p303 = scmp.lt.s32.totalorder %s24, 17
      %s304 = scalar_select %p303, %s24, 17
      %s305 = smul.addr %s304, 3
      %s306 = smul.addr %s302, 54
      %s307 = sadd.s32 %s305, %s306
      %s308 = smul.addr %s307, 8
      %s309 = scalar_lea.vmem %s0, %s308
      %p310 = pneg %p54
      %p311 = pneg %p51
      %s312 = sadd.s32 %s24, 1
      %p313 = scmp.lt.s32.totalorder %s23, 1
      %s314 = scalar_select %p313, %s23, 1
      %p315 = scmp.lt.s32.totalorder %s312, 17
      %s316 = scalar_select %p315, %s312, 17
      %s317 = smul.addr %s316, 3
      %s318 = smul.addr %s314, 54
      %s319 = sadd.s32 %s317, %s318
      %s320 = smul.addr %s319, 8
      %s321 = scalar_lea.vmem %s1, %s320
      %p322 = pneg %p84
      %p323 = pneg %p81
      %s324 = sadd.s32 %s24, 2
      %p325 = scmp.lt.s32.totalorder %s23, 1
      %s326 = scalar_select %p325, %s23, 1
      %p327 = scmp.lt.s32.totalorder %s324, 17
      %s328 = scalar_select %p327, %s324, 17
      %s329 = smul.addr %s328, 3
      %s330 = smul.addr %s326, 54
      %s331 = sadd.s32 %s329, %s330
      %s332 = smul.addr %s331, 8
      %s333 = scalar_lea.vmem %s2, %s332
      %p334 = pneg %p114
      %p335 = pneg %p111
      %p336 = pneg %p135
      %p337 = pneg %p132
      %p338 = pneg %p156
      %p339 = pneg %p153
      %p340 = pneg %p177
      %p341 = pneg %p174
      %p342 = pneg %p205
      %p343 = pneg %p202
      %p344 = scmp.lt.s32.totalorder %s23, 1
      %s345 = scalar_select %p344, %s23, 1
      %p346 = scmp.lt.s32.totalorder %s24, 15
      %s347 = scalar_select %p346, %s24, 15
      %s348 = smul.addr %s347, 2
      %s349 = smul.addr %s345, 32
      %s350 = sadd.s32 %s348, %s349
      %s351 = smul.addr %s350, 8
      %s352 = scalar_lea.vmem %s6, %s351
      %p353 = pneg %p226
      %p354 = pneg %p223
      %p355 = scmp.lt.s32.totalorder %s23, 1
      %s356 = scalar_select %p355, %s23, 1
      %p357 = scmp.lt.s32.totalorder %s24, 17
      %s358 = scalar_select %p357, %s24, 17
      %s359 = smul.addr %s358, 3
      %s360 = smul.addr %s356, 54
      %s361 = sadd.s32 %s359, %s360
      %s362 = smul.addr %s361, 8
      %s363 = scalar_lea.vmem %s0, %s362
      %s364 = sadd.s32 %s24, 1
      %p365 = scmp.lt.s32.totalorder %s23, 1
      %s366 = scalar_select %p365, %s23, 1
      %p367 = scmp.lt.s32.totalorder %s364, 17
      %s368 = scalar_select %p367, %s364, 17
      %s369 = smul.addr %s368, 3
      %s370 = smul.addr %s366, 54
      %s371 = sadd.s32 %s369, %s370
      %s372 = smul.addr %s371, 8
      %s373 = scalar_lea.vmem %s1, %s372
      %s374 = sadd.s32 %s24, 1
      %s375 = sadd.s32 %s24, 2
      %p376 = scmp.lt.s32.totalorder %s23, 1
      %s377 = scalar_select %p376, %s23, 1
      %p378 = scmp.lt.s32.totalorder %s375, 17
      %s379 = scalar_select %p378, %s375, 17
      %s380 = smul.addr %s379, 3
      %s381 = smul.addr %s377, 54
      %s382 = sadd.s32 %s380, %s381
      %s383 = smul.addr %s382, 8
      %s384 = scalar_lea.vmem %s2, %s383
      %s385 = sadd.s32 %s24, 2
      %p386 = scmp.lt.s32.totalorder %s23, 1
      %s387 = scalar_select %p386, %s23, 1
      %p388 = scmp.lt.s32.totalorder %s24, 15
      %s389 = scalar_select %p388, %s24, 15
      %s390 = smul.addr %s389, 2
      %s391 = smul.addr %s387, 32
      %s392 = sadd.s32 %s390, %s391
      %s393 = smul.addr %s392, 8
      %s394 = scalar_lea.vmem %s6, %s393
      %v395 = vlaneseq
      %v396 = vshrl.u32 %v395, 7
      %v397 = vadd.s32 %v396, 8
      %v398 = vadd.s32 %v396, 16
      %vm399 = vcmp.ge.s32.totalorder %v396, 1
      %vm400 = vcmp.ge.s32.totalorder %v397, 1
      %vm401 = vcmp.ge.s32.totalorder %v398, 1
      %vm402 = vcmp.le.s32.totalorder %v396, 16
      %vm403 = vcmp.le.s32.totalorder %v397, 16
      %vm404 = vcmp.le.s32.totalorder %v398, 16
      %vm405 = vmand %vm399, %vm402
      %vm406 = vmand %vm400, %vm403
      %vm407 = vmand %vm401, %vm404
      %v408 = vld [vmem:[%s363] sm:$0xff]
      %v409 = vld [vmem:[%s363 + $0x8] sm:$0xff]
      %v410 = vld [vmem:[%s363 + $0x10] sm:$0x3]
      %v411 = vld [vmem:[%s4] sm:$0x1]
      %v413 = vlaneseq
      %v414 = vshrl.u32 %v413, 7
      %v415 = vsub.s32 0, %v414
      %v416 = vrot.slane %v411, %v415
      %v418 = vmul.f32 %v408, %v416
      %v419 = vmul.f32 %v409, %v416
      %v420 = vmul.f32 %v410, %v416
      %v421 = vld [vmem:[%s5] sm:$0x1]
      %v423 = vlaneseq
      %v424 = vshrl.u32 %v423, 7
      %v425 = vsub.s32 0, %v424
      %v426 = vrot.slane %v421, %v425
      %v428 = vadd.f32 %v418, %v426
      %v429 = vadd.f32 %v419, %v426
      %v430 = vadd.f32 %v420, %v426
      %v431 = vmax.f32 %v428, 0.0
      %v432 = vmax.f32 %v429, 0.0
      %v433 = vmax.f32 %v430, 0.0
      %p434 = scmp.ge.s32.totalorder %s24, 1
      %p435 = scmp.le.s32.totalorder %s24, 16
      %p436 = pnand %p434, %p435
      %p437 = pneg %p436
      %s438 = scalar_select %p437, 1, 0
      %v439 = vstv %s438
      %vm440 = vcmp.eq.s32.totalorder %v439, 1
      %vm441 = vmand %vm405, %vm440
      %vm442 = vmand %vm406, %vm440
      %vm443 = vmand %vm407, %vm440
      %v444 = vsel %vm441, 1, 0
      %v445 = vsel %vm442, 1, 0
      %v446 = vsel %vm443, 1, 0
      %vm447 = vcmp.eq.s32.totalorder %v444, 1
      %vm448 = vcmp.eq.s32.totalorder %v445, 1
      %vm449 = vcmp.eq.s32.totalorder %v446, 1
      %v450 = vsel %vm447, %v431, 0.0
      %v451 = vsel %vm448, %v432, 0.0
      %v452 = vsel %vm449, %v433, 0.0
      %v453 = vld [vmem:[%s3] sm:$0xff]
      %v454 = vld [vmem:[%s3 + $0x8] sm:$0xff]
      %v455 = vld [vmem:[%s3 + $0x10] sm:$0xff]
      %v456 = vld [vmem:[%s3 + $0x18] sm:$0xff]
      %v457 = vld [vmem:[%s3 + $0x20] sm:$0xff]
      %v458 = vld [vmem:[%s3 + $0x28] sm:$0xff]
      %v459 = vld [vmem:[%s3 + $0x30] sm:$0xff]
      %v460 = vld [vmem:[%s3 + $0x38] sm:$0xff]
      %v461 = vld [vmem:[%s3 + $0x40] sm:$0xff]
      %v462 = vld [vmem:[%s3 + $0x48] sm:$0xff]
      %v463 = vld [vmem:[%s3 + $0x50] sm:$0xff]
      %v464 = vld [vmem:[%s3 + $0x58] sm:$0xff]
      %v465 = vld [vmem:[%s3 + $0x60] sm:$0xff]
      %v466 = vld [vmem:[%s3 + $0x68] sm:$0xff]
      %v467 = vld [vmem:[%s3 + $0x70] sm:$0xff]
      %v468 = vld [vmem:[%s3 + $0x78] sm:$0xff]
      %s469 = scalar_lea.vmem %s3, 128
      %v470 = vld [vmem:[%s469] sm:$0xff]
      %v471 = vld [vmem:[%s469 + $0x8] sm:$0xff]
      %v472 = vld [vmem:[%s469 + $0x10] sm:$0xff]
      %v473 = vld [vmem:[%s469 + $0x18] sm:$0xff]
      %v474 = vld [vmem:[%s469 + $0x20] sm:$0xff]
      %v475 = vld [vmem:[%s469 + $0x28] sm:$0xff]
      %v476 = vld [vmem:[%s469 + $0x30] sm:$0xff]
      %v477 = vld [vmem:[%s469 + $0x38] sm:$0xff]
      %v478 = vld [vmem:[%s469 + $0x40] sm:$0xff]
      %v479 = vld [vmem:[%s469 + $0x48] sm:$0xff]
      %v480 = vld [vmem:[%s469 + $0x50] sm:$0xff]
      %v481 = vld [vmem:[%s469 + $0x58] sm:$0xff]
      %v482 = vld [vmem:[%s469 + $0x60] sm:$0xff]
      %v483 = vld [vmem:[%s469 + $0x68] sm:$0xff]
      %v484 = vld [vmem:[%s469 + $0x70] sm:$0xff]
      %v485 = vld [vmem:[%s469 + $0x78] sm:$0xff]
      %vm489 = vcmask 1046528
      %v490 = vrot.slane %v450, 1
      %v491 = vrot.slane %v451, 1
      %v492 = vsel %vm489, %v490, %v491
      %v493 = vrot.slane %v452, 1
      %v494 = vsel %vm489, %v491, %v493
      %497 = vmatprep.subr.mxu0 0.0
      %498 = vmatpush1.msra.mxu0 %v470
      %499 = vmatprep.subr.mxu0 0.0
      %500 = vmatpush1.msra.mxu0 %v471
      %501 = vmatprep.subr.mxu0 0.0
      %502 = vmatpush1.msra.mxu0 %v472
      %503 = vmatprep.subr.mxu0 0.0
      %504 = vmatpush1.msra.mxu0 %v473
      %505 = vmatprep.subr.mxu0 0.0
      %506 = vmatpush1.msra.mxu0 %v474
      %507 = vmatprep.subr.mxu0 0.0
      %508 = vmatpush1.msra.mxu0 %v475
      %509 = vmatprep.subr.mxu0 0.0
      %510 = vmatpush1.msra.mxu0 %v476
      %511 = vmatprep.subr.mxu0 0.0
      %512 = vmatpush1.msra.mxu0 %v477
      %513 = vmatprep.subr.mxu0 0.0
      %514 = vmatpush1.msra.mxu0 %v478
      %515 = vmatprep.subr.mxu0 0.0
      %516 = vmatpush1.msra.mxu0 %v479
      %517 = vmatprep.subr.mxu0 0.0
      %518 = vmatpush1.msra.mxu0 %v480
      %519 = vmatprep.subr.mxu0 0.0
      %520 = vmatpush1.msra.mxu0 %v481
      %521 = vmatprep.subr.mxu0 0.0
      %522 = vmatpush1.msra.mxu0 %v482
      %523 = vmatprep.subr.mxu0 0.0
      %524 = vmatpush1.msra.mxu0 %v483
      %525 = vmatprep.subr.mxu0 0.0
      %526 = vmatpush1.msra.mxu0 %v484
      %527 = vmatprep.subr.mxu0 0.0
      %528 = vmatpush1.msra.mxu0 %v485
      %529 = vmatprep.subr.mxu0 0.0
      %530 = vmatpush1.msra.mxu0 0.0
      %531 = vmatprep.subr.mxu0 0.0
      %532 = vmatpush1.msra.mxu0 0.0
      %533 = vmatprep.subr.mxu0 0.0
      %534 = vmatpush1.msra.mxu0 0.0
      %535 = vmatprep.subr.mxu0 0.0
      %536 = vmatpush1.msra.mxu0 0.0
      %537 = vmatprep.subr.mxu0 0.0
      %538 = vmatpush1.msra.mxu0 0.0
      %539 = vmatprep.subr.mxu0 0.0
      %540 = vmatpush1.msra.mxu0 0.0
      %541 = vmatprep.subr.mxu0 0.0
      %542 = vmatpush1.msra.mxu0 0.0
      %543 = vmatprep.subr.mxu0 0.0
      %544 = vmatpush1.msra.mxu0 0.0
      %545 = vmatprep.subr.mxu0 0.0
      %546 = vmatpush1.msra.mxu0 0.0
      %547 = vmatprep.subr.mxu0 0.0
      %548 = vmatpush1.msra.mxu0 0.0
      %549 = vmatprep.subr.mxu0 0.0
      %550 = vmatpush1.msra.mxu0 0.0
      %551 = vmatprep.subr.mxu0 0.0
      %552 = vmatpush1.msra.mxu0 0.0
      %553 = vmatprep.subr.mxu0 0.0
      %554 = vmatpush1.msra.mxu0 0.0
      %555 = vmatprep.subr.mxu0 0.0
      %556 = vmatpush1.msra.mxu0 0.0
      %557 = vmatprep.subr.mxu0 0.0
      %558 = vmatpush1.msra.mxu0 0.0
      %559 = vmatprep.subr.mxu0 0.0
      %560 = vmatpush1.msra.mxu0 0.0
      %561 = vmatprep.mubr.f32.mxu0 0.0
      %562 = vmatmul.mubr.f32.gmra.mrb[0].mxu0 %v492
      %v563 = vpop.f32.mrb[0].mxu0
      %v564 = vadd.f32 0.0, %v563
      %v565 = vpop.f32.mrb[0].mxu0
      %566 = vmatprep.mubr.f32.mxu0 0.0
      %567 = vmatmul.mubr.f32.gmra.mrb[0].mxu0 %v494
      %v568 = vpop.f32.mrb[0].mxu0
      %v569 = vadd.f32 0.0, %v568
      %v570 = vpop.f32.mrb[0].mxu0
      %571 = vdwg.mxu0
      %572 = vmatprep.subr.mxu0 0.0
      %573 = vmatpush1.msra.mxu0 %v453
      %574 = vmatprep.subr.mxu0 0.0
      %575 = vmatpush1.msra.mxu0 %v454
      %576 = vmatprep.subr.mxu0 0.0
      %577 = vmatpush1.msra.mxu0 %v455
      %578 = vmatprep.subr.mxu0 0.0
      %579 = vmatpush1.msra.mxu0 %v456
      %580 = vmatprep.subr.mxu0 0.0
      %581 = vmatpush1.msra.mxu0 %v457
      %582 = vmatprep.subr.mxu0 0.0
      %583 = vmatpush1.msra.mxu0 %v458
      %584 = vmatprep.subr.mxu0 0.0
      %585 = vmatpush1.msra.mxu0 %v459
      %586 = vmatprep.subr.mxu0 0.0
      %587 = vmatpush1.msra.mxu0 %v460
      %588 = vmatprep.subr.mxu0 0.0
      %589 = vmatpush1.msra.mxu0 %v461
      %590 = vmatprep.subr.mxu0 0.0
      %591 = vmatpush1.msra.mxu0 %v462
      %592 = vmatprep.subr.mxu0 0.0
      %593 = vmatpush1.msra.mxu0 %v463
      %594 = vmatprep.subr.mxu0 0.0
      %595 = vmatpush1.msra.mxu0 %v464
      %596 = vmatprep.subr.mxu0 0.0
      %597 = vmatpush1.msra.mxu0 %v465
      %598 = vmatprep.subr.mxu0 0.0
      %599 = vmatpush1.msra.mxu0 %v466
      %600 = vmatprep.subr.mxu0 0.0
      %601 = vmatpush1.msra.mxu0 %v467
      %602 = vmatprep.subr.mxu0 0.0
      %603 = vmatpush1.msra.mxu0 %v468
      %604 = vmatprep.subr.mxu0 0.0
      %605 = vmatpush1.msra.mxu0 0.0
      %606 = vmatprep.subr.mxu0 0.0
      %607 = vmatpush1.msra.mxu0 0.0
      %608 = vmatprep.subr.mxu0 0.0
      %609 = vmatpush1.msra.mxu0 0.0
      %610 = vmatprep.subr.mxu0 0.0
      %611 = vmatpush1.msra.mxu0 0.0
      %612 = vmatprep.subr.mxu0 0.0
      %613 = vmatpush1.msra.mxu0 0.0
      %614 = vmatprep.subr.mxu0 0.0
      %615 = vmatpush1.msra.mxu0 0.0
      %616 = vmatprep.subr.mxu0 0.0
      %617 = vmatpush1.msra.mxu0 0.0
      %618 = vmatprep.subr.mxu0 0.0
      %619 = vmatpush1.msra.mxu0 0.0
      %620 = vmatprep.subr.mxu0 0.0
      %621 = vmatpush1.msra.mxu0 0.0
      %622 = vmatprep.subr.mxu0 0.0
      %623 = vmatpush1.msra.mxu0 0.0
      %624 = vmatprep.subr.mxu0 0.0
      %625 = vmatpush1.msra.mxu0 0.0
      %626 = vmatprep.subr.mxu0 0.0
      %627 = vmatpush1.msra.mxu0 0.0
      %628 = vmatprep.subr.mxu0 0.0
      %629 = vmatpush1.msra.mxu0 0.0
      %630 = vmatprep.subr.mxu0 0.0
      %631 = vmatpush1.msra.mxu0 0.0
      %632 = vmatprep.subr.mxu0 0.0
      %633 = vmatpush1.msra.mxu0 0.0
      %634 = vmatprep.subr.mxu0 0.0
      %635 = vmatpush1.msra.mxu0 0.0
      %636 = vmatprep.mubr.f32.mxu0 0.0
      %637 = vmatmul.mubr.f32.gmra.mrb[0].mxu0 %v450
      %v638 = vpop.f32.mrb[0].mxu0
      %v639 = vadd.f32 %v564, %v638
      %v640 = vpop.f32.mrb[0].mxu0
      %641 = vmatprep.mubr.f32.mxu0 0.0
      %642 = vmatmul.mubr.f32.gmra.mrb[0].mxu0 %v451
      %v643 = vpop.f32.mrb[0].mxu0
      %v644 = vadd.f32 %v569, %v643
      %v645 = vpop.f32.mrb[0].mxu0
      %646 = vdwg.mxu0
      %s647 = scalar_lea.vmem %s3, 256
      %v648 = vld [vmem:[%s647] sm:$0xff]
      %v649 = vld [vmem:[%s647 + $0x8] sm:$0xff]
      %v650 = vld [vmem:[%s647 + $0x10] sm:$0xff]
      %v651 = vld [vmem:[%s647 + $0x18] sm:$0xff]
      %v652 = vld [vmem:[%s647 + $0x20] sm:$0xff]
      %v653 = vld [vmem:[%s647 + $0x28] sm:$0xff]
      %v654 = vld [vmem:[%s647 + $0x30] sm:$0xff]
      %v655 = vld [vmem:[%s647 + $0x38] sm:$0xff]
      %v656 = vld [vmem:[%s647 + $0x40] sm:$0xff]
      %v657 = vld [vmem:[%s647 + $0x48] sm:$0xff]
      %v658 = vld [vmem:[%s647 + $0x50] sm:$0xff]
      %v659 = vld [vmem:[%s647 + $0x58] sm:$0xff]
      %v660 = vld [vmem:[%s647 + $0x60] sm:$0xff]
      %v661 = vld [vmem:[%s647 + $0x68] sm:$0xff]
      %v662 = vld [vmem:[%s647 + $0x70] sm:$0xff]
      %v663 = vld [vmem:[%s647 + $0x78] sm:$0xff]
      %vm664 = vcmask 1045504
      %v665 = vrot.slane %v450, 2
      %v666 = vrot.slane %v451, 2
      %v667 = vsel %vm664, %v665, %v666
      %v668 = vrot.slane %v452, 2
      %v669 = vsel %vm664, %v666, %v668
      %672 = vmatprep.subr.mxu0 0.0
      %673 = vmatpush1.msra.mxu0 %v648
      %674 = vmatprep.subr.mxu0 0.0
      %675 = vmatpush1.msra.mxu0 %v649
      %676 = vmatprep.subr.mxu0 0.0
      %677 = vmatpush1.msra.mxu0 %v650
      %678 = vmatprep.subr.mxu0 0.0
      %679 = vmatpush1.msra.mxu0 %v651
      %680 = vmatprep.subr.mxu0 0.0
      %681 = vmatpush1.msra.mxu0 %v652
      %682 = vmatprep.subr.mxu0 0.0
      %683 = vmatpush1.msra.mxu0 %v653
      %684 = vmatprep.subr.mxu0 0.0
      %685 = vmatpush1.msra.mxu0 %v654
      %686 = vmatprep.subr.mxu0 0.0
      %687 = vmatpush1.msra.mxu0 %v655
      %688 = vmatprep.subr.mxu0 0.0
      %689 = vmatpush1.msra.mxu0 %v656
      %690 = vmatprep.subr.mxu0 0.0
      %691 = vmatpush1.msra.mxu0 %v657
      %692 = vmatprep.subr.mxu0 0.0
      %693 = vmatpush1.msra.mxu0 %v658
      %694 = vmatprep.subr.mxu0 0.0
      %695 = vmatpush1.msra.mxu0 %v659
      %696 = vmatprep.subr.mxu0 0.0
      %697 = vmatpush1.msra.mxu0 %v660
      %698 = vmatprep.subr.mxu0 0.0
      %699 = vmatpush1.msra.mxu0 %v661
      %700 = vmatprep.subr.mxu0 0.0
      %701 = vmatpush1.msra.mxu0 %v662
      %702 = vmatprep.subr.mxu0 0.0
      %703 = vmatpush1.msra.mxu0 %v663
      %704 = vmatprep.subr.mxu0 0.0
      %705 = vmatpush1.msra.mxu0 0.0
      %706 = vmatprep.subr.mxu0 0.0
      %707 = vmatpush1.msra.mxu0 0.0
      %708 = vmatprep.subr.mxu0 0.0
      %709 = vmatpush1.msra.mxu0 0.0
      %710 = vmatprep.subr.mxu0 0.0
      %711 = vmatpush1.msra.mxu0 0.0
      %712 = vmatprep.subr.mxu0 0.0
      %713 = vmatpush1.msra.mxu0 0.0
      %714 = vmatprep.subr.mxu0 0.0
      %715 = vmatpush1.msra.mxu0 0.0
      %716 = vmatprep.subr.mxu0 0.0
      %717 = vmatpush1.msra.mxu0 0.0
      %718 = vmatprep.subr.mxu0 0.0
      %719 = vmatpush1.msra.mxu0 0.0
      %720 = vmatprep.subr.mxu0 0.0
      %721 = vmatpush1.msra.mxu0 0.0
      %722 = vmatprep.subr.mxu0 0.0
      %723 = vmatpush1.msra.mxu0 0.0
      %724 = vmatprep.subr.mxu0 0.0
      %725 = vmatpush1.msra.mxu0 0.0
      %726 = vmatprep.subr.mxu0 0.0
      %727 = vmatpush1.msra.mxu0 0.0
      %728 = vmatprep.subr.mxu0 0.0
      %729 = vmatpush1.msra.mxu0 0.0
      %730 = vmatprep.subr.mxu0 0.0
      %731 = vmatpush1.msra.mxu0 0.0
      %732 = vmatprep.subr.mxu0 0.0
      %733 = vmatpush1.msra.mxu0 0.0
      %734 = vmatprep.subr.mxu0 0.0
      %735 = vmatpush1.msra.mxu0 0.0
      %736 = vmatprep.mubr.f32.mxu0 0.0
      %737 = vmatmul.mubr.f32.gmra.mrb[0].mxu0 %v667
      %v738 = vpop.f32.mrb[0].mxu0
      %v739 = vadd.f32 0.0, %v738
      %v740 = vpop.f32.mrb[0].mxu0
      %741 = vmatprep.mubr.f32.mxu0 0.0
      %742 = vmatmul.mubr.f32.gmra.mrb[0].mxu0 %v669
      %v743 = vpop.f32.mrb[0].mxu0
      %v744 = vadd.f32 0.0, %v743
      %v745 = vpop.f32.mrb[0].mxu0
      %746 = vdwg.mxu0
      %v747 = vadd.f32 %v639, %v739
      %v748 = vadd.f32 %v644, %v744
      %v749 = vld [vmem:[%s373] sm:$0xff]
      %v750 = vld [vmem:[%s373 + $0x8] sm:$0xff]
      %v751 = vld [vmem:[%s373 + $0x10] sm:$0x3]
      %v752 = vmul.f32 %v749, %v416
      %v753 = vmul.f32 %v750, %v416
      %v754 = vmul.f32 %v751, %v416
      %v755 = vadd.f32 %v752, %v426
      %v756 = vadd.f32 %v753, %v426
      %v757 = vadd.f32 %v754, %v426
      %v758 = vmax.f32 %v755, 0.0
      %v759 = vmax.f32 %v756, 0.0
      %v760 = vmax.f32 %v757, 0.0
      %s761 = sadd.s32 %s24, 1
      %p762 = scmp.ge.s32.totalorder %s761, 1
      %p763 = scmp.le.s32.totalorder %s761, 16
      %p764 = pnand %p762, %p763
      %p765 = pneg %p764
      %s766 = scalar_select %p765, 1, 0
      %v767 = vstv %s766
      %vm768 = vcmp.eq.s32.totalorder %v767, 1
      %vm769 = vmand %vm405, %vm768
      %vm770 = vmand %vm406, %vm768
      %vm771 = vmand %vm407, %vm768
      %v772 = vsel %vm769, 1, 0
      %v773 = vsel %vm770, 1, 0
      %v774 = vsel %vm771, 1, 0
      %vm775 = vcmp.eq.s32.totalorder %v772, 1
      %vm776 = vcmp.eq.s32.totalorder %v773, 1
      %vm777 = vcmp.eq.s32.totalorder %v774, 1
      %v778 = vsel %vm775, %v758, 0.0
      %v779 = vsel %vm776, %v759, 0.0
      %v780 = vsel %vm777, %v760, 0.0
      %s781 = scalar_lea.vmem %s3, 384
      %v782 = vld [vmem:[%s781] sm:$0xff]
      %v783 = vld [vmem:[%s781 + $0x8] sm:$0xff]
      %v784 = vld [vmem:[%s781 + $0x10] sm:$0xff]
      %v785 = vld [vmem:[%s781 + $0x18] sm:$0xff]
      %v786 = vld [vmem:[%s781 + $0x20] sm:$0xff]
      %v787 = vld [vmem:[%s781 + $0x28] sm:$0xff]
      %v788 = vld [vmem:[%s781 + $0x30] sm:$0xff]
      %v789 = vld [vmem:[%s781 + $0x38] sm:$0xff]
      %v790 = vld [vmem:[%s781 + $0x40] sm:$0xff]
      %v791 = vld [vmem:[%s781 + $0x48] sm:$0xff]
      %v792 = vld [vmem:[%s781 + $0x50] sm:$0xff]
      %v793 = vld [vmem:[%s781 + $0x58] sm:$0xff]
      %v794 = vld [vmem:[%s781 + $0x60] sm:$0xff]
      %v795 = vld [vmem:[%s781 + $0x68] sm:$0xff]
      %v796 = vld [vmem:[%s781 + $0x70] sm:$0xff]
      %v797 = vld [vmem:[%s781 + $0x78] sm:$0xff]
      %798 = vmatprep.subr.mxu0 0.0
      %799 = vmatpush1.msra.mxu0 %v782
      %800 = vmatprep.subr.mxu0 0.0
      %801 = vmatpush1.msra.mxu0 %v783
      %802 = vmatprep.subr.mxu0 0.0
      %803 = vmatpush1.msra.mxu0 %v784
      %804 = vmatprep.subr.mxu0 0.0
      %805 = vmatpush1.msra.mxu0 %v785
      %806 = vmatprep.subr.mxu0 0.0
      %807 = vmatpush1.msra.mxu0 %v786
      %808 = vmatprep.subr.mxu0 0.0
      %809 = vmatpush1.msra.mxu0 %v787
      %810 = vmatprep.subr.mxu0 0.0
      %811 = vmatpush1.msra.mxu0 %v788
      %812 = vmatprep.subr.mxu0 0.0
      %813 = vmatpush1.msra.mxu0 %v789
      %814 = vmatprep.subr.mxu0 0.0
      %815 = vmatpush1.msra.mxu0 %v790
      %816 = vmatprep.subr.mxu0 0.0
      %817 = vmatpush1.msra.mxu0 %v791
      %818 = vmatprep.subr.mxu0 0.0
      %819 = vmatpush1.msra.mxu0 %v792
      %820 = vmatprep.subr.mxu0 0.0
      %821 = vmatpush1.msra.mxu0 %v793
      %822 = vmatprep.subr.mxu0 0.0
      %823 = vmatpush1.msra.mxu0 %v794
      %824 = vmatprep.subr.mxu0 0.0
      %825 = vmatpush1.msra.mxu0 %v795
      %826 = vmatprep.subr.mxu0 0.0
      %827 = vmatpush1.msra.mxu0 %v796
      %828 = vmatprep.subr.mxu0 0.0
      %829 = vmatpush1.msra.mxu0 %v797
      %830 = vmatprep.subr.mxu0 0.0
      %831 = vmatpush1.msra.mxu0 0.0
      %832 = vmatprep.subr.mxu0 0.0
      %833 = vmatpush1.msra.mxu0 0.0
      %834 = vmatprep.subr.mxu0 0.0
      %835 = vmatpush1.msra.mxu0 0.0
      %836 = vmatprep.subr.mxu0 0.0
      %837 = vmatpush1.msra.mxu0 0.0
      %838 = vmatprep.subr.mxu0 0.0
      %839 = vmatpush1.msra.mxu0 0.0
      %840 = vmatprep.subr.mxu0 0.0
      %841 = vmatpush1.msra.mxu0 0.0
      %842 = vmatprep.subr.mxu0 0.0
      %843 = vmatpush1.msra.mxu0 0.0
      %844 = vmatprep.subr.mxu0 0.0
      %845 = vmatpush1.msra.mxu0 0.0
      %846 = vmatprep.subr.mxu0 0.0
      %847 = vmatpush1.msra.mxu0 0.0
      %848 = vmatprep.subr.mxu0 0.0
      %849 = vmatpush1.msra.mxu0 0.0
      %850 = vmatprep.subr.mxu0 0.0
      %851 = vmatpush1.msra.mxu0 0.0
      %852 = vmatprep.subr.mxu0 0.0
      %853 = vmatpush1.msra.mxu0 0.0
      %854 = vmatprep.subr.mxu0 0.0
      %855 = vmatpush1.msra.mxu0 0.0
      %856 = vmatprep.subr.mxu0 0.0
      %857 = vmatpush1.msra.mxu0 0.0
      %858 = vmatprep.subr.mxu0 0.0
      %859 = vmatpush1.msra.mxu0 0.0
      %860 = vmatprep.subr.mxu0 0.0
      %861 = vmatpush1.msra.mxu0 0.0
      %862 = vmatprep.mubr.f32.mxu0 0.0
      %863 = vmatmul.mubr.f32.gmra.mrb[0].mxu0 %v778
      %v864 = vpop.f32.mrb[0].mxu0
      %v865 = vadd.f32 0.0, %v864
      %v866 = vpop.f32.mrb[0].mxu0
      %867 = vmatprep.mubr.f32.mxu0 0.0
      %868 = vmatmul.mubr.f32.gmra.mrb[0].mxu0 %v779
      %v869 = vpop.f32.mrb[0].mxu0
      %v870 = vadd.f32 0.0, %v869
      %v871 = vpop.f32.mrb[0].mxu0
      %872 = vdwg.mxu0
      %v873 = vadd.f32 %v747, %v865
      %v874 = vadd.f32 %v748, %v870
      %s875 = scalar_lea.vmem %s3, 512
      %v876 = vld [vmem:[%s875] sm:$0xff]
      %v877 = vld [vmem:[%s875 + $0x8] sm:$0xff]
      %v878 = vld [vmem:[%s875 + $0x10] sm:$0xff]
      %v879 = vld [vmem:[%s875 + $0x18] sm:$0xff]
      %v880 = vld [vmem:[%s875 + $0x20] sm:$0xff]
      %v881 = vld [vmem:[%s875 + $0x28] sm:$0xff]
      %v882 = vld [vmem:[%s875 + $0x30] sm:$0xff]
      %v883 = vld [vmem:[%s875 + $0x38] sm:$0xff]
      %v884 = vld [vmem:[%s875 + $0x40] sm:$0xff]
      %v885 = vld [vmem:[%s875 + $0x48] sm:$0xff]
      %v886 = vld [vmem:[%s875 + $0x50] sm:$0xff]
      %v887 = vld [vmem:[%s875 + $0x58] sm:$0xff]
      %v888 = vld [vmem:[%s875 + $0x60] sm:$0xff]
      %v889 = vld [vmem:[%s875 + $0x68] sm:$0xff]
      %v890 = vld [vmem:[%s875 + $0x70] sm:$0xff]
      %v891 = vld [vmem:[%s875 + $0x78] sm:$0xff]
      %v895 = vrot.slane %v778, 1
      %v896 = vrot.slane %v779, 1
      %v897 = vsel %vm489, %v895, %v896
      %v898 = vrot.slane %v780, 1
      %v899 = vsel %vm489, %v896, %v898
      %902 = vmatprep.subr.mxu0 0.0
      %903 = vmatpush1.msra.mxu0 %v876
      %904 = vmatprep.subr.mxu0 0.0
      %905 = vmatpush1.msra.mxu0 %v877
      %906 = vmatprep.subr.mxu0 0.0
      %907 = vmatpush1.msra.mxu0 %v878
      %908 = vmatprep.subr.mxu0 0.0
      %909 = vmatpush1.msra.mxu0 %v879
      %910 = vmatprep.subr.mxu0 0.0
      %911 = vmatpush1.msra.mxu0 %v880
      %912 = vmatprep.subr.mxu0 0.0
      %913 = vmatpush1.msra.mxu0 %v881
      %914 = vmatprep.subr.mxu0 0.0
      %915 = vmatpush1.msra.mxu0 %v882
      %916 = vmatprep.subr.mxu0 0.0
      %917 = vmatpush1.msra.mxu0 %v883
      %918 = vmatprep.subr.mxu0 0.0
      %919 = vmatpush1.msra.mxu0 %v884
      %920 = vmatprep.subr.mxu0 0.0
      %921 = vmatpush1.msra.mxu0 %v885
      %922 = vmatprep.subr.mxu0 0.0
      %923 = vmatpush1.msra.mxu0 %v886
      %924 = vmatprep.subr.mxu0 0.0
      %925 = vmatpush1.msra.mxu0 %v887
      %926 = vmatprep.subr.mxu0 0.0
      %927 = vmatpush1.msra.mxu0 %v888
      %928 = vmatprep.subr.mxu0 0.0
      %929 = vmatpush1.msra.mxu0 %v889
      %930 = vmatprep.subr.mxu0 0.0
      %931 = vmatpush1.msra.mxu0 %v890
      %932 = vmatprep.subr.mxu0 0.0
      %933 = vmatpush1.msra.mxu0 %v891
      %934 = vmatprep.subr.mxu0 0.0
      %935 = vmatpush1.msra.mxu0 0.0
      %936 = vmatprep.subr.mxu0 0.0
      %937 = vmatpush1.msra.mxu0 0.0
      %938 = vmatprep.subr.mxu0 0.0
      %939 = vmatpush1.msra.mxu0 0.0
      %940 = vmatprep.subr.mxu0 0.0
      %941 = vmatpush1.msra.mxu0 0.0
      %942 = vmatprep.subr.mxu0 0.0
      %943 = vmatpush1.msra.mxu0 0.0
      %944 = vmatprep.subr.mxu0 0.0
      %945 = vmatpush1.msra.mxu0 0.0
      %946 = vmatprep.subr.mxu0 0.0
      %947 = vmatpush1.msra.mxu0 0.0
      %948 = vmatprep.subr.mxu0 0.0
      %949 = vmatpush1.msra.mxu0 0.0
      %950 = vmatprep.subr.mxu0 0.0
      %951 = vmatpush1.msra.mxu0 0.0
      %952 = vmatprep.subr.mxu0 0.0
      %953 = vmatpush1.msra.mxu0 0.0
      %954 = vmatprep.subr.mxu0 0.0
      %955 = vmatpush1.msra.mxu0 0.0
      %956 = vmatprep.subr.mxu0 0.0
      %957 = vmatpush1.msra.mxu0 0.0
      %958 = vmatprep.subr.mxu0 0.0
      %959 = vmatpush1.msra.mxu0 0.0
      %960 = vmatprep.subr.mxu0 0.0
      %961 = vmatpush1.msra.mxu0 0.0
      %962 = vmatprep.subr.mxu0 0.0
      %963 = vmatpush1.msra.mxu0 0.0
      %964 = vmatprep.subr.mxu0 0.0
      %965 = vmatpush1.msra.mxu0 0.0
      %966 = vmatprep.mubr.f32.mxu0 0.0
      %967 = vmatmul.mubr.f32.gmra.mrb[0].mxu0 %v897
      %v968 = vpop.f32.mrb[0].mxu0
      %v969 = vadd.f32 0.0, %v968
      %v970 = vpop.f32.mrb[0].mxu0
      %971 = vmatprep.mubr.f32.mxu0 0.0
      %972 = vmatmul.mubr.f32.gmra.mrb[0].mxu0 %v899
      %v973 = vpop.f32.mrb[0].mxu0
      %v974 = vadd.f32 0.0, %v973
      %v975 = vpop.f32.mrb[0].mxu0
      %976 = vdwg.mxu0
      %v977 = vadd.f32 %v873, %v969
      %v978 = vadd.f32 %v874, %v974
      %s979 = scalar_lea.vmem %s3, 640
      %v980 = vld [vmem:[%s979] sm:$0xff]
      %v981 = vld [vmem:[%s979 + $0x8] sm:$0xff]
      %v982 = vld [vmem:[%s979 + $0x10] sm:$0xff]
      %v983 = vld [vmem:[%s979 + $0x18] sm:$0xff]
      %v984 = vld [vmem:[%s979 + $0x20] sm:$0xff]
      %v985 = vld [vmem:[%s979 + $0x28] sm:$0xff]
      %v986 = vld [vmem:[%s979 + $0x30] sm:$0xff]
      %v987 = vld [vmem:[%s979 + $0x38] sm:$0xff]
      %v988 = vld [vmem:[%s979 + $0x40] sm:$0xff]
      %v989 = vld [vmem:[%s979 + $0x48] sm:$0xff]
      %v990 = vld [vmem:[%s979 + $0x50] sm:$0xff]
      %v991 = vld [vmem:[%s979 + $0x58] sm:$0xff]
      %v992 = vld [vmem:[%s979 + $0x60] sm:$0xff]
      %v993 = vld [vmem:[%s979 + $0x68] sm:$0xff]
      %v994 = vld [vmem:[%s979 + $0x70] sm:$0xff]
      %v995 = vld [vmem:[%s979 + $0x78] sm:$0xff]
      %v996 = vrot.slane %v778, 2
      %v997 = vrot.slane %v779, 2
      %v998 = vsel %vm664, %v996, %v997
      %v999 = vrot.slane %v780, 2
      %v1000 = vsel %vm664, %v997, %v999
      %1003 = vmatprep.subr.mxu0 0.0
      %1004 = vmatpush1.msra.mxu0 %v980
      %1005 = vmatprep.subr.mxu0 0.0
      %1006 = vmatpush1.msra.mxu0 %v981
      %1007 = vmatprep.subr.mxu0 0.0
      %1008 = vmatpush1.msra.mxu0 %v982
      %1009 = vmatprep.subr.mxu0 0.0
      %1010 = vmatpush1.msra.mxu0 %v983
      %1011 = vmatprep.subr.mxu0 0.0
      %1012 = vmatpush1.msra.mxu0 %v984
      %1013 = vmatprep.subr.mxu0 0.0
      %1014 = vmatpush1.msra.mxu0 %v985
      %1015 = vmatprep.subr.mxu0 0.0
      %1016 = vmatpush1.msra.mxu0 %v986
      %1017 = vmatprep.subr.mxu0 0.0
      %1018 = vmatpush1.msra.mxu0 %v987
      %1019 = vmatprep.subr.mxu0 0.0
      %1020 = vmatpush1.msra.mxu0 %v988
      %1021 = vmatprep.subr.mxu0 0.0
      %1022 = vmatpush1.msra.mxu0 %v989
      %1023 = vmatprep.subr.mxu0 0.0
      %1024 = vmatpush1.msra.mxu0 %v990
      %1025 = vmatprep.subr.mxu0 0.0
      %1026 = vmatpush1.msra.mxu0 %v991
      %1027 = vmatprep.subr.mxu0 0.0
      %1028 = vmatpush1.msra.mxu0 %v992
      %1029 = vmatprep.subr.mxu0 0.0
      %1030 = vmatpush1.msra.mxu0 %v993
      %1031 = vmatprep.subr.mxu0 0.0
      %1032 = vmatpush1.msra.mxu0 %v994
      %1033 = vmatprep.subr.mxu0 0.0
      %1034 = vmatpush1.msra.mxu0 %v995
      %1035 = vmatprep.subr.mxu0 0.0
      %1036 = vmatpush1.msra.mxu0 0.0
      %1037 = vmatprep.subr.mxu0 0.0
      %1038 = vmatpush1.msra.mxu0 0.0
      %1039 = vmatprep.subr.mxu0 0.0
      %1040 = vmatpush1.msra.mxu0 0.0
      %1041 = vmatprep.subr.mxu0 0.0
      %1042 = vmatpush1.msra.mxu0 0.0
      %1043 = vmatprep.subr.mxu0 0.0
      %1044 = vmatpush1.msra.mxu0 0.0
      %1045 = vmatprep.subr.mxu0 0.0
      %1046 = vmatpush1.msra.mxu0 0.0
      %1047 = vmatprep.subr.mxu0 0.0
      %1048 = vmatpush1.msra.mxu0 0.0
      %1049 = vmatprep.subr.mxu0 0.0
      %1050 = vmatpush1.msra.mxu0 0.0
      %1051 = vmatprep.subr.mxu0 0.0
      %1052 = vmatpush1.msra.mxu0 0.0
      %1053 = vmatprep.subr.mxu0 0.0
      %1054 = vmatpush1.msra.mxu0 0.0
      %1055 = vmatprep.subr.mxu0 0.0
      %1056 = vmatpush1.msra.mxu0 0.0
      %1057 = vmatprep.subr.mxu0 0.0
      %1058 = vmatpush1.msra.mxu0 0.0
      %1059 = vmatprep.subr.mxu0 0.0
      %1060 = vmatpush1.msra.mxu0 0.0
      %1061 = vmatprep.subr.mxu0 0.0
      %1062 = vmatpush1.msra.mxu0 0.0
      %1063 = vmatprep.subr.mxu0 0.0
      %1064 = vmatpush1.msra.mxu0 0.0
      %1065 = vmatprep.subr.mxu0 0.0
      %1066 = vmatpush1.msra.mxu0 0.0
      %1067 = vmatprep.mubr.f32.mxu0 0.0
      %1068 = vmatmul.mubr.f32.gmra.mrb[0].mxu0 %v998
      %v1069 = vpop.f32.mrb[0].mxu0
      %v1070 = vadd.f32 0.0, %v1069
      %v1071 = vpop.f32.mrb[0].mxu0
      %1072 = vmatprep.mubr.f32.mxu0 0.0
      %1073 = vmatmul.mubr.f32.gmra.mrb[0].mxu0 %v1000
      %v1074 = vpop.f32.mrb[0].mxu0
      %v1075 = vadd.f32 0.0, %v1074
      %v1076 = vpop.f32.mrb[0].mxu0
      %1077 = vdwg.mxu0
      %v1078 = vadd.f32 %v977, %v1070
      %v1079 = vadd.f32 %v978, %v1075
      %v1080 = vld [vmem:[%s384] sm:$0xff]
      %v1081 = vld [vmem:[%s384 + $0x8] sm:$0xff]
      %v1082 = vld [vmem:[%s384 + $0x10] sm:$0x3]
      %v1083 = vmul.f32 %v1080, %v416
      %v1084 = vmul.f32 %v1081, %v416
      %v1085 = vmul.f32 %v1082, %v416
      %v1086 = vadd.f32 %v1083, %v426
      %v1087 = vadd.f32 %v1084, %v426
      %v1088 = vadd.f32 %v1085, %v426
      %v1089 = vmax.f32 %v1086, 0.0
      %v1090 = vmax.f32 %v1087, 0.0
      %v1091 = vmax.f32 %v1088, 0.0
      %s1092 = sadd.s32 %s24, 2
      %p1093 = scmp.ge.s32.totalorder %s1092, 1
      %p1094 = scmp.le.s32.totalorder %s1092, 16
      %p1095 = pnand %p1093, %p1094
      %p1096 = pneg %p1095
      %s1097 = scalar_select %p1096, 1, 0
      %v1098 = vstv %s1097
      %vm1099 = vcmp.eq.s32.totalorder %v1098, 1
      %vm1100 = vmand %vm405, %vm1099
      %vm1101 = vmand %vm406, %vm1099
      %vm1102 = vmand %vm407, %vm1099
      %v1103 = vsel %vm1100, 1, 0
      %v1104 = vsel %vm1101, 1, 0
      %v1105 = vsel %vm1102, 1, 0
      %vm1106 = vcmp.eq.s32.totalorder %v1103, 1
      %vm1107 = vcmp.eq.s32.totalorder %v1104, 1
      %vm1108 = vcmp.eq.s32.totalorder %v1105, 1
      %v1109 = vsel %vm1106, %v1089, 0.0
      %v1110 = vsel %vm1107, %v1090, 0.0
      %v1111 = vsel %vm1108, %v1091, 0.0
      %s1112 = scalar_lea.vmem %s3, 768
      %v1113 = vld [vmem:[%s1112] sm:$0xff]
      %v1114 = vld [vmem:[%s1112 + $0x8] sm:$0xff]
      %v1115 = vld [vmem:[%s1112 + $0x10] sm:$0xff]
      %v1116 = vld [vmem:[%s1112 + $0x18] sm:$0xff]
      %v1117 = vld [vmem:[%s1112 + $0x20] sm:$0xff]
      %v1118 = vld [vmem:[%s1112 + $0x28] sm:$0xff]
      %v1119 = vld [vmem:[%s1112 + $0x30] sm:$0xff]
      %v1120 = vld [vmem:[%s1112 + $0x38] sm:$0xff]
      %v1121 = vld [vmem:[%s1112 + $0x40] sm:$0xff]
      %v1122 = vld [vmem:[%s1112 + $0x48] sm:$0xff]
      %v1123 = vld [vmem:[%s1112 + $0x50] sm:$0xff]
      %v1124 = vld [vmem:[%s1112 + $0x58] sm:$0xff]
      %v1125 = vld [vmem:[%s1112 + $0x60] sm:$0xff]
      %v1126 = vld [vmem:[%s1112 + $0x68] sm:$0xff]
      %v1127 = vld [vmem:[%s1112 + $0x70] sm:$0xff]
      %v1128 = vld [vmem:[%s1112 + $0x78] sm:$0xff]
      %1129 = vmatprep.subr.mxu0 0.0
      %1130 = vmatpush1.msra.mxu0 %v1113
      %1131 = vmatprep.subr.mxu0 0.0
      %1132 = vmatpush1.msra.mxu0 %v1114
      %1133 = vmatprep.subr.mxu0 0.0
      %1134 = vmatpush1.msra.mxu0 %v1115
      %1135 = vmatprep.subr.mxu0 0.0
      %1136 = vmatpush1.msra.mxu0 %v1116
      %1137 = vmatprep.subr.mxu0 0.0
      %1138 = vmatpush1.msra.mxu0 %v1117
      %1139 = vmatprep.subr.mxu0 0.0
      %1140 = vmatpush1.msra.mxu0 %v1118
      %1141 = vmatprep.subr.mxu0 0.0
      %1142 = vmatpush1.msra.mxu0 %v1119
      %1143 = vmatprep.subr.mxu0 0.0
      %1144 = vmatpush1.msra.mxu0 %v1120
      %1145 = vmatprep.subr.mxu0 0.0
      %1146 = vmatpush1.msra.mxu0 %v1121
      %1147 = vmatprep.subr.mxu0 0.0
      %1148 = vmatpush1.msra.mxu0 %v1122
      %1149 = vmatprep.subr.mxu0 0.0
      %1150 = vmatpush1.msra.mxu0 %v1123
      %1151 = vmatprep.subr.mxu0 0.0
      %1152 = vmatpush1.msra.mxu0 %v1124
      %1153 = vmatprep.subr.mxu0 0.0
      %1154 = vmatpush1.msra.mxu0 %v1125
      %1155 = vmatprep.subr.mxu0 0.0
      %1156 = vmatpush1.msra.mxu0 %v1126
      %1157 = vmatprep.subr.mxu0 0.0
      %1158 = vmatpush1.msra.mxu0 %v1127
      %1159 = vmatprep.subr.mxu0 0.0
      %1160 = vmatpush1.msra.mxu0 %v1128
      %1161 = vmatprep.subr.mxu0 0.0
      %1162 = vmatpush1.msra.mxu0 0.0
      %1163 = vmatprep.subr.mxu0 0.0
      %1164 = vmatpush1.msra.mxu0 0.0
      %1165 = vmatprep.subr.mxu0 0.0
      %1166 = vmatpush1.msra.mxu0 0.0
      %1167 = vmatprep.subr.mxu0 0.0
      %1168 = vmatpush1.msra.mxu0 0.0
      %1169 = vmatprep.subr.mxu0 0.0
      %1170 = vmatpush1.msra.mxu0 0.0
      %1171 = vmatprep.subr.mxu0 0.0
      %1172 = vmatpush1.msra.mxu0 0.0
      %1173 = vmatprep.subr.mxu0 0.0
      %1174 = vmatpush1.msra.mxu0 0.0
      %1175 = vmatprep.subr.mxu0 0.0
      %1176 = vmatpush1.msra.mxu0 0.0
      %1177 = vmatprep.subr.mxu0 0.0
      %1178 = vmatpush1.msra.mxu0 0.0
      %1179 = vmatprep.subr.mxu0 0.0
      %1180 = vmatpush1.msra.mxu0 0.0
      %1181 = vmatprep.subr.mxu0 0.0
      %1182 = vmatpush1.msra.mxu0 0.0
      %1183 = vmatprep.subr.mxu0 0.0
      %1184 = vmatpush1.msra.mxu0 0.0
      %1185 = vmatprep.subr.mxu0 0.0
      %1186 = vmatpush1.msra.mxu0 0.0
      %1187 = vmatprep.subr.mxu0 0.0
      %1188 = vmatpush1.msra.mxu0 0.0
      %1189 = vmatprep.subr.mxu0 0.0
      %1190 = vmatpush1.msra.mxu0 0.0
      %1191 = vmatprep.subr.mxu0 0.0
      %1192 = vmatpush1.msra.mxu0 0.0
      %1193 = vmatprep.mubr.f32.mxu0 0.0
      %1194 = vmatmul.mubr.f32.gmra.mrb[0].mxu0 %v1109
      %v1195 = vpop.f32.mrb[0].mxu0
      %v1196 = vadd.f32 0.0, %v1195
      %v1197 = vpop.f32.mrb[0].mxu0
      %1198 = vmatprep.mubr.f32.mxu0 0.0
      %1199 = vmatmul.mubr.f32.gmra.mrb[0].mxu0 %v1110
      %v1200 = vpop.f32.mrb[0].mxu0
      %v1201 = vadd.f32 0.0, %v1200
      %v1202 = vpop.f32.mrb[0].mxu0
      %1203 = vdwg.mxu0
      %v1204 = vadd.f32 %v1078, %v1196
      %v1205 = vadd.f32 %v1079, %v1201
      %s1206 = scalar_lea.vmem %s3, 896
      %v1207 = vld [vmem:[%s1206] sm:$0xff]
      %v1208 = vld [vmem:[%s1206 + $0x8] sm:$0xff]
      %v1209 = vld [vmem:[%s1206 + $0x10] sm:$0xff]
      %v1210 = vld [vmem:[%s1206 + $0x18] sm:$0xff]
      %v1211 = vld [vmem:[%s1206 + $0x20] sm:$0xff]
      %v1212 = vld [vmem:[%s1206 + $0x28] sm:$0xff]
      %v1213 = vld [vmem:[%s1206 + $0x30] sm:$0xff]
      %v1214 = vld [vmem:[%s1206 + $0x38] sm:$0xff]
      %v1215 = vld [vmem:[%s1206 + $0x40] sm:$0xff]
      %v1216 = vld [vmem:[%s1206 + $0x48] sm:$0xff]
      %v1217 = vld [vmem:[%s1206 + $0x50] sm:$0xff]
      %v1218 = vld [vmem:[%s1206 + $0x58] sm:$0xff]
      %v1219 = vld [vmem:[%s1206 + $0x60] sm:$0xff]
      %v1220 = vld [vmem:[%s1206 + $0x68] sm:$0xff]
      %v1221 = vld [vmem:[%s1206 + $0x70] sm:$0xff]
      %v1222 = vld [vmem:[%s1206 + $0x78] sm:$0xff]
      %v1226 = vrot.slane %v1109, 1
      %v1227 = vrot.slane %v1110, 1
      %v1228 = vsel %vm489, %v1226, %v1227
      %v1229 = vrot.slane %v1111, 1
      %v1230 = vsel %vm489, %v1227, %v1229
      %1233 = vmatprep.subr.mxu0 0.0
      %1234 = vmatpush1.msra.mxu0 %v1207
      %1235 = vmatprep.subr.mxu0 0.0
      %1236 = vmatpush1.msra.mxu0 %v1208
      %1237 = vmatprep.subr.mxu0 0.0
      %1238 = vmatpush1.msra.mxu0 %v1209
      %1239 = vmatprep.subr.mxu0 0.0
      %1240 = vmatpush1.msra.mxu0 %v1210
      %1241 = vmatprep.subr.mxu0 0.0
      %1242 = vmatpush1.msra.mxu0 %v1211
      %1243 = vmatprep.subr.mxu0 0.0
      %1244 = vmatpush1.msra.mxu0 %v1212
      %1245 = vmatprep.subr.mxu0 0.0
      %1246 = vmatpush1.msra.mxu0 %v1213
      %1247 = vmatprep.subr.mxu0 0.0
      %1248 = vmatpush1.msra.mxu0 %v1214
      %1249 = vmatprep.subr.mxu0 0.0
      %1250 = vmatpush1.msra.mxu0 %v1215
      %1251 = vmatprep.subr.mxu0 0.0
      %1252 = vmatpush1.msra.mxu0 %v1216
      %1253 = vmatprep.subr.mxu0 0.0
      %1254 = vmatpush1.msra.mxu0 %v1217
      %1255 = vmatprep.subr.mxu0 0.0
      %1256 = vmatpush1.msra.mxu0 %v1218
      %1257 = vmatprep.subr.mxu0 0.0
      %1258 = vmatpush1.msra.mxu0 %v1219
      %1259 = vmatprep.subr.mxu0 0.0
      %1260 = vmatpush1.msra.mxu0 %v1220
      %1261 = vmatprep.subr.mxu0 0.0
      %1262 = vmatpush1.msra.mxu0 %v1221
      %1263 = vmatprep.subr.mxu0 0.0
      %1264 = vmatpush1.msra.mxu0 %v1222
      %1265 = vmatprep.subr.mxu0 0.0
      %1266 = vmatpush1.msra.mxu0 0.0
      %1267 = vmatprep.subr.mxu0 0.0
      %1268 = vmatpush1.msra.mxu0 0.0
      %1269 = vmatprep.subr.mxu0 0.0
      %1270 = vmatpush1.msra.mxu0 0.0
      %1271 = vmatprep.subr.mxu0 0.0
      %1272 = vmatpush1.msra.mxu0 0.0
      %1273 = vmatprep.subr.mxu0 0.0
      %1274 = vmatpush1.msra.mxu0 0.0
      %1275 = vmatprep.subr.mxu0 0.0
      %1276 = vmatpush1.msra.mxu0 0.0
      %1277 = vmatprep.subr.mxu0 0.0
      %1278 = vmatpush1.msra.mxu0 0.0
      %1279 = vmatprep.subr.mxu0 0.0
      %1280 = vmatpush1.msra.mxu0 0.0
      %1281 = vmatprep.subr.mxu0 0.0
      %1282 = vmatpush1.msra.mxu0 0.0
      %1283 = vmatprep.subr.mxu0 0.0
      %1284 = vmatpush1.msra.mxu0 0.0
      %1285 = vmatprep.subr.mxu0 0.0
      %1286 = vmatpush1.msra.mxu0 0.0
      %1287 = vmatprep.subr.mxu0 0.0
      %1288 = vmatpush1.msra.mxu0 0.0
      %1289 = vmatprep.subr.mxu0 0.0
      %1290 = vmatpush1.msra.mxu0 0.0
      %1291 = vmatprep.subr.mxu0 0.0
      %1292 = vmatpush1.msra.mxu0 0.0
      %1293 = vmatprep.subr.mxu0 0.0
      %1294 = vmatpush1.msra.mxu0 0.0
      %1295 = vmatprep.subr.mxu0 0.0
      %1296 = vmatpush1.msra.mxu0 0.0
      %1297 = vmatprep.mubr.f32.mxu0 0.0
      %1298 = vmatmul.mubr.f32.gmra.mrb[0].mxu0 %v1228
      %v1299 = vpop.f32.mrb[0].mxu0
      %v1300 = vadd.f32 0.0, %v1299
      %v1301 = vpop.f32.mrb[0].mxu0
      %1302 = vmatprep.mubr.f32.mxu0 0.0
      %1303 = vmatmul.mubr.f32.gmra.mrb[0].mxu0 %v1230
      %v1304 = vpop.f32.mrb[0].mxu0
      %v1305 = vadd.f32 0.0, %v1304
      %v1306 = vpop.f32.mrb[0].mxu0
      %1307 = vdwg.mxu0
      %v1308 = vadd.f32 %v1204, %v1300
      %v1309 = vadd.f32 %v1205, %v1305
      %s1310 = scalar_lea.vmem %s3, 1024
      %v1311 = vld [vmem:[%s1310] sm:$0xff]
      %v1312 = vld [vmem:[%s1310 + $0x8] sm:$0xff]
      %v1313 = vld [vmem:[%s1310 + $0x10] sm:$0xff]
      %v1314 = vld [vmem:[%s1310 + $0x18] sm:$0xff]
      %v1315 = vld [vmem:[%s1310 + $0x20] sm:$0xff]
      %v1316 = vld [vmem:[%s1310 + $0x28] sm:$0xff]
      %v1317 = vld [vmem:[%s1310 + $0x30] sm:$0xff]
      %v1318 = vld [vmem:[%s1310 + $0x38] sm:$0xff]
      %v1319 = vld [vmem:[%s1310 + $0x40] sm:$0xff]
      %v1320 = vld [vmem:[%s1310 + $0x48] sm:$0xff]
      %v1321 = vld [vmem:[%s1310 + $0x50] sm:$0xff]
      %v1322 = vld [vmem:[%s1310 + $0x58] sm:$0xff]
      %v1323 = vld [vmem:[%s1310 + $0x60] sm:$0xff]
      %v1324 = vld [vmem:[%s1310 + $0x68] sm:$0xff]
      %v1325 = vld [vmem:[%s1310 + $0x70] sm:$0xff]
      %v1326 = vld [vmem:[%s1310 + $0x78] sm:$0xff]
      %v1327 = vrot.slane %v1109, 2
      %v1328 = vrot.slane %v1110, 2
      %v1329 = vsel %vm664, %v1327, %v1328
      %v1330 = vrot.slane %v1111, 2
      %v1331 = vsel %vm664, %v1328, %v1330
      %1334 = vmatprep.subr.mxu0 0.0
      %1335 = vmatpush1.msra.mxu0 %v1311
      %1336 = vmatprep.subr.mxu0 0.0
      %1337 = vmatpush1.msra.mxu0 %v1312
      %1338 = vmatprep.subr.mxu0 0.0
      %1339 = vmatpush1.msra.mxu0 %v1313
      %1340 = vmatprep.subr.mxu0 0.0
      %1341 = vmatpush1.msra.mxu0 %v1314
      %1342 = vmatprep.subr.mxu0 0.0
      %1343 = vmatpush1.msra.mxu0 %v1315
      %1344 = vmatprep.subr.mxu0 0.0
      %1345 = vmatpush1.msra.mxu0 %v1316
      %1346 = vmatprep.subr.mxu0 0.0
      %1347 = vmatpush1.msra.mxu0 %v1317
      %1348 = vmatprep.subr.mxu0 0.0
      %1349 = vmatpush1.msra.mxu0 %v1318
      %1350 = vmatprep.subr.mxu0 0.0
      %1351 = vmatpush1.msra.mxu0 %v1319
      %1352 = vmatprep.subr.mxu0 0.0
      %1353 = vmatpush1.msra.mxu0 %v1320
      %1354 = vmatprep.subr.mxu0 0.0
      %1355 = vmatpush1.msra.mxu0 %v1321
      %1356 = vmatprep.subr.mxu0 0.0
      %1357 = vmatpush1.msra.mxu0 %v1322
      %1358 = vmatprep.subr.mxu0 0.0
      %1359 = vmatpush1.msra.mxu0 %v1323
      %1360 = vmatprep.subr.mxu0 0.0
      %1361 = vmatpush1.msra.mxu0 %v1324
      %1362 = vmatprep.subr.mxu0 0.0
      %1363 = vmatpush1.msra.mxu0 %v1325
      %1364 = vmatprep.subr.mxu0 0.0
      %1365 = vmatpush1.msra.mxu0 %v1326
      %1366 = vmatprep.subr.mxu0 0.0
      %1367 = vmatpush1.msra.mxu0 0.0
      %1368 = vmatprep.subr.mxu0 0.0
      %1369 = vmatpush1.msra.mxu0 0.0
      %1370 = vmatprep.subr.mxu0 0.0
      %1371 = vmatpush1.msra.mxu0 0.0
      %1372 = vmatprep.subr.mxu0 0.0
      %1373 = vmatpush1.msra.mxu0 0.0
      %1374 = vmatprep.subr.mxu0 0.0
      %1375 = vmatpush1.msra.mxu0 0.0
      %1376 = vmatprep.subr.mxu0 0.0
      %1377 = vmatpush1.msra.mxu0 0.0
      %1378 = vmatprep.subr.mxu0 0.0
      %1379 = vmatpush1.msra.mxu0 0.0
      %1380 = vmatprep.subr.mxu0 0.0
      %1381 = vmatpush1.msra.mxu0 0.0
      %1382 = vmatprep.subr.mxu0 0.0
      %1383 = vmatpush1.msra.mxu0 0.0
      %1384 = vmatprep.subr.mxu0 0.0
      %1385 = vmatpush1.msra.mxu0 0.0
      %1386 = vmatprep.subr.mxu0 0.0
      %1387 = vmatpush1.msra.mxu0 0.0
      %1388 = vmatprep.subr.mxu0 0.0
      %1389 = vmatpush1.msra.mxu0 0.0
      %1390 = vmatprep.subr.mxu0 0.0
      %1391 = vmatpush1.msra.mxu0 0.0
      %1392 = vmatprep.subr.mxu0 0.0
      %1393 = vmatpush1.msra.mxu0 0.0
      %1394 = vmatprep.subr.mxu0 0.0
      %1395 = vmatpush1.msra.mxu0 0.0
      %1396 = vmatprep.subr.mxu0 0.0
      %1397 = vmatpush1.msra.mxu0 0.0
      %1398 = vmatprep.mubr.f32.mxu0 0.0
      %1399 = vmatmul.mubr.f32.gmra.mrb[0].mxu0 %v1329
      %v1400 = vpop.f32.mrb[0].mxu0
      %v1401 = vadd.f32 0.0, %v1400
      %v1402 = vpop.f32.mrb[0].mxu0
      %1403 = vmatprep.mubr.f32.mxu0 0.0
      %1404 = vmatmul.mubr.f32.gmra.mrb[0].mxu0 %v1331
      %v1405 = vpop.f32.mrb[0].mxu0
      %v1406 = vadd.f32 0.0, %v1405
      %v1407 = vpop.f32.mrb[0].mxu0
      %1408 = vdwg.mxu0
      %v1409 = vadd.f32 %v1308, %v1401
      %v1410 = vadd.f32 %v1309, %v1406
      %1411 = vst [vmem:[%s394] sm:$0xff] %v1409
      %1412 = vst [vmem:[%s394 + $0x8] sm:$0xff] %v1410
      %p1413 = scmp.eq.s32.totalorder %s23, 0
      %p1414 = scmp.eq.s32.totalorder %s24, 0
      %p1415 = pnand %p1413, %p1414
      %p1416 = pneg %p1415
      // Predicated region
      $region45: #{up_forward.6} parent=43 // pred_check
        _
      $region46: #{up_forward.6} parent=43 // pred_check_branch
        %1418 = sbr.rel (%p1415) target = $region48
      $region47: #{up_forward.6} parent=43 // pred_region
        %1419 = vst [vmem:[%s7] sm:$0x3] 0.0
      $region48: #{up_forward.6} parent=43 // pred_fallthru
        _
      %v1420 = vld [vmem:[%s7] sm:$0x3]
      %v1421 = vadd.f32 %v1409, %v1410
      %v1422 = vrot.slane %v1421, 4
      %v1423 = vadd.f32 %v1421, %v1422
      %v1424 = vrot.slane %v1423, 2
      %v1425 = vadd.f32 %v1423, %v1424
      %v1426 = vrot.slane %v1425, 1
      %v1427 = vadd.f32 %v1425, %v1426
      %v1428 = vmul.f32 %v1409, %v1409
      %v1429 = vmul.f32 %v1410, %v1410
      %v1430 = vadd.f32 %v1428, %v1429
      %v1431 = vrot.slane %v1430, 4
      %v1432 = vadd.f32 %v1430, %v1431
      %v1433 = vrot.slane %v1432, 2
      %v1434 = vadd.f32 %v1432, %v1433
      %v1435 = vrot.slane %v1434, 1
      %v1436 = vadd.f32 %v1434, %v1435
      %vm1437 = vcmask 1040384
      %v1438 = vsel %vm1437, %v1427, %v1436
      %v1439 = vadd.f32 %v1420, %v1438
      %1440 = vst [vmem:[%s7] sm:$0x3] %v1439
      %p1441 = scmp.lt.s32.totalorder %s23, 1
      %s1442 = scalar_select %p1441, %s23, 1
      %p1443 = scmp.lt.s32.totalorder %s24, 15
      %s1444 = scalar_select %p1443, %s24, 15
      %s1445 = smul.addr %s1444, 2
      %s1446 = smul.addr %s1442, 32
      %s1447 = sadd.s32 %s1445, %s1446
      %s1448 = smul.addr %s1447, 8
      %s1449 = scalar_lea.vmem %s6, %s1448
      // Predicated region
      $region49: #{up_forward.6} parent=43 // pred_check
        %p1450 = pneg %p202
      $region50: #{up_forward.6} parent=43 // pred_check_branch
        %1452 = sbr.rel (%p1450) target = $region52
      $region51: #{up_forward.6} parent=43 // pred_region
        _
      $region52: #{up_forward.6} parent=43 // pred_fallthru
        _
      // Predicated region
      $region53: #{up_forward.6} parent=43 // pred_check
        %p1453 = pneg %p223
      $region54: #{up_forward.6} parent=43 // pred_check_branch
        %1455 = sbr.rel (%p1453) target = $region56
      $region55: #{up_forward.6} parent=43 // pred_region
        _
      $region56: #{up_forward.6} parent=43 // pred_fallthru
        _
      // Predicated region
      $region57: #{up_forward.6} parent=43 // pred_check
        %p1456 = pneg %p223
      $region58: #{up_forward.6} parent=43 // pred_check_branch
        %1458 = sbr.rel (%p1456) target = $region60
      $region59: #{up_forward.6} parent=43 // pred_region
        _
      $region60: #{up_forward.6} parent=43 // pred_fallthru
        _
    $region44: #{up_forward.6} parent=5 // pred_fallthru
      _
    %p1459 = scmp.le.s32.totalorder 2, %s14
    // Predicated region
    $region61: #{up_forward.6} parent=5 // pred_check
      %p1460 = pneg %p1459
    $region62: #{up_forward.6} parent=5 // pred_check_branch
      %1462 = sbr.rel (%p1460) target = $region64
    $region63: #{up_forward.6} parent=5 // pred_region
      %s1463 = ssub.s32 %s14, 2
      // Predicated region
      $region65: #{up_forward.6} parent=63 // pred_check
        %p1464 = pneg %p208
      $region66: #{up_forward.6} parent=63 // pred_check_branch
        %1466 = sbr.rel (%p1464) target = $region68
      $region67: #{up_forward.6} parent=63 // pred_region
        %p1467 = scmp.lt.s32.totalorder %s25, 1
        %s1468 = scalar_select %p1467, %s25, 1
        %p1469 = scmp.lt.s32.totalorder %s26, 15
        %s1470 = scalar_select %p1469, %s26, 15
        %s1471 = smul.addr %s1470, 2
        %s1472 = smul.addr %s1468, 32
        %s1473 = sadd.s32 %s1471, %s1472
        %s1474 = smul.addr %s1473, 8
        %s1475 = scalar_lea.vmem %s6, %s1474
      $region68: #{up_forward.6} parent=63 // pred_fallthru
        _
    $region64: #{up_forward.6} parent=5 // pred_fallthru
      _
  $region6: #{up_forward.6} parent=0 // loop_footer
    %s18 = sadd.s32 1, %s14
  $region7: #{up_forward.6} parent=0 // loop_footer_branch
    %13 = sbr.rel target = $region3
  $region8: #{up_forward.6} parent=0 // loop_exit
    _

// kernel: up_forward.5
$region0: #{up_forward.5}
  #allocation0 [shape = 'u32[]', space=smem, size = 0x4, offset = 0x4, fixed_abs, tag = 'smem constant byte address 0x4 - core index']
  #allocation1 [shape = 'u32[144,128]{1,0:T(1,128)}', space=vmem, size = 0x12000, scoped, tag = 'internal scratch']
  %s0 = inlined_call_operand.vmem [shape: f32[2,18,18,128], index: 0, kind: input, shape index: {}, may-alias: {0,1,2}]
  %s1 = inlined_call_operand.vmem [shape: f32[2,18,18,128], index: 1, kind: input, shape index: {}, may-alias: {0,1,2}]
  %s2 = inlined_call_operand.vmem [shape: f32[2,18,18,128], index: 2, kind: input, shape index: {}, may-alias: {0,1,2}]
  %s3 = inlined_call_operand.vmem [shape: f32[2,18,18,128], index: 3, kind: input, shape index: {}, may-alias: {3,4,5}]
  %s4 = inlined_call_operand.vmem [shape: f32[2,18,18,128], index: 4, kind: input, shape index: {}, may-alias: {3,4,5}]
  %s5 = inlined_call_operand.vmem [shape: f32[2,18,18,128], index: 5, kind: input, shape index: {}, may-alias: {3,4,5}]
  %s6 = inlined_call_operand.vmem [shape: f32[3,3,128,128], index: 6, kind: input, shape index: {}]
  %s7 = inlined_call_operand.vmem [shape: f32[3,3,128,128], index: 7, kind: input, shape index: {}]
  %s8 = inlined_call_operand.vmem [shape: f32[2,18,18,128], index: 8, kind: output, shape index: {0}]
  %s9 = inlined_call_operand.vmem [shape: f32[2,128], index: 9, kind: output, shape index: {1}]
  %10 = xla_tuple %s8, %s9
  %s11 = sld [smem:[#allocation0]]
  $region77: #{up_forward.5} parent=0
    _
  %s13 = ssub.s32 1, %s11
  %s14 = scalar_select 0, %s13, %s11
  loop: start=0, step=1, limit=34
  $region2: #{up_forward.5} parent=0 // loop_pre_header
    _
  $region3: #{up_forward.5} parent=0 // loop_header
    %s16 = sphi 0, %s20
    %p17 = scmp.ge.s32.totalorder %s16, 34
    %s23 = sphi 0, %s35
    %s24 = sphi 0, %s31
    %s25 = sphi 0, %s23
    %s26 = sphi 0, %s24
    %s27 = sphi 0, %s25
    %s28 = sphi 0, %s26
    %s40 = sphi 0, %s42
    %s43 = sphi 0, %s40
    %s44 = sphi 0, %s43
    %s60 = sphi 0, %s44
    %s70 = sphi 0, %s72
    %s73 = sphi 0, %s70
    %s74 = sphi 0, %s73
    %s90 = sphi 0, %s74
    %s100 = sphi 0, %s102
    %s103 = sphi 0, %s100
    %s104 = sphi 0, %s103
    %s120 = sphi 0, %s104
    %s128 = sphi 0, %s130
    %s131 = sphi 0, %s128
    %s132 = sphi 0, %s131
    %s148 = sphi 0, %s132
    %s158 = sphi 0, %s160
    %s161 = sphi 0, %s158
    %s162 = sphi 0, %s161
    %s178 = sphi 0, %s162
    %s188 = sphi 0, %s190
    %s191 = sphi 0, %s188
    %s192 = sphi 0, %s191
    %s208 = sphi 0, %s192
    %s212 = sphi 0, %s212
    %s214 = sphi 0, %s212
    %s215 = sphi 0, %s214
    %s229 = sphi 0, %s215
    %s233 = sphi 0, %s233
    %s235 = sphi 0, %s233
    %s236 = sphi 0, %s235
    %s250 = sphi 0, %s236
    %s260 = sphi 0, %s262
    %s263 = sphi 0, %s260
    %s264 = sphi 0, %s263
    %s280 = sphi 0, %s264
    %s284 = sphi 0, %s284
    %s286 = sphi 0, %s284
    %s287 = sphi 0, %s286
    %s301 = sphi 0, %s287
  $region4: #{up_forward.5} parent=0 // loop_header_branch
    %19 = sbr.rel (%p17) target = $region8
  $region5: #{up_forward.5} parent=0 // loop_body
    %s21 = ssub.s32 %s16, 1
    %s22 = ssub.s32 %s16, 2
    %s29 = sadd.s32 1, %s24
    %p30 = scmp.ge.s32.totalorder %s29, 16
    %s31 = scalar_select %p30, 0, %s29
    %s32 = sadd.s32 1, %s23
    %s33 = scalar_select %p30, %s32, %s23
    %p34 = scmp.ge.s32.totalorder %s33, 2
    %s35 = scalar_select %p34, 0, %s33
    %s36 = ssub.s32 %s23, %s35
    %s37 = ssub.s32 %s24, %s31
    %s38 = sor.u32 %s36, %s37
    %p39 = scmp.eq.s32.totalorder %s38, 0
    %s41 = sadd.s32 %s40, 1
    %s42 = scalar_select %p39, %s40, %s41
    %p45 = pneg %p39
    %p46 = scmp.eq.s32.totalorder %s16, 31
    %p47 = por %p45, %p46
    %p48 = scmp.ne.s32.totalorder %s40, %s43
    %p49 = scmp.eq.s32.totalorder %s16, 0
    %p50 = por %p48, %p49
    %p51 = scmp.ne.s32.totalorder %s40, %s43
    %p52 = scmp.eq.s32.totalorder %s21, 31
    %p53 = por %p51, %p52
    %p54 = scmp.ne.s32.totalorder %s43, %s44
    %p55 = scmp.eq.s32.totalorder %s21, 0
    %p56 = por %p54, %p55
    %p57 = scmp.ne.s32.totalorder %s43, %s44
    %p58 = scmp.eq.s32.totalorder %s22, 31
    %p59 = por %p57, %p58
    %p61 = scmp.ne.s32.totalorder %s44, %s60
    %p62 = scmp.eq.s32.totalorder %s22, 0
    %p63 = por %p61, %p62
    %s64 = sadd.s32 %s24, 1
    %s65 = sadd.s32 %s31, 1
    %s66 = ssub.s32 %s23, %s35
    %s67 = ssub.s32 %s64, %s65
    %s68 = sor.u32 %s66, %s67
    %p69 = scmp.eq.s32.totalorder %s68, 0
    %s71 = sadd.s32 %s70, 1
    %s72 = scalar_select %p69, %s70, %s71
    %p75 = pneg %p69
    %p76 = scmp.eq.s32.totalorder %s16, 31
    %p77 = por %p75, %p76
    %p78 = scmp.ne.s32.totalorder %s70, %s73
    %p79 = scmp.eq.s32.totalorder %s16, 0
    %p80 = por %p78, %p79
    %p81 = scmp.ne.s32.totalorder %s70, %s73
    %p82 = scmp.eq.s32.totalorder %s21, 31
    %p83 = por %p81, %p82
    %p84 = scmp.ne.s32.totalorder %s73, %s74
    %p85 = scmp.eq.s32.totalorder %s21, 0
    %p86 = por %p84, %p85
    %p87 = scmp.ne.s32.totalorder %s73, %s74
    %p88 = scmp.eq.s32.totalorder %s22, 31
    %p89 = por %p87, %p88
    %p91 = scmp.ne.s32.totalorder %s74, %s90
    %p92 = scmp.eq.s32.totalorder %s22, 0
    %p93 = por %p91, %p92
    %s94 = sadd.s32 %s24, 2
    %s95 = sadd.s32 %s31, 2
    %s96 = ssub.s32 %s23, %s35
    %s97 = ssub.s32 %s94, %s95
    %s98 = sor.u32 %s96, %s97
    %p99 = scmp.eq.s32.totalorder %s98, 0
    %s101 = sadd.s32 %s100, 1
    %s102 = scalar_select %p99, %s100, %s101
    %p105 = pneg %p99
    %p106 = scmp.eq.s32.totalorder %s16, 31
    %p107 = por %p105, %p106
    %p108 = scmp.ne.s32.totalorder %s100, %s103
    %p109 = scmp.eq.s32.totalorder %s16, 0
    %p110 = por %p108, %p109
    %p111 = scmp.ne.s32.totalorder %s100, %s103
    %p112 = scmp.eq.s32.totalorder %s21, 31
    %p113 = por %p111, %p112
    %p114 = scmp.ne.s32.totalorder %s103, %s104
    %p115 = scmp.eq.s32.totalorder %s21, 0
    %p116 = por %p114, %p115
    %p117 = scmp.ne.s32.totalorder %s103, %s104
    %p118 = scmp.eq.s32.totalorder %s22, 31
    %p119 = por %p117, %p118
    %p121 = scmp.ne.s32.totalorder %s104, %s120
    %p122 = scmp.eq.s32.totalorder %s22, 0
    %p123 = por %p121, %p122
    %s124 = ssub.s32 %s23, %s35
    %s125 = ssub.s32 %s24, %s31
    %s126 = sor.u32 %s124, %s125
    %p127 = scmp.eq.s32.totalorder %s126, 0
    %s129 = sadd.s32 %s128, 1
    %s130 = scalar_select %p127, %s128, %s129
    %p133 = pneg %p127
    %p134 = scmp.eq.s32.totalorder %s16, 31
    %p135 = por %p133, %p134
    %p136 = scmp.ne.s32.totalorder %s128, %s131
    %p137 = scmp.eq.s32.totalorder %s16, 0
    %p138 = por %p136, %p137
    %p139 = scmp.ne.s32.totalorder %s128, %s131
    %p140 = scmp.eq.s32.totalorder %s21, 31
    %p141 = por %p139, %p140
    %p142 = scmp.ne.s32.totalorder %s131, %s132
    %p143 = scmp.eq.s32.totalorder %s21, 0
    %p144 = por %p142, %p143
    %p145 = scmp.ne.s32.totalorder %s131, %s132
    %p146 = scmp.eq.s32.totalorder %s22, 31
    %p147 = por %p145, %p146
    %p149 = scmp.ne.s32.totalorder %s132, %s148
    %p150 = scmp.eq.s32.totalorder %s22, 0
    %p151 = por %p149, %p150
    %s152 = sadd.s32 %s24, 1
    %s153 = sadd.s32 %s31, 1
    %s154 = ssub.s32 %s23, %s35
    %s155 = ssub.s32 %s152, %s153
    %s156 = sor.u32 %s154, %s155
    %p157 = scmp.eq.s32.totalorder %s156, 0
    %s159 = sadd.s32 %s158, 1
    %s160 = scalar_select %p157, %s158, %s159
    %p163 = pneg %p157
    %p164 = scmp.eq.s32.totalorder %s16, 31
    %p165 = por %p163, %p164
    %p166 = scmp.ne.s32.totalorder %s158, %s161
    %p167 = scmp.eq.s32.totalorder %s16, 0
    %p168 = por %p166, %p167
    %p169 = scmp.ne.s32.totalorder %s158, %s161
    %p170 = scmp.eq.s32.totalorder %s21, 31
    %p171 = por %p169, %p170
    %p172 = scmp.ne.s32.totalorder %s161, %s162
    %p173 = scmp.eq.s32.totalorder %s21, 0
    %p174 = por %p172, %p173
    %p175 = scmp.ne.s32.totalorder %s161, %s162
    %p176 = scmp.eq.s32.totalorder %s22, 31
    %p177 = por %p175, %p176
    %p179 = scmp.ne.s32.totalorder %s162, %s178
    %p180 = scmp.eq.s32.totalorder %s22, 0
    %p181 = por %p179, %p180
    %s182 = sadd.s32 %s24, 2
    %s183 = sadd.s32 %s31, 2
    %s184 = ssub.s32 %s23, %s35
    %s185 = ssub.s32 %s182, %s183
    %s186 = sor.u32 %s184, %s185
    %p187 = scmp.eq.s32.totalorder %s186, 0
    %s189 = sadd.s32 %s188, 1
    %s190 = scalar_select %p187, %s188, %s189
    %p193 = pneg %p187
    %p194 = scmp.eq.s32.totalorder %s16, 31
    %p195 = por %p193, %p194
    %p196 = scmp.ne.s32.totalorder %s188, %s191
    %p197 = scmp.eq.s32.totalorder %s16, 0
    %p198 = por %p196, %p197
    %p199 = scmp.ne.s32.totalorder %s188, %s191
    %p200 = scmp.eq.s32.totalorder %s21, 31
    %p201 = por %p199, %p200
    %p202 = scmp.ne.s32.totalorder %s191, %s192
    %p203 = scmp.eq.s32.totalorder %s21, 0
    %p204 = por %p202, %p203
    %p205 = scmp.ne.s32.totalorder %s191, %s192
    %p206 = scmp.eq.s32.totalorder %s22, 31
    %p207 = por %p205, %p206
    %p209 = scmp.ne.s32.totalorder %s192, %s208
    %p210 = scmp.eq.s32.totalorder %s22, 0
    %p211 = por %p209, %p210
    %s213 = sadd.s32 %s212, 1
    %p216 = scmp.eq.s32.totalorder %s16, 31
    %p217 = scmp.ne.s32.totalorder %s212, %s214
    %p218 = scmp.eq.s32.totalorder %s16, 0
    %p219 = por %p217, %p218
    %p220 = scmp.ne.s32.totalorder %s212, %s214
    %p221 = scmp.eq.s32.totalorder %s21, 31
    %p222 = por %p220, %p221
    %p223 = scmp.ne.s32.totalorder %s214, %s215
    %p224 = scmp.eq.s32.totalorder %s21, 0
    %p225 = por %p223, %p224
    %p226 = scmp.ne.s32.totalorder %s214, %s215
    %p227 = scmp.eq.s32.totalorder %s22, 31
    %p228 = por %p226, %p227
    %p230 = scmp.ne.s32.totalorder %s215, %s229
    %p231 = scmp.eq.s32.totalorder %s22, 0
    %p232 = por %p230, %p231
    %s234 = sadd.s32 %s233, 1
    %p237 = scmp.eq.s32.totalorder %s16, 31
    %p238 = scmp.ne.s32.totalorder %s233, %s235
    %p239 = scmp.eq.s32.totalorder %s16, 0
    %p240 = por %p238, %p239
    %p241 = scmp.ne.s32.totalorder %s233, %s235
    %p242 = scmp.eq.s32.totalorder %s21, 31
    %p243 = por %p241, %p242
    %p244 = scmp.ne.s32.totalorder %s235, %s236
    %p245 = scmp.eq.s32.totalorder %s21, 0
    %p246 = por %p244, %p245
    %p247 = scmp.ne.s32.totalorder %s235, %s236
    %p248 = scmp.eq.s32.totalorder %s22, 31
    %p249 = por %p247, %p248
    %p251 = scmp.ne.s32.totalorder %s236, %s250
    %p252 = scmp.eq.s32.totalorder %s22, 0
    %p253 = por %p251, %p252
    %s254 = sadd.s32 %s24, 1
    %s255 = sadd.s32 %s31, 1
    %s256 = ssub.s32 %s23, %s35
    %s257 = ssub.s32 %s254, %s255
    %s258 = sor.u32 %s256, %s257
    %p259 = scmp.eq.s32.totalorder %s258, 0
    %s261 = sadd.s32 %s260, 1
    %s262 = scalar_select %p259, %s260, %s261
    %p265 = pneg %p259
    %p266 = scmp.eq.s32.totalorder %s16, 31
    %p267 = por %p265, %p266
    %p268 = scmp.ne.s32.totalorder %s260, %s263
    %p269 = scmp.eq.s32.totalorder %s16, 0
    %p270 = por %p268, %p269
    %p271 = scmp.ne.s32.totalorder %s260, %s263
    %p272 = scmp.eq.s32.totalorder %s21, 31
    %p273 = por %p271, %p272
    %p274 = scmp.ne.s32.totalorder %s263, %s264
    %p275 = scmp.eq.s32.totalorder %s21, 0
    %p276 = por %p274, %p275
    %p277 = scmp.ne.s32.totalorder %s263, %s264
    %p278 = scmp.eq.s32.totalorder %s22, 31
    %p279 = por %p277, %p278
    %p281 = scmp.ne.s32.totalorder %s264, %s280
    %p282 = scmp.eq.s32.totalorder %s22, 0
    %p283 = por %p281, %p282
    %s285 = sadd.s32 %s284, 1
    %p288 = scmp.eq.s32.totalorder %s16, 31
    %p289 = scmp.ne.s32.totalorder %s284, %s286
    %p290 = scmp.eq.s32.totalorder %s16, 0
    %p291 = por %p289, %p290
    %p292 = scmp.ne.s32.totalorder %s284, %s286
    %p293 = scmp.eq.s32.totalorder %s21, 31
    %p294 = por %p292, %p293
    %p295 = scmp.ne.s32.totalorder %s286, %s287
    %p296 = scmp.eq.s32.totalorder %s21, 0
    %p297 = por %p295, %p296
    %p298 = scmp.ne.s32.totalorder %s286, %s287
    %p299 = scmp.eq.s32.totalorder %s22, 31
    %p300 = por %p298, %p299
    %p302 = scmp.ne.s32.totalorder %s287, %s301
    %p303 = scmp.eq.s32.totalorder %s22, 0
    %p304 = por %p302, %p303
    %p305 = scmp.le.s32.totalorder 1, %s16
    %p306 = scmp.lt.s32.totalorder %s16, 33
    %p307 = pnand %p305, %p306
    %p308 = pneg %p307
    // Predicated region
    $region9: #{up_forward.5} parent=5 // pred_check
      _
    $region10: #{up_forward.5} parent=5 // pred_check_branch
      %310 = sbr.rel (%p307) target = $region12
    $region11: #{up_forward.5} parent=5 // pred_region
      %s311 = ssub.s32 %s16, 1
      // Predicated region
      $region13: #{up_forward.5} parent=11 // pred_check
        %p312 = pneg %p225
      $region14: #{up_forward.5} parent=11 // pred_check_branch
        %314 = sbr.rel (%p312) target = $region16
      $region15: #{up_forward.5} parent=11 // pred_region
        _
      $region16: #{up_forward.5} parent=11 // pred_fallthru
        _
      // Predicated region
      $region17: #{up_forward.5} parent=11 // pred_check
        %p315 = pneg %p246
      $region18: #{up_forward.5} parent=11 // pred_check_branch
        %317 = sbr.rel (%p315) target = $region20
      $region19: #{up_forward.5} parent=11 // pred_region
        _
      $region20: #{up_forward.5} parent=11 // pred_fallthru
        _
    $region12: #{up_forward.5} parent=5 // pred_fallthru
      _
    %p318 = scmp.lt.s32.totalorder %s16, 32
    // Predicated region
    $region21: #{up_forward.5} parent=5 // pred_check
      %p319 = pneg %p318
    $region22: #{up_forward.5} parent=5 // pred_check_branch
      %321 = sbr.rel (%p319) target = $region24
    $region23: #{up_forward.5} parent=5 // pred_region
      // Predicated region
      $region25: #{up_forward.5} parent=23 // pred_check
        %p322 = pneg %p50
      $region26: #{up_forward.5} parent=23 // pred_check_branch
        %324 = sbr.rel (%p322) target = $region28
      $region27: #{up_forward.5} parent=23 // pred_region
        %p325 = scmp.lt.s32.totalorder %s23, 1
        %s326 = scalar_select %p325, %s23, 1
        %p327 = scmp.lt.s32.totalorder %s24, 17
        %s328 = scalar_select %p327, %s24, 17
        %s329 = smul.addr %s328, 3
        %s330 = smul.addr %s326, 54
        %s331 = sadd.s32 %s329, %s330
        %s332 = smul.addr %s331, 8
        %s333 = scalar_lea.vmem %s0, %s332
      $region28: #{up_forward.5} parent=23 // pred_fallthru
        _
      // Predicated region
      $region29: #{up_forward.5} parent=23 // pred_check
        %p334 = pneg %p80
      $region30: #{up_forward.5} parent=23 // pred_check_branch
        %336 = sbr.rel (%p334) target = $region32
      $region31: #{up_forward.5} parent=23 // pred_region
        %s337 = sadd.s32 %s24, 1
        %p338 = scmp.lt.s32.totalorder %s23, 1
        %s339 = scalar_select %p338, %s23, 1
        %p340 = scmp.lt.s32.totalorder %s337, 17
        %s341 = scalar_select %p340, %s337, 17
        %s342 = smul.addr %s341, 3
        %s343 = smul.addr %s339, 54
        %s344 = sadd.s32 %s342, %s343
        %s345 = smul.addr %s344, 8
        %s346 = scalar_lea.vmem %s1, %s345
        %s347 = sadd.s32 %s24, 1
      $region32: #{up_forward.5} parent=23 // pred_fallthru
        _
      // Predicated region
      $region33: #{up_forward.5} parent=23 // pred_check
        %p348 = pneg %p110
      $region34: #{up_forward.5} parent=23 // pred_check_branch
        %350 = sbr.rel (%p348) target = $region36
      $region35: #{up_forward.5} parent=23 // pred_region
        %s351 = sadd.s32 %s24, 2
        %p352 = scmp.lt.s32.totalorder %s23, 1
        %s353 = scalar_select %p352, %s23, 1
        %p354 = scmp.lt.s32.totalorder %s351, 17
        %s355 = scalar_select %p354, %s351, 17
        %s356 = smul.addr %s355, 3
        %s357 = smul.addr %s353, 54
        %s358 = sadd.s32 %s356, %s357
        %s359 = smul.addr %s358, 8
        %s360 = scalar_lea.vmem %s2, %s359
        %s361 = sadd.s32 %s24, 2
      $region36: #{up_forward.5} parent=23 // pred_fallthru
        _
      // Predicated region
      $region37: #{up_forward.5} parent=23 // pred_check
        %p362 = pneg %p138
      $region38: #{up_forward.5} parent=23 // pred_check_branch
        %364 = sbr.rel (%p362) target = $region40
      $region39: #{up_forward.5} parent=23 // pred_region
        %p365 = scmp.lt.s32.totalorder %s23, 1
        %s366 = scalar_select %p365, %s23, 1
        %p367 = scmp.lt.s32.totalorder %s24, 17
        %s368 = scalar_select %p367, %s24, 17
        %s369 = smul.addr %s368, 3
        %s370 = smul.addr %s366, 54
        %s371 = sadd.s32 %s369, %s370
        %s372 = smul.addr %s371, 8
        %s373 = scalar_lea.vmem %s3, %s372
      $region40: #{up_forward.5} parent=23 // pred_fallthru
        _
      // Predicated region
      $region41: #{up_forward.5} parent=23 // pred_check
        %p374 = pneg %p168
      $region42: #{up_forward.5} parent=23 // pred_check_branch
        %376 = sbr.rel (%p374) target = $region44
      $region43: #{up_forward.5} parent=23 // pred_region
        %s377 = sadd.s32 %s24, 1
        %p378 = scmp.lt.s32.totalorder %s23, 1
        %s379 = scalar_select %p378, %s23, 1
        %p380 = scmp.lt.s32.totalorder %s377, 17
        %s381 = scalar_select %p380, %s377, 17
        %s382 = smul.addr %s381, 3
        %s383 = smul.addr %s379, 54
        %s384 = sadd.s32 %s382, %s383
        %s385 = smul.addr %s384, 8
        %s386 = scalar_lea.vmem %s4, %s385
        %s387 = sadd.s32 %s24, 1
      $region44: #{up_forward.5} parent=23 // pred_fallthru
        _
      // Predicated region
      $region45: #{up_forward.5} parent=23 // pred_check
        %p388 = pneg %p198
      $region46: #{up_forward.5} parent=23 // pred_check_branch
        %390 = sbr.rel (%p388) target = $region48
      $region47: #{up_forward.5} parent=23 // pred_region
        %s391 = sadd.s32 %s24, 2
        %p392 = scmp.lt.s32.totalorder %s23, 1
        %s393 = scalar_select %p392, %s23, 1
        %p394 = scmp.lt.s32.totalorder %s391, 17
        %s395 = scalar_select %p394, %s391, 17
        %s396 = smul.addr %s395, 3
        %s397 = smul.addr %s393, 54
        %s398 = sadd.s32 %s396, %s397
        %s399 = smul.addr %s398, 8
        %s400 = scalar_lea.vmem %s5, %s399
        %s401 = sadd.s32 %s24, 2
      $region48: #{up_forward.5} parent=23 // pred_fallthru
        _
    $region24: #{up_forward.5} parent=5 // pred_fallthru
      _
    %p402 = scmp.le.s32.totalorder 1, %s16
    %p403 = scmp.lt.s32.totalorder %s16, 33
    %p404 = pnand %p402, %p403
    %p405 = pneg %p404
    // Predicated region
    $region49: #{up_forward.5} parent=5 // pred_check
      _
    $region50: #{up_forward.5} parent=5 // pred_check_branch
      %407 = sbr.rel (%p404) target = $region52
    $region51: #{up_forward.5} parent=5 // pred_region
      %s408 = ssub.s32 %s16, 1
      %p409 = scmp.lt.s32.totalorder %s25, 1
      %s410 = scalar_select %p409, %s25, 1
      %p411 = scmp.lt.s32.totalorder %s26, 17
      %s412 = scalar_select %p411, %s26, 17
      %s413 = smul.addr %s412, 3
      %s414 = smul.addr %s410, 54
      %s415 = sadd.s32 %s413, %s414
      %s416 = smul.addr %s415, 8
      %s417 = scalar_lea.vmem %s0, %s416
      %p418 = pneg %p56
      %p419 = pneg %p53
      %s420 = sadd.s32 %s26, 1
      %p421 = scmp.lt.s32.totalorder %s25, 1
      %s422 = scalar_select %p421, %s25, 1
      %p423 = scmp.lt.s32.totalorder %s420, 17
      %s424 = scalar_select %p423, %s420, 17
      %s425 = smul.addr %s424, 3
      %s426 = smul.addr %s422, 54
      %s427 = sadd.s32 %s425, %s426
      %s428 = smul.addr %s427, 8
      %s429 = scalar_lea.vmem %s1, %s428
      %p430 = pneg %p86
      %p431 = pneg %p83
      %s432 = sadd.s32 %s26, 2
      %p433 = scmp.lt.s32.totalorder %s25, 1
      %s434 = scalar_select %p433, %s25, 1
      %p435 = scmp.lt.s32.totalorder %s432, 17
      %s436 = scalar_select %p435, %s432, 17
      %s437 = smul.addr %s436, 3
      %s438 = smul.addr %s434, 54
      %s439 = sadd.s32 %s437, %s438
      %s440 = smul.addr %s439, 8
      %s441 = scalar_lea.vmem %s2, %s440
      %p442 = pneg %p116
      %p443 = pneg %p113
      %p444 = scmp.lt.s32.totalorder %s25, 1
      %s445 = scalar_select %p444, %s25, 1
      %p446 = scmp.lt.s32.totalorder %s26, 17
      %s447 = scalar_select %p446, %s26, 17
      %s448 = smul.addr %s447, 3
      %s449 = smul.addr %s445, 54
      %s450 = sadd.s32 %s448, %s449
      %s451 = smul.addr %s450, 8
      %s452 = scalar_lea.vmem %s3, %s451
      %p453 = pneg %p144
      %p454 = pneg %p141
      %s455 = sadd.s32 %s26, 1
      %p456 = scmp.lt.s32.totalorder %s25, 1
      %s457 = scalar_select %p456, %s25, 1
      %p458 = scmp.lt.s32.totalorder %s455, 17
      %s459 = scalar_select %p458, %s455, 17
      %s460 = smul.addr %s459, 3
      %s461 = smul.addr %s457, 54
      %s462 = sadd.s32 %s460, %s461
      %s463 = smul.addr %s462, 8
      %s464 = scalar_lea.vmem %s4, %s463
      %p465 = pneg %p174
      %p466 = pneg %p171
      %s467 = sadd.s32 %s26, 2
      %p468 = scmp.lt.s32.totalorder %s25, 1
      %s469 = scalar_select %p468, %s25, 1
      %p470 = scmp.lt.s32.totalorder %s467, 17
      %s471 = scalar_select %p470, %s467, 17
      %s472 = smul.addr %s471, 3
      %s473 = smul.addr %s469, 54
      %s474 = sadd.s32 %s472, %s473
      %s475 = smul.addr %s474, 8
      %s476 = scalar_lea.vmem %s5, %s475
      %p477 = pneg %p204
      %p478 = pneg %p201
      %p479 = pneg %p225
      %p480 = pneg %p222
      %p481 = pneg %p246
      %p482 = pneg %p243
      %p483 = pneg %p276
      %p484 = pneg %p273
      %s485 = sadd.s32 %s26, 1
      %p486 = scmp.lt.s32.totalorder %s25, 1
      %s487 = scalar_select %p486, %s25, 1
      %p488 = scmp.lt.s32.totalorder %s485, 17
      %s489 = scalar_select %p488, %s485, 17
      %s490 = smul.addr %s489, 3
      %s491 = smul.addr %s487, 54
      %s492 = sadd.s32 %s490, %s491
      %s493 = smul.addr %s492, 8
      %s494 = scalar_lea.vmem %s8, %s493
      %p495 = pneg %p297
      %p496 = pneg %p294
      %p497 = scmp.lt.s32.totalorder %s25, 1
      %s498 = scalar_select %p497, %s25, 1
      %p499 = scmp.lt.s32.totalorder %s26, 17
      %s500 = scalar_select %p499, %s26, 17
      %s501 = smul.addr %s500, 3
      %s502 = smul.addr %s498, 54
      %s503 = sadd.s32 %s501, %s502
      %s504 = smul.addr %s503, 8
      %s505 = scalar_lea.vmem %s0, %s504
      %s506 = sadd.s32 %s26, 1
      %p507 = scmp.lt.s32.totalorder %s25, 1
      %s508 = scalar_select %p507, %s25, 1
      %p509 = scmp.lt.s32.totalorder %s506, 17
      %s510 = scalar_select %p509, %s506, 17
      %s511 = smul.addr %s510, 3
      %s512 = smul.addr %s508, 54
      %s513 = sadd.s32 %s511, %s512
      %s514 = smul.addr %s513, 8
      %s515 = scalar_lea.vmem %s1, %s514
      %s516 = sadd.s32 %s26, 1
      %s517 = sadd.s32 %s26, 2
      %p518 = scmp.lt.s32.totalorder %s25, 1
      %s519 = scalar_select %p518, %s25, 1
      %p520 = scmp.lt.s32.totalorder %s517, 17
      %s521 = scalar_select %p520, %s517, 17
      %s522 = smul.addr %s521, 3
      %s523 = smul.addr %s519, 54
      %s524 = sadd.s32 %s522, %s523
      %s525 = smul.addr %s524, 8
      %s526 = scalar_lea.vmem %s2, %s525
      %s527 = sadd.s32 %s26, 2
      %p528 = scmp.lt.s32.totalorder %s25, 1
      %s529 = scalar_select %p528, %s25, 1
      %p530 = scmp.lt.s32.totalorder %s26, 17
      %s531 = scalar_select %p530, %s26, 17
      %s532 = smul.addr %s531, 3
      %s533 = smul.addr %s529, 54
      %s534 = sadd.s32 %s532, %s533
      %s535 = smul.addr %s534, 8
      %s536 = scalar_lea.vmem %s3, %s535
      %s537 = sadd.s32 %s26, 1
      %p538 = scmp.lt.s32.totalorder %s25, 1
      %s539 = scalar_select %p538, %s25, 1
      %p540 = scmp.lt.s32.totalorder %s537, 17
      %s541 = scalar_select %p540, %s537, 17
      %s542 = smul.addr %s541, 3
      %s543 = smul.addr %s539, 54
      %s544 = sadd.s32 %s542, %s543
      %s545 = smul.addr %s544, 8
      %s546 = scalar_lea.vmem %s4, %s545
      %s547 = sadd.s32 %s26, 1
      %s548 = sadd.s32 %s26, 2
      %p549 = scmp.lt.s32.totalorder %s25, 1
      %s550 = scalar_select %p549, %s25, 1
      %p551 = scmp.lt.s32.totalorder %s548, 17
      %s552 = scalar_select %p551, %s548, 17
      %s553 = smul.addr %s552, 3
      %s554 = smul.addr %s550, 54
      %s555 = sadd.s32 %s553, %s554
      %s556 = smul.addr %s555, 8
      %s557 = scalar_lea.vmem %s5, %s556
      %s558 = sadd.s32 %s26, 2
      %s559 = sadd.s32 %s26, 1
      %p560 = scmp.lt.s32.totalorder %s25, 1
      %s561 = scalar_select %p560, %s25, 1
      %p562 = scmp.lt.s32.totalorder %s559, 17
      %s563 = scalar_select %p562, %s559, 17
      %s564 = smul.addr %s563, 3
      %s565 = smul.addr %s561, 54
      %s566 = sadd.s32 %s564, %s565
      %s567 = smul.addr %s566, 8
      %s568 = scalar_lea.vmem %s8, %s567
      %s569 = sadd.s32 %s26, 1
      %v570 = vld [vmem:[%s505] sm:$0xff]
      %v571 = vld [vmem:[%s505 + $0x8] sm:$0xff]
      %v572 = vld [vmem:[%s505 + $0x10] sm:$0x3]
      %v573 = vld [vmem:[%s6] sm:$0xff]
      %v574 = vld [vmem:[%s6 + $0x8] sm:$0xff]
      %v575 = vld [vmem:[%s6 + $0x10] sm:$0xff]
      %v576 = vld [vmem:[%s6 + $0x18] sm:$0xff]
      %v577 = vld [vmem:[%s6 + $0x20] sm:$0xff]
      %v578 = vld [vmem:[%s6 + $0x28] sm:$0xff]
      %v579 = vld [vmem:[%s6 + $0x30] sm:$0xff]
      %v580 = vld [vmem:[%s6 + $0x38] sm:$0xff]
      %v581 = vld [vmem:[%s6 + $0x40] sm:$0xff]
      %v582 = vld [vmem:[%s6 + $0x48] sm:$0xff]
      %v583 = vld [vmem:[%s6 + $0x50] sm:$0xff]
      %v584 = vld [vmem:[%s6 + $0x58] sm:$0xff]
      %v585 = vld [vmem:[%s6 + $0x60] sm:$0xff]
      %v586 = vld [vmem:[%s6 + $0x68] sm:$0xff]
      %v587 = vld [vmem:[%s6 + $0x70] sm:$0xff]
      %v588 = vld [vmem:[%s6 + $0x78] sm:$0xff]
      %s589 = scalar_lea.vmem %s6, 128
      %v590 = vld [vmem:[%s589] sm:$0xff]
      %v591 = vld [vmem:[%s589 + $0x8] sm:$0xff]
      %v592 = vld [vmem:[%s589 + $0x10] sm:$0xff]
      %v593 = vld [vmem:[%s589 + $0x18] sm:$0xff]
      %v594 = vld [vmem:[%s589 + $0x20] sm:$0xff]
      %v595 = vld [vmem:[%s589 + $0x28] sm:$0xff]
      %v596 = vld [vmem:[%s589 + $0x30] sm:$0xff]
      %v597 = vld [vmem:[%s589 + $0x38] sm:$0xff]
      %v598 = vld [vmem:[%s589 + $0x40] sm:$0xff]
      %v599 = vld [vmem:[%s589 + $0x48] sm:$0xff]
      %v600 = vld [vmem:[%s589 + $0x50] sm:$0xff]
      %v601 = vld [vmem:[%s589 + $0x58] sm:$0xff]
      %v602 = vld [vmem:[%s589 + $0x60] sm:$0xff]
      %v603 = vld [vmem:[%s589 + $0x68] sm:$0xff]
      %v604 = vld [vmem:[%s589 + $0x70] sm:$0xff]
      %v605 = vld [vmem:[%s589 + $0x78] sm:$0xff]
      %vm609 = vcmask 1046528
      %v610 = vrot.slane %v570, 1
      %v611 = vrot.slane %v571, 1
      %v612 = vsel %vm609, %v610, %v611
      %v613 = vrot.slane %v572, 1
      %v614 = vsel %vm609, %v611, %v613
      %617 = vmatprep.subr.mxu0 0.0
      %618 = vmatpush1.msra.mxu0 %v590
      %619 = vmatprep.subr.mxu0 0.0
      %620 = vmatpush1.msra.mxu0 %v591
      %621 = vmatprep.subr.mxu0 0.0
      %622 = vmatpush1.msra.mxu0 %v592
      %623 = vmatprep.subr.mxu0 0.0
      %624 = vmatpush1.msra.mxu0 %v593
      %625 = vmatprep.subr.mxu0 0.0
      %626 = vmatpush1.msra.mxu0 %v594
      %627 = vmatprep.subr.mxu0 0.0
      %628 = vmatpush1.msra.mxu0 %v595
      %629 = vmatprep.subr.mxu0 0.0
      %630 = vmatpush1.msra.mxu0 %v596
      %631 = vmatprep.subr.mxu0 0.0
      %632 = vmatpush1.msra.mxu0 %v597
      %633 = vmatprep.subr.mxu0 0.0
      %634 = vmatpush1.msra.mxu0 %v598
      %635 = vmatprep.subr.mxu0 0.0
      %636 = vmatpush1.msra.mxu0 %v599
      %637 = vmatprep.subr.mxu0 0.0
      %638 = vmatpush1.msra.mxu0 %v600
      %639 = vmatprep.subr.mxu0 0.0
      %640 = vmatpush1.msra.mxu0 %v601
      %641 = vmatprep.subr.mxu0 0.0
      %642 = vmatpush1.msra.mxu0 %v602
      %643 = vmatprep.subr.mxu0 0.0
      %644 = vmatpush1.msra.mxu0 %v603
      %645 = vmatprep.subr.mxu0 0.0
      %646 = vmatpush1.msra.mxu0 %v604
      %647 = vmatprep.subr.mxu0 0.0
      %648 = vmatpush1.msra.mxu0 %v605
      %649 = vmatprep.subr.mxu0 0.0
      %650 = vmatpush1.msra.mxu0 0.0
      %651 = vmatprep.subr.mxu0 0.0
      %652 = vmatpush1.msra.mxu0 0.0
      %653 = vmatprep.subr.mxu0 0.0
      %654 = vmatpush1.msra.mxu0 0.0
      %655 = vmatprep.subr.mxu0 0.0
      %656 = vmatpush1.msra.mxu0 0.0
      %657 = vmatprep.subr.mxu0 0.0
      %658 = vmatpush1.msra.mxu0 0.0
      %659 = vmatprep.subr.mxu0 0.0
      %660 = vmatpush1.msra.mxu0 0.0
      %661 = vmatprep.subr.mxu0 0.0
      %662 = vmatpush1.msra.mxu0 0.0
      %663 = vmatprep.subr.mxu0 0.0
      %664 = vmatpush1.msra.mxu0 0.0
      %665 = vmatprep.subr.mxu0 0.0
      %666 = vmatpush1.msra.mxu0 0.0
      %667 = vmatprep.subr.mxu0 0.0
      %668 = vmatpush1.msra.mxu0 0.0
      %669 = vmatprep.subr.mxu0 0.0
      %670 = vmatpush1.msra.mxu0 0.0
      %671 = vmatprep.subr.mxu0 0.0
      %672 = vmatpush1.msra.mxu0 0.0
      %673 = vmatprep.subr.mxu0 0.0
      %674 = vmatpush1.msra.mxu0 0.0
      %675 = vmatprep.subr.mxu0 0.0
      %676 = vmatpush1.msra.mxu0 0.0
      %677 = vmatprep.subr.mxu0 0.0
      %678 = vmatpush1.msra.mxu0 0.0
      %679 = vmatprep.subr.mxu0 0.0
      %680 = vmatpush1.msra.mxu0 0.0
      %681 = vmatprep.mubr.f32.mxu0 0.0
      %682 = vmatmul.mubr.f32.gmra.mrb[0].mxu0 %v612
      %v683 = vpop.f32.mrb[0].mxu0
      %v684 = vadd.f32 0.0, %v683
      %v685 = vpop.f32.mrb[0].mxu0
      %686 = vmatprep.mubr.f32.mxu0 0.0
      %687 = vmatmul.mubr.f32.gmra.mrb[0].mxu0 %v614
      %v688 = vpop.f32.mrb[0].mxu0
      %v689 = vadd.f32 0.0, %v688
      %v690 = vpop.f32.mrb[0].mxu0
      %691 = vdwg.mxu0
      %692 = vmatprep.subr.mxu0 0.0
      %693 = vmatpush1.msra.mxu0 %v573
      %694 = vmatprep.subr.mxu0 0.0
      %695 = vmatpush1.msra.mxu0 %v574
      %696 = vmatprep.subr.mxu0 0.0
      %697 = vmatpush1.msra.mxu0 %v575
      %698 = vmatprep.subr.mxu0 0.0
      %699 = vmatpush1.msra.mxu0 %v576
      %700 = vmatprep.subr.mxu0 0.0
      %701 = vmatpush1.msra.mxu0 %v577
      %702 = vmatprep.subr.mxu0 0.0
      %703 = vmatpush1.msra.mxu0 %v578
      %704 = vmatprep.subr.mxu0 0.0
      %705 = vmatpush1.msra.mxu0 %v579
      %706 = vmatprep.subr.mxu0 0.0
      %707 = vmatpush1.msra.mxu0 %v580
      %708 = vmatprep.subr.mxu0 0.0
      %709 = vmatpush1.msra.mxu0 %v581
      %710 = vmatprep.subr.mxu0 0.0
      %711 = vmatpush1.msra.mxu0 %v582
      %712 = vmatprep.subr.mxu0 0.0
      %713 = vmatpush1.msra.mxu0 %v583
      %714 = vmatprep.subr.mxu0 0.0
      %715 = vmatpush1.msra.mxu0 %v584
      %716 = vmatprep.subr.mxu0 0.0
      %717 = vmatpush1.msra.mxu0 %v585
      %718 = vmatprep.subr.mxu0 0.0
      %719 = vmatpush1.msra.mxu0 %v586
      %720 = vmatprep.subr.mxu0 0.0
      %721 = vmatpush1.msra.mxu0 %v587
      %722 = vmatprep.subr.mxu0 0.0
      %723 = vmatpush1.msra.mxu0 %v588
      %724 = vmatprep.subr.mxu0 0.0
      %725 = vmatpush1.msra.mxu0 0.0
      %726 = vmatprep.subr.mxu0 0.0
      %727 = vmatpush1.msra.mxu0 0.0
      %728 = vmatprep.subr.mxu0 0.0
      %729 = vmatpush1.msra.mxu0 0.0
      %730 = vmatprep.subr.mxu0 0.0
      %731 = vmatpush1.msra.mxu0 0.0
      %732 = vmatprep.subr.mxu0 0.0
      %733 = vmatpush1.msra.mxu0 0.0
      %734 = vmatprep.subr.mxu0 0.0
      %735 = vmatpush1.msra.mxu0 0.0
      %736 = vmatprep.subr.mxu0 0.0
      %737 = vmatpush1.msra.mxu0 0.0
      %738 = vmatprep.subr.mxu0 0.0
      %739 = vmatpush1.msra.mxu0 0.0
      %740 = vmatprep.subr.mxu0 0.0
      %741 = vmatpush1.msra.mxu0 0.0
      %742 = vmatprep.subr.mxu0 0.0
      %743 = vmatpush1.msra.mxu0 0.0
      %744 = vmatprep.subr.mxu0 0.0
      %745 = vmatpush1.msra.mxu0 0.0
      %746 = vmatprep.subr.mxu0 0.0
      %747 = vmatpush1.msra.mxu0 0.0
      %748 = vmatprep.subr.mxu0 0.0
      %749 = vmatpush1.msra.mxu0 0.0
      %750 = vmatprep.subr.mxu0 0.0
      %751 = vmatpush1.msra.mxu0 0.0
      %752 = vmatprep.subr.mxu0 0.0
      %753 = vmatpush1.msra.mxu0 0.0
      %754 = vmatprep.subr.mxu0 0.0
      %755 = vmatpush1.msra.mxu0 0.0
      %756 = vmatprep.mubr.f32.mxu0 0.0
      %757 = vmatmul.mubr.f32.gmra.mrb[0].mxu0 %v570
      %v758 = vpop.f32.mrb[0].mxu0
      %v759 = vadd.f32 %v684, %v758
      %v760 = vpop.f32.mrb[0].mxu0
      %761 = vmatprep.mubr.f32.mxu0 0.0
      %762 = vmatmul.mubr.f32.gmra.mrb[0].mxu0 %v571
      %v763 = vpop.f32.mrb[0].mxu0
      %v764 = vadd.f32 %v689, %v763
      %v765 = vpop.f32.mrb[0].mxu0
      %766 = vdwg.mxu0
      %s767 = scalar_lea.vmem %s6, 256
      %v768 = vld [vmem:[%s767] sm:$0xff]
      %v769 = vld [vmem:[%s767 + $0x8] sm:$0xff]
      %v770 = vld [vmem:[%s767 + $0x10] sm:$0xff]
      %v771 = vld [vmem:[%s767 + $0x18] sm:$0xff]
      %v772 = vld [vmem:[%s767 + $0x20] sm:$0xff]
      %v773 = vld [vmem:[%s767 + $0x28] sm:$0xff]
      %v774 = vld [vmem:[%s767 + $0x30] sm:$0xff]
      %v775 = vld [vmem:[%s767 + $0x38] sm:$0xff]
      %v776 = vld [vmem:[%s767 + $0x40] sm:$0xff]
      %v777 = vld [vmem:[%s767 + $0x48] sm:$0xff]
      %v778 = vld [vmem:[%s767 + $0x50] sm:$0xff]
      %v779 = vld [vmem:[%s767 + $0x58] sm:$0xff]
      %v780 = vld [vmem:[%s767 + $0x60] sm:$0xff]
      %v781 = vld [vmem:[%s767 + $0x68] sm:$0xff]
      %v782 = vld [vmem:[%s767 + $0x70] sm:$0xff]
      %v783 = vld [vmem:[%s767 + $0x78] sm:$0xff]
      %vm784 = vcmask 1045504
      %v785 = vrot.slane %v570, 2
      %v786 = vrot.slane %v571, 2
      %v787 = vsel %vm784, %v785, %v786
      %v788 = vrot.slane %v572, 2
      %v789 = vsel %vm784, %v786, %v788
      %792 = vmatprep.subr.mxu0 0.0
      %793 = vmatpush1.msra.mxu0 %v768
      %794 = vmatprep.subr.mxu0 0.0
      %795 = vmatpush1.msra.mxu0 %v769
      %796 = vmatprep.subr.mxu0 0.0
      %797 = vmatpush1.msra.mxu0 %v770
      %798 = vmatprep.subr.mxu0 0.0
      %799 = vmatpush1.msra.mxu0 %v771
      %800 = vmatprep.subr.mxu0 0.0
      %801 = vmatpush1.msra.mxu0 %v772
      %802 = vmatprep.subr.mxu0 0.0
      %803 = vmatpush1.msra.mxu0 %v773
      %804 = vmatprep.subr.mxu0 0.0
      %805 = vmatpush1.msra.mxu0 %v774
      %806 = vmatprep.subr.mxu0 0.0
      %807 = vmatpush1.msra.mxu0 %v775
      %808 = vmatprep.subr.mxu0 0.0
      %809 = vmatpush1.msra.mxu0 %v776
      %810 = vmatprep.subr.mxu0 0.0
      %811 = vmatpush1.msra.mxu0 %v777
      %812 = vmatprep.subr.mxu0 0.0
      %813 = vmatpush1.msra.mxu0 %v778
      %814 = vmatprep.subr.mxu0 0.0
      %815 = vmatpush1.msra.mxu0 %v779
      %816 = vmatprep.subr.mxu0 0.0
      %817 = vmatpush1.msra.mxu0 %v780
      %818 = vmatprep.subr.mxu0 0.0
      %819 = vmatpush1.msra.mxu0 %v781
      %820 = vmatprep.subr.mxu0 0.0
      %821 = vmatpush1.msra.mxu0 %v782
      %822 = vmatprep.subr.mxu0 0.0
      %823 = vmatpush1.msra.mxu0 %v783
      %824 = vmatprep.subr.mxu0 0.0
      %825 = vmatpush1.msra.mxu0 0.0
      %826 = vmatprep.subr.mxu0 0.0
      %827 = vmatpush1.msra.mxu0 0.0
      %828 = vmatprep.subr.mxu0 0.0
      %829 = vmatpush1.msra.mxu0 0.0
      %830 = vmatprep.subr.mxu0 0.0
      %831 = vmatpush1.msra.mxu0 0.0
      %832 = vmatprep.subr.mxu0 0.0
      %833 = vmatpush1.msra.mxu0 0.0
      %834 = vmatprep.subr.mxu0 0.0
      %835 = vmatpush1.msra.mxu0 0.0
      %836 = vmatprep.subr.mxu0 0.0
      %837 = vmatpush1.msra.mxu0 0.0
      %838 = vmatprep.subr.mxu0 0.0
      %839 = vmatpush1.msra.mxu0 0.0
      %840 = vmatprep.subr.mxu0 0.0
      %841 = vmatpush1.msra.mxu0 0.0
      %842 = vmatprep.subr.mxu0 0.0
      %843 = vmatpush1.msra.mxu0 0.0
      %844 = vmatprep.subr.mxu0 0.0
      %845 = vmatpush1.msra.mxu0 0.0
      %846 = vmatprep.subr.mxu0 0.0
      %847 = vmatpush1.msra.mxu0 0.0
      %848 = vmatprep.subr.mxu0 0.0
      %849 = vmatpush1.msra.mxu0 0.0
      %850 = vmatprep.subr.mxu0 0.0
      %851 = vmatpush1.msra.mxu0 0.0
      %852 = vmatprep.subr.mxu0 0.0
      %853 = vmatpush1.msra.mxu0 0.0
      %854 = vmatprep.subr.mxu0 0.0
      %855 = vmatpush1.msra.mxu0 0.0
      %856 = vmatprep.mubr.f32.mxu0 0.0
      %857 = vmatmul.mubr.f32.gmra.mrb[0].mxu0 %v787
      %v858 = vpop.f32.mrb[0].mxu0
      %v859 = vadd.f32 0.0, %v858
      %v860 = vpop.f32.mrb[0].mxu0
      %861 = vmatprep.mubr.f32.mxu0 0.0
      %862 = vmatmul.mubr.f32.gmra.mrb[0].mxu0 %v789
      %v863 = vpop.f32.mrb[0].mxu0
      %v864 = vadd.f32 0.0, %v863
      %v865 = vpop.f32.mrb[0].mxu0
      %866 = vdwg.mxu0
      %v867 = vadd.f32 %v759, %v859
      %v868 = vadd.f32 %v764, %v864
      %v869 = vld [vmem:[%s515] sm:$0xff]
      %v870 = vld [vmem:[%s515 + $0x8] sm:$0xff]
      %v871 = vld [vmem:[%s515 + $0x10] sm:$0x3]
      %s872 = scalar_lea.vmem %s6, 384
      %v873 = vld [vmem:[%s872] sm:$0xff]
      %v874 = vld [vmem:[%s872 + $0x8] sm:$0xff]
      %v875 = vld [vmem:[%s872 + $0x10] sm:$0xff]
      %v876 = vld [vmem:[%s872 + $0x18] sm:$0xff]
      %v877 = vld [vmem:[%s872 + $0x20] sm:$0xff]
      %v878 = vld [vmem:[%s872 + $0x28] sm:$0xff]
      %v879 = vld [vmem:[%s872 + $0x30] sm:$0xff]
      %v880 = vld [vmem:[%s872 + $0x38] sm:$0xff]
      %v881 = vld [vmem:[%s872 + $0x40] sm:$0xff]
      %v882 = vld [vmem:[%s872 + $0x48] sm:$0xff]
      %v883 = vld [vmem:[%s872 + $0x50] sm:$0xff]
      %v884 = vld [vmem:[%s872 + $0x58] sm:$0xff]
      %v885 = vld [vmem:[%s872 + $0x60] sm:$0xff]
      %v886 = vld [vmem:[%s872 + $0x68] sm:$0xff]
      %v887 = vld [vmem:[%s872 + $0x70] sm:$0xff]
      %v888 = vld [vmem:[%s872 + $0x78] sm:$0xff]
      %889 = vmatprep.subr.mxu0 0.0
      %890 = vmatpush1.msra.mxu0 %v873
      %891 = vmatprep.subr.mxu0 0.0
      %892 = vmatpush1.msra.mxu0 %v874
      %893 = vmatprep.subr.mxu0 0.0
      %894 = vmatpush1.msra.mxu0 %v875
      %895 = vmatprep.subr.mxu0 0.0
      %896 = vmatpush1.msra.mxu0 %v876
      %897 = vmatprep.subr.mxu0 0.0
      %898 = vmatpush1.msra.mxu0 %v877
      %899 = vmatprep.subr.mxu0 0.0
      %900 = vmatpush1.msra.mxu0 %v878
      %901 = vmatprep.subr.mxu0 0.0
      %902 = vmatpush1.msra.mxu0 %v879
      %903 = vmatprep.subr.mxu0 0.0
      %904 = vmatpush1.msra.mxu0 %v880
      %905 = vmatprep.subr.mxu0 0.0
      %906 = vmatpush1.msra.mxu0 %v881
      %907 = vmatprep.subr.mxu0 0.0
      %908 = vmatpush1.msra.mxu0 %v882
      %909 = vmatprep.subr.mxu0 0.0
      %910 = vmatpush1.msra.mxu0 %v883
      %911 = vmatprep.subr.mxu0 0.0
      %912 = vmatpush1.msra.mxu0 %v884
      %913 = vmatprep.subr.mxu0 0.0
      %914 = vmatpush1.msra.mxu0 %v885
      %915 = vmatprep.subr.mxu0 0.0
      %916 = vmatpush1.msra.mxu0 %v886
      %917 = vmatprep.subr.mxu0 0.0
      %918 = vmatpush1.msra.mxu0 %v887
      %919 = vmatprep.subr.mxu0 0.0
      %920 = vmatpush1.msra.mxu0 %v888
      %921 = vmatprep.subr.mxu0 0.0
      %922 = vmatpush1.msra.mxu0 0.0
      %923 = vmatprep.subr.mxu0 0.0
      %924 = vmatpush1.msra.mxu0 0.0
      %925 = vmatprep.subr.mxu0 0.0
      %926 = vmatpush1.msra.mxu0 0.0
      %927 = vmatprep.subr.mxu0 0.0
      %928 = vmatpush1.msra.mxu0 0.0
      %929 = vmatprep.subr.mxu0 0.0
      %930 = vmatpush1.msra.mxu0 0.0
      %931 = vmatprep.subr.mxu0 0.0
      %932 = vmatpush1.msra.mxu0 0.0
      %933 = vmatprep.subr.mxu0 0.0
      %934 = vmatpush1.msra.mxu0 0.0
      %935 = vmatprep.subr.mxu0 0.0
      %936 = vmatpush1.msra.mxu0 0.0
      %937 = vmatprep.subr.mxu0 0.0
      %938 = vmatpush1.msra.mxu0 0.0
      %939 = vmatprep.subr.mxu0 0.0
      %940 = vmatpush1.msra.mxu0 0.0
      %941 = vmatprep.subr.mxu0 0.0
      %942 = vmatpush1.msra.mxu0 0.0
      %943 = vmatprep.subr.mxu0 0.0
      %944 = vmatpush1.msra.mxu0 0.0
      %945 = vmatprep.subr.mxu0 0.0
      %946 = vmatpush1.msra.mxu0 0.0
      %947 = vmatprep.subr.mxu0 0.0
      %948 = vmatpush1.msra.mxu0 0.0
      %949 = vmatprep.subr.mxu0 0.0
      %950 = vmatpush1.msra.mxu0 0.0
      %951 = vmatprep.subr.mxu0 0.0
      %952 = vmatpush1.msra.mxu0 0.0
      %953 = vmatprep.mubr.f32.mxu0 0.0
      %954 = vmatmul.mubr.f32.gmra.mrb[0].mxu0 %v869
      %v955 = vpop.f32.mrb[0].mxu0
      %v956 = vadd.f32 0.0, %v955
      %v957 = vpop.f32.mrb[0].mxu0
      %958 = vmatprep.mubr.f32.mxu0 0.0
      %959 = vmatmul.mubr.f32.gmra.mrb[0].mxu0 %v870
      %v960 = vpop.f32.mrb[0].mxu0
      %v961 = vadd.f32 0.0, %v960
      %v962 = vpop.f32.mrb[0].mxu0
      %963 = vdwg.mxu0
      %v964 = vadd.f32 %v867, %v956
      %v965 = vadd.f32 %v868, %v961
      %s966 = scalar_lea.vmem %s6, 512
      %v967 = vld [vmem:[%s966] sm:$0xff]
      %v968 = vld [vmem:[%s966 + $0x8] sm:$0xff]
      %v969 = vld [vmem:[%s966 + $0x10] sm:$0xff]
      %v970 = vld [vmem:[%s966 + $0x18] sm:$0xff]
      %v971 = vld [vmem:[%s966 + $0x20] sm:$0xff]
      %v972 = vld [vmem:[%s966 + $0x28] sm:$0xff]
      %v973 = vld [vmem:[%s966 + $0x30] sm:$0xff]
      %v974 = vld [vmem:[%s966 + $0x38] sm:$0xff]
      %v975 = vld [vmem:[%s966 + $0x40] sm:$0xff]
      %v976 = vld [vmem:[%s966 + $0x48] sm:$0xff]
      %v977 = vld [vmem:[%s966 + $0x50] sm:$0xff]
      %v978 = vld [vmem:[%s966 + $0x58] sm:$0xff]
      %v979 = vld [vmem:[%s966 + $0x60] sm:$0xff]
      %v980 = vld [vmem:[%s966 + $0x68] sm:$0xff]
      %v981 = vld [vmem:[%s966 + $0x70] sm:$0xff]
      %v982 = vld [vmem:[%s966 + $0x78] sm:$0xff]
      %v986 = vrot.slane %v869, 1
      %v987 = vrot.slane %v870, 1
      %v988 = vsel %vm609, %v986, %v987
      %v989 = vrot.slane %v871, 1
      %v990 = vsel %vm609, %v987, %v989
      %993 = vmatprep.subr.mxu0 0.0
      %994 = vmatpush1.msra.mxu0 %v967
      %995 = vmatprep.subr.mxu0 0.0
      %996 = vmatpush1.msra.mxu0 %v968
      %997 = vmatprep.subr.mxu0 0.0
      %998 = vmatpush1.msra.mxu0 %v969
      %999 = vmatprep.subr.mxu0 0.0
      %1000 = vmatpush1.msra.mxu0 %v970
      %1001 = vmatprep.subr.mxu0 0.0
      %1002 = vmatpush1.msra.mxu0 %v971
      %1003 = vmatprep.subr.mxu0 0.0
      %1004 = vmatpush1.msra.mxu0 %v972
      %1005 = vmatprep.subr.mxu0 0.0
      %1006 = vmatpush1.msra.mxu0 %v973
      %1007 = vmatprep.subr.mxu0 0.0
      %1008 = vmatpush1.msra.mxu0 %v974
      %1009 = vmatprep.subr.mxu0 0.0
      %1010 = vmatpush1.msra.mxu0 %v975
      %1011 = vmatprep.subr.mxu0 0.0
      %1012 = vmatpush1.msra.mxu0 %v976
      %1013 = vmatprep.subr.mxu0 0.0
      %1014 = vmatpush1.msra.mxu0 %v977
      %1015 = vmatprep.subr.mxu0 0.0
      %1016 = vmatpush1.msra.mxu0 %v978
      %1017 = vmatprep.subr.mxu0 0.0
      %1018 = vmatpush1.msra.mxu0 %v979
      %1019 = vmatprep.subr.mxu0 0.0
      %1020 = vmatpush1.msra.mxu0 %v980
      %1021 = vmatprep.subr.mxu0 0.0
      %1022 = vmatpush1.msra.mxu0 %v981
      %1023 = vmatprep.subr.mxu0 0.0
      %1024 = vmatpush1.msra.mxu0 %v982
      %1025 = vmatprep.subr.mxu0 0.0
      %1026 = vmatpush1.msra.mxu0 0.0
      %1027 = vmatprep.subr.mxu0 0.0
      %1028 = vmatpush1.msra.mxu0 0.0
      %1029 = vmatprep.subr.mxu0 0.0
      %1030 = vmatpush1.msra.mxu0 0.0
      %1031 = vmatprep.subr.mxu0 0.0
      %1032 = vmatpush1.msra.mxu0 0.0
      %1033 = vmatprep.subr.mxu0 0.0
      %1034 = vmatpush1.msra.mxu0 0.0
      %1035 = vmatprep.subr.mxu0 0.0
      %1036 = vmatpush1.msra.mxu0 0.0
      %1037 = vmatprep.subr.mxu0 0.0
      %1038 = vmatpush1.msra.mxu0 0.0
      %1039 = vmatprep.subr.mxu0 0.0
      %1040 = vmatpush1.msra.mxu0 0.0
      %1041 = vmatprep.subr.mxu0 0.0
      %1042 = vmatpush1.msra.mxu0 0.0
      %1043 = vmatprep.subr.mxu0 0.0
      %1044 = vmatpush1.msra.mxu0 0.0
      %1045 = vmatprep.subr.mxu0 0.0
      %1046 = vmatpush1.msra.mxu0 0.0
      %1047 = vmatprep.subr.mxu0 0.0
      %1048 = vmatpush1.msra.mxu0 0.0
      %1049 = vmatprep.subr.mxu0 0.0
      %1050 = vmatpush1.msra.mxu0 0.0
      %1051 = vmatprep.subr.mxu0 0.0
      %1052 = vmatpush1.msra.mxu0 0.0
      %1053 = vmatprep.subr.mxu0 0.0
      %1054 = vmatpush1.msra.mxu0 0.0
      %1055 = vmatprep.subr.mxu0 0.0
      %1056 = vmatpush1.msra.mxu0 0.0
      %1057 = vmatprep.mubr.f32.mxu0 0.0
      %1058 = vmatmul.mubr.f32.gmra.mrb[0].mxu0 %v988
      %v1059 = vpop.f32.mrb[0].mxu0
      %v1060 = vadd.f32 0.0, %v1059
      %v1061 = vpop.f32.mrb[0].mxu0
      %1062 = vmatprep.mubr.f32.mxu0 0.0
      %1063 = vmatmul.mubr.f32.gmra.mrb[0].mxu0 %v990
      %v1064 = vpop.f32.mrb[0].mxu0
      %v1065 = vadd.f32 0.0, %v1064
      %v1066 = vpop.f32.mrb[0].mxu0
      %1067 = vdwg.mxu0
      %v1068 = vadd.f32 %v964, %v1060
      %v1069 = vadd.f32 %v965, %v1065
      %s1070 = scalar_lea.vmem %s6, 640
      %v1071 = vld [vmem:[%s1070] sm:$0xff]
      %v1072 = vld [vmem:[%s1070 + $0x8] sm:$0xff]
      %v1073 = vld [vmem:[%s1070 + $0x10] sm:$0xff]
      %v1074 = vld [vmem:[%s1070 + $0x18] sm:$0xff]
      %v1075 = vld [vmem:[%s1070 + $0x20] sm:$0xff]
      %v1076 = vld [vmem:[%s1070 + $0x28] sm:$0xff]
      %v1077 = vld [vmem:[%s1070 + $0x30] sm:$0xff]
      %v1078 = vld [vmem:[%s1070 + $0x38] sm:$0xff]
      %v1079 = vld [vmem:[%s1070 + $0x40] sm:$0xff]
      %v1080 = vld [vmem:[%s1070 + $0x48] sm:$0xff]
      %v1081 = vld [vmem:[%s1070 + $0x50] sm:$0xff]
      %v1082 = vld [vmem:[%s1070 + $0x58] sm:$0xff]
      %v1083 = vld [vmem:[%s1070 + $0x60] sm:$0xff]
      %v1084 = vld [vmem:[%s1070 + $0x68] sm:$0xff]
      %v1085 = vld [vmem:[%s1070 + $0x70] sm:$0xff]
      %v1086 = vld [vmem:[%s1070 + $0x78] sm:$0xff]
      %v1087 = vrot.slane %v869, 2
      %v1088 = vrot.slane %v870, 2
      %v1089 = vsel %vm784, %v1087, %v1088
      %v1090 = vrot.slane %v871, 2
      %v1091 = vsel %vm784, %v1088, %v1090
      %1094 = vmatprep.subr.mxu0 0.0
      %1095 = vmatpush1.msra.mxu0 %v1071
      %1096 = vmatprep.subr.mxu0 0.0
      %1097 = vmatpush1.msra.mxu0 %v1072
      %1098 = vmatprep.subr.mxu0 0.0
      %1099 = vmatpush1.msra.mxu0 %v1073
      %1100 = vmatprep.subr.mxu0 0.0
      %1101 = vmatpush1.msra.mxu0 %v1074
      %1102 = vmatprep.subr.mxu0 0.0
      %1103 = vmatpush1.msra.mxu0 %v1075
      %1104 = vmatprep.subr.mxu0 0.0
      %1105 = vmatpush1.msra.mxu0 %v1076
      %1106 = vmatprep.subr.mxu0 0.0
      %1107 = vmatpush1.msra.mxu0 %v1077
      %1108 = vmatprep.subr.mxu0 0.0
      %1109 = vmatpush1.msra.mxu0 %v1078
      %1110 = vmatprep.subr.mxu0 0.0
      %1111 = vmatpush1.msra.mxu0 %v1079
      %1112 = vmatprep.subr.mxu0 0.0
      %1113 = vmatpush1.msra.mxu0 %v1080
      %1114 = vmatprep.subr.mxu0 0.0
      %1115 = vmatpush1.msra.mxu0 %v1081
      %1116 = vmatprep.subr.mxu0 0.0
      %1117 = vmatpush1.msra.mxu0 %v1082
      %1118 = vmatprep.subr.mxu0 0.0
      %1119 = vmatpush1.msra.mxu0 %v1083
      %1120 = vmatprep.subr.mxu0 0.0
      %1121 = vmatpush1.msra.mxu0 %v1084
      %1122 = vmatprep.subr.mxu0 0.0
      %1123 = vmatpush1.msra.mxu0 %v1085
      %1124 = vmatprep.subr.mxu0 0.0
      %1125 = vmatpush1.msra.mxu0 %v1086
      %1126 = vmatprep.subr.mxu0 0.0
      %1127 = vmatpush1.msra.mxu0 0.0
      %1128 = vmatprep.subr.mxu0 0.0
      %1129 = vmatpush1.msra.mxu0 0.0
      %1130 = vmatprep.subr.mxu0 0.0
      %1131 = vmatpush1.msra.mxu0 0.0
      %1132 = vmatprep.subr.mxu0 0.0
      %1133 = vmatpush1.msra.mxu0 0.0
      %1134 = vmatprep.subr.mxu0 0.0
      %1135 = vmatpush1.msra.mxu0 0.0
      %1136 = vmatprep.subr.mxu0 0.0
      %1137 = vmatpush1.msra.mxu0 0.0
      %1138 = vmatprep.subr.mxu0 0.0
      %1139 = vmatpush1.msra.mxu0 0.0
      %1140 = vmatprep.subr.mxu0 0.0
      %1141 = vmatpush1.msra.mxu0 0.0
      %1142 = vmatprep.subr.mxu0 0.0
      %1143 = vmatpush1.msra.mxu0 0.0
      %1144 = vmatprep.subr.mxu0 0.0
      %1145 = vmatpush1.msra.mxu0 0.0
      %1146 = vmatprep.subr.mxu0 0.0
      %1147 = vmatpush1.msra.mxu0 0.0
      %1148 = vmatprep.subr.mxu0 0.0
      %1149 = vmatpush1.msra.mxu0 0.0
      %1150 = vmatprep.subr.mxu0 0.0
      %1151 = vmatpush1.msra.mxu0 0.0
      %1152 = vmatprep.subr.mxu0 0.0
      %1153 = vmatpush1.msra.mxu0 0.0
      %1154 = vmatprep.subr.mxu0 0.0
      %1155 = vmatpush1.msra.mxu0 0.0
      %1156 = vmatprep.subr.mxu0 0.0
      %1157 = vmatpush1.msra.mxu0 0.0
      %1158 = vmatprep.mubr.f32.mxu0 0.0
      %1159 = vmatmul.mubr.f32.gmra.mrb[0].mxu0 %v1089
      %v1160 = vpop.f32.mrb[0].mxu0
      %v1161 = vadd.f32 0.0, %v1160
      %v1162 = vpop.f32.mrb[0].mxu0
      %1163 = vmatprep.mubr.f32.mxu0 0.0
      %1164 = vmatmul.mubr.f32.gmra.mrb[0].mxu0 %v1091
      %v1165 = vpop.f32.mrb[0].mxu0
      %v1166 = vadd.f32 0.0, %v1165
      %v1167 = vpop.f32.mrb[0].mxu0
      %1168 = vdwg.mxu0
      %v1169 = vadd.f32 %v1068, %v1161
      %v1170 = vadd.f32 %v1069, %v1166
      %v1171 = vld [vmem:[%s526] sm:$0xff]
      %v1172 = vld [vmem:[%s526 + $0x8] sm:$0xff]
      %v1173 = vld [vmem:[%s526 + $0x10] sm:$0x3]
      %s1174 = scalar_lea.vmem %s6, 768
      %v1175 = vld [vmem:[%s1174] sm:$0xff]
      %v1176 = vld [vmem:[%s1174 + $0x8] sm:$0xff]
      %v1177 = vld [vmem:[%s1174 + $0x10] sm:$0xff]
      %v1178 = vld [vmem:[%s1174 + $0x18] sm:$0xff]
      %v1179 = vld [vmem:[%s1174 + $0x20] sm:$0xff]
      %v1180 = vld [vmem:[%s1174 + $0x28] sm:$0xff]
      %v1181 = vld [vmem:[%s1174 + $0x30] sm:$0xff]
      %v1182 = vld [vmem:[%s1174 + $0x38] sm:$0xff]
      %v1183 = vld [vmem:[%s1174 + $0x40] sm:$0xff]
      %v1184 = vld [vmem:[%s1174 + $0x48] sm:$0xff]
      %v1185 = vld [vmem:[%s1174 + $0x50] sm:$0xff]
      %v1186 = vld [vmem:[%s1174 + $0x58] sm:$0xff]
      %v1187 = vld [vmem:[%s1174 + $0x60] sm:$0xff]
      %v1188 = vld [vmem:[%s1174 + $0x68] sm:$0xff]
      %v1189 = vld [vmem:[%s1174 + $0x70] sm:$0xff]
      %v1190 = vld [vmem:[%s1174 + $0x78] sm:$0xff]
      %1191 = vmatprep.subr.mxu0 0.0
      %1192 = vmatpush1.msra.mxu0 %v1175
      %1193 = vmatprep.subr.mxu0 0.0
      %1194 = vmatpush1.msra.mxu0 %v1176
      %1195 = vmatprep.subr.mxu0 0.0
      %1196 = vmatpush1.msra.mxu0 %v1177
      %1197 = vmatprep.subr.mxu0 0.0
      %1198 = vmatpush1.msra.mxu0 %v1178
      %1199 = vmatprep.subr.mxu0 0.0
      %1200 = vmatpush1.msra.mxu0 %v1179
      %1201 = vmatprep.subr.mxu0 0.0
      %1202 = vmatpush1.msra.mxu0 %v1180
      %1203 = vmatprep.subr.mxu0 0.0
      %1204 = vmatpush1.msra.mxu0 %v1181
      %1205 = vmatprep.subr.mxu0 0.0
      %1206 = vmatpush1.msra.mxu0 %v1182
      %1207 = vmatprep.subr.mxu0 0.0
      %1208 = vmatpush1.msra.mxu0 %v1183
      %1209 = vmatprep.subr.mxu0 0.0
      %1210 = vmatpush1.msra.mxu0 %v1184
      %1211 = vmatprep.subr.mxu0 0.0
      %1212 = vmatpush1.msra.mxu0 %v1185
      %1213 = vmatprep.subr.mxu0 0.0
      %1214 = vmatpush1.msra.mxu0 %v1186
      %1215 = vmatprep.subr.mxu0 0.0
      %1216 = vmatpush1.msra.mxu0 %v1187
      %1217 = vmatprep.subr.mxu0 0.0
      %1218 = vmatpush1.msra.mxu0 %v1188
      %1219 = vmatprep.subr.mxu0 0.0
      %1220 = vmatpush1.msra.mxu0 %v1189
      %1221 = vmatprep.subr.mxu0 0.0
      %1222 = vmatpush1.msra.mxu0 %v1190
      %1223 = vmatprep.subr.mxu0 0.0
      %1224 = vmatpush1.msra.mxu0 0.0
      %1225 = vmatprep.subr.mxu0 0.0
      %1226 = vmatpush1.msra.mxu0 0.0
      %1227 = vmatprep.subr.mxu0 0.0
      %1228 = vmatpush1.msra.mxu0 0.0
      %1229 = vmatprep.subr.mxu0 0.0
      %1230 = vmatpush1.msra.mxu0 0.0
      %1231 = vmatprep.subr.mxu0 0.0
      %1232 = vmatpush1.msra.mxu0 0.0
      %1233 = vmatprep.subr.mxu0 0.0
      %1234 = vmatpush1.msra.mxu0 0.0
      %1235 = vmatprep.subr.mxu0 0.0
      %1236 = vmatpush1.msra.mxu0 0.0
      %1237 = vmatprep.subr.mxu0 0.0
      %1238 = vmatpush1.msra.mxu0 0.0
      %1239 = vmatprep.subr.mxu0 0.0
      %1240 = vmatpush1.msra.mxu0 0.0
      %1241 = vmatprep.subr.mxu0 0.0
      %1242 = vmatpush1.msra.mxu0 0.0
      %1243 = vmatprep.subr.mxu0 0.0
      %1244 = vmatpush1.msra.mxu0 0.0
      %1245 = vmatprep.subr.mxu0 0.0
      %1246 = vmatpush1.msra.mxu0 0.0
      %1247 = vmatprep.subr.mxu0 0.0
      %1248 = vmatpush1.msra.mxu0 0.0
      %1249 = vmatprep.subr.mxu0 0.0
      %1250 = vmatpush1.msra.mxu0 0.0
      %1251 = vmatprep.subr.mxu0 0.0
      %1252 = vmatpush1.msra.mxu0 0.0
      %1253 = vmatprep.subr.mxu0 0.0
      %1254 = vmatpush1.msra.mxu0 0.0
      %1255 = vmatprep.mubr.f32.mxu0 0.0
      %1256 = vmatmul.mubr.f32.gmra.mrb[0].mxu0 %v1171
      %v1257 = vpop.f32.mrb[0].mxu0
      %v1258 = vadd.f32 0.0, %v1257
      %v1259 = vpop.f32.mrb[0].mxu0
      %1260 = vmatprep.mubr.f32.mxu0 0.0
      %1261 = vmatmul.mubr.f32.gmra.mrb[0].mxu0 %v1172
      %v1262 = vpop.f32.mrb[0].mxu0
      %v1263 = vadd.f32 0.0, %v1262
      %v1264 = vpop.f32.mrb[0].mxu0
      %1265 = vdwg.mxu0
      %v1266 = vadd.f32 %v1169, %v1258
      %v1267 = vadd.f32 %v1170, %v1263
      %s1268 = scalar_lea.vmem %s6, 896
      %v1269 = vld [vmem:[%s1268] sm:$0xff]
      %v1270 = vld [vmem:[%s1268 + $0x8] sm:$0xff]
      %v1271 = vld [vmem:[%s1268 + $0x10] sm:$0xff]
      %v1272 = vld [vmem:[%s1268 + $0x18] sm:$0xff]
      %v1273 = vld [vmem:[%s1268 + $0x20] sm:$0xff]
      %v1274 = vld [vmem:[%s1268 + $0x28] sm:$0xff]
      %v1275 = vld [vmem:[%s1268 + $0x30] sm:$0xff]
      %v1276 = vld [vmem:[%s1268 + $0x38] sm:$0xff]
      %v1277 = vld [vmem:[%s1268 + $0x40] sm:$0xff]
      %v1278 = vld [vmem:[%s1268 + $0x48] sm:$0xff]
      %v1279 = vld [vmem:[%s1268 + $0x50] sm:$0xff]
      %v1280 = vld [vmem:[%s1268 + $0x58] sm:$0xff]
      %v1281 = vld [vmem:[%s1268 + $0x60] sm:$0xff]
      %v1282 = vld [vmem:[%s1268 + $0x68] sm:$0xff]
      %v1283 = vld [vmem:[%s1268 + $0x70] sm:$0xff]
      %v1284 = vld [vmem:[%s1268 + $0x78] sm:$0xff]
      %v1288 = vrot.slane %v1171, 1
      %v1289 = vrot.slane %v1172, 1
      %v1290 = vsel %vm609, %v1288, %v1289
      %v1291 = vrot.slane %v1173, 1
      %v1292 = vsel %vm609, %v1289, %v1291
      %1295 = vmatprep.subr.mxu0 0.0
      %1296 = vmatpush1.msra.mxu0 %v1269
      %1297 = vmatprep.subr.mxu0 0.0
      %1298 = vmatpush1.msra.mxu0 %v1270
      %1299 = vmatprep.subr.mxu0 0.0
      %1300 = vmatpush1.msra.mxu0 %v1271
      %1301 = vmatprep.subr.mxu0 0.0
      %1302 = vmatpush1.msra.mxu0 %v1272
      %1303 = vmatprep.subr.mxu0 0.0
      %1304 = vmatpush1.msra.mxu0 %v1273
      %1305 = vmatprep.subr.mxu0 0.0
      %1306 = vmatpush1.msra.mxu0 %v1274
      %1307 = vmatprep.subr.mxu0 0.0
      %1308 = vmatpush1.msra.mxu0 %v1275
      %1309 = vmatprep.subr.mxu0 0.0
      %1310 = vmatpush1.msra.mxu0 %v1276
      %1311 = vmatprep.subr.mxu0 0.0
      %1312 = vmatpush1.msra.mxu0 %v1277
      %1313 = vmatprep.subr.mxu0 0.0
      %1314 = vmatpush1.msra.mxu0 %v1278
      %1315 = vmatprep.subr.mxu0 0.0
      %1316 = vmatpush1.msra.mxu0 %v1279
      %1317 = vmatprep.subr.mxu0 0.0
      %1318 = vmatpush1.msra.mxu0 %v1280
      %1319 = vmatprep.subr.mxu0 0.0
      %1320 = vmatpush1.msra.mxu0 %v1281
      %1321 = vmatprep.subr.mxu0 0.0
      %1322 = vmatpush1.msra.mxu0 %v1282
      %1323 = vmatprep.subr.mxu0 0.0
      %1324 = vmatpush1.msra.mxu0 %v1283
      %1325 = vmatprep.subr.mxu0 0.0
      %1326 = vmatpush1.msra.mxu0 %v1284
      %1327 = vmatprep.subr.mxu0 0.0
      %1328 = vmatpush1.msra.mxu0 0.0
      %1329 = vmatprep.subr.mxu0 0.0
      %1330 = vmatpush1.msra.mxu0 0.0
      %1331 = vmatprep.subr.mxu0 0.0
      %1332 = vmatpush1.msra.mxu0 0.0
      %1333 = vmatprep.subr.mxu0 0.0
      %1334 = vmatpush1.msra.mxu0 0.0
      %1335 = vmatprep.subr.mxu0 0.0
      %1336 = vmatpush1.msra.mxu0 0.0
      %1337 = vmatprep.subr.mxu0 0.0
      %1338 = vmatpush1.msra.mxu0 0.0
      %1339 = vmatprep.subr.mxu0 0.0
      %1340 = vmatpush1.msra.mxu0 0.0
      %1341 = vmatprep.subr.mxu0 0.0
      %1342 = vmatpush1.msra.mxu0 0.0
      %1343 = vmatprep.subr.mxu0 0.0
      %1344 = vmatpush1.msra.mxu0 0.0
      %1345 = vmatprep.subr.mxu0 0.0
      %1346 = vmatpush1.msra.mxu0 0.0
      %1347 = vmatprep.subr.mxu0 0.0
      %1348 = vmatpush1.msra.mxu0 0.0
      %1349 = vmatprep.subr.mxu0 0.0
      %1350 = vmatpush1.msra.mxu0 0.0
      %1351 = vmatprep.subr.mxu0 0.0
      %1352 = vmatpush1.msra.mxu0 0.0
      %1353 = vmatprep.subr.mxu0 0.0
      %1354 = vmatpush1.msra.mxu0 0.0
      %1355 = vmatprep.subr.mxu0 0.0
      %1356 = vmatpush1.msra.mxu0 0.0
      %1357 = vmatprep.subr.mxu0 0.0
      %1358 = vmatpush1.msra.mxu0 0.0
      %1359 = vmatprep.mubr.f32.mxu0 0.0
      %1360 = vmatmul.mubr.f32.gmra.mrb[0].mxu0 %v1290
      %v1361 = vpop.f32.mrb[0].mxu0
      %v1362 = vadd.f32 0.0, %v1361
      %v1363 = vpop.f32.mrb[0].mxu0
      %1364 = vmatprep.mubr.f32.mxu0 0.0
      %1365 = vmatmul.mubr.f32.gmra.mrb[0].mxu0 %v1292
      %v1366 = vpop.f32.mrb[0].mxu0
      %v1367 = vadd.f32 0.0, %v1366
      %v1368 = vpop.f32.mrb[0].mxu0
      %1369 = vdwg.mxu0
      %v1370 = vadd.f32 %v1266, %v1362
      %v1371 = vadd.f32 %v1267, %v1367
      %s1372 = scalar_lea.vmem %s6, 1024
      %v1373 = vld [vmem:[%s1372] sm:$0xff]
      %v1374 = vld [vmem:[%s1372 + $0x8] sm:$0xff]
      %v1375 = vld [vmem:[%s1372 + $0x10] sm:$0xff]
      %v1376 = vld [vmem:[%s1372 + $0x18] sm:$0xff]
      %v1377 = vld [vmem:[%s1372 + $0x20] sm:$0xff]
      %v1378 = vld [vmem:[%s1372 + $0x28] sm:$0xff]
      %v1379 = vld [vmem:[%s1372 + $0x30] sm:$0xff]
      %v1380 = vld [vmem:[%s1372 + $0x38] sm:$0xff]
      %v1381 = vld [vmem:[%s1372 + $0x40] sm:$0xff]
      %v1382 = vld [vmem:[%s1372 + $0x48] sm:$0xff]
      %v1383 = vld [vmem:[%s1372 + $0x50] sm:$0xff]
      %v1384 = vld [vmem:[%s1372 + $0x58] sm:$0xff]
      %v1385 = vld [vmem:[%s1372 + $0x60] sm:$0xff]
      %v1386 = vld [vmem:[%s1372 + $0x68] sm:$0xff]
      %v1387 = vld [vmem:[%s1372 + $0x70] sm:$0xff]
      %v1388 = vld [vmem:[%s1372 + $0x78] sm:$0xff]
      %v1389 = vrot.slane %v1171, 2
      %v1390 = vrot.slane %v1172, 2
      %v1391 = vsel %vm784, %v1389, %v1390
      %v1392 = vrot.slane %v1173, 2
      %v1393 = vsel %vm784, %v1390, %v1392
      %1396 = vmatprep.subr.mxu0 0.0
      %1397 = vmatpush1.msra.mxu0 %v1373
      %1398 = vmatprep.subr.mxu0 0.0
      %1399 = vmatpush1.msra.mxu0 %v1374
      %1400 = vmatprep.subr.mxu0 0.0
      %1401 = vmatpush1.msra.mxu0 %v1375
      %1402 = vmatprep.subr.mxu0 0.0
      %1403 = vmatpush1.msra.mxu0 %v1376
      %1404 = vmatprep.subr.mxu0 0.0
      %1405 = vmatpush1.msra.mxu0 %v1377
      %1406 = vmatprep.subr.mxu0 0.0
      %1407 = vmatpush1.msra.mxu0 %v1378
      %1408 = vmatprep.subr.mxu0 0.0
      %1409 = vmatpush1.msra.mxu0 %v1379
      %1410 = vmatprep.subr.mxu0 0.0
      %1411 = vmatpush1.msra.mxu0 %v1380
      %1412 = vmatprep.subr.mxu0 0.0
      %1413 = vmatpush1.msra.mxu0 %v1381
      %1414 = vmatprep.subr.mxu0 0.0
      %1415 = vmatpush1.msra.mxu0 %v1382
      %1416 = vmatprep.subr.mxu0 0.0
      %1417 = vmatpush1.msra.mxu0 %v1383
      %1418 = vmatprep.subr.mxu0 0.0
      %1419 = vmatpush1.msra.mxu0 %v1384
      %1420 = vmatprep.subr.mxu0 0.0
      %1421 = vmatpush1.msra.mxu0 %v1385
      %1422 = vmatprep.subr.mxu0 0.0
      %1423 = vmatpush1.msra.mxu0 %v1386
      %1424 = vmatprep.subr.mxu0 0.0
      %1425 = vmatpush1.msra.mxu0 %v1387
      %1426 = vmatprep.subr.mxu0 0.0
      %1427 = vmatpush1.msra.mxu0 %v1388
      %1428 = vmatprep.subr.mxu0 0.0
      %1429 = vmatpush1.msra.mxu0 0.0
      %1430 = vmatprep.subr.mxu0 0.0
      %1431 = vmatpush1.msra.mxu0 0.0
      %1432 = vmatprep.subr.mxu0 0.0
      %1433 = vmatpush1.msra.mxu0 0.0
      %1434 = vmatprep.subr.mxu0 0.0
      %1435 = vmatpush1.msra.mxu0 0.0
      %1436 = vmatprep.subr.mxu0 0.0
      %1437 = vmatpush1.msra.mxu0 0.0
      %1438 = vmatprep.subr.mxu0 0.0
      %1439 = vmatpush1.msra.mxu0 0.0
      %1440 = vmatprep.subr.mxu0 0.0
      %1441 = vmatpush1.msra.mxu0 0.0
      %1442 = vmatprep.subr.mxu0 0.0
      %1443 = vmatpush1.msra.mxu0 0.0
      %1444 = vmatprep.subr.mxu0 0.0
      %1445 = vmatpush1.msra.mxu0 0.0
      %1446 = vmatprep.subr.mxu0 0.0
      %1447 = vmatpush1.msra.mxu0 0.0
      %1448 = vmatprep.subr.mxu0 0.0
      %1449 = vmatpush1.msra.mxu0 0.0
      %1450 = vmatprep.subr.mxu0 0.0
      %1451 = vmatpush1.msra.mxu0 0.0
      %1452 = vmatprep.subr.mxu0 0.0
      %1453 = vmatpush1.msra.mxu0 0.0
      %1454 = vmatprep.subr.mxu0 0.0
      %1455 = vmatpush1.msra.mxu0 0.0
      %1456 = vmatprep.subr.mxu0 0.0
      %1457 = vmatpush1.msra.mxu0 0.0
      %1458 = vmatprep.subr.mxu0 0.0
      %1459 = vmatpush1.msra.mxu0 0.0
      %1460 = vmatprep.mubr.f32.mxu0 0.0
      %1461 = vmatmul.mubr.f32.gmra.mrb[0].mxu0 %v1391
      %v1462 = vpop.f32.mrb[0].mxu0
      %v1463 = vadd.f32 0.0, %v1462
      %v1464 = vpop.f32.mrb[0].mxu0
      %1465 = vmatprep.mubr.f32.mxu0 0.0
      %1466 = vmatmul.mubr.f32.gmra.mrb[0].mxu0 %v1393
      %v1467 = vpop.f32.mrb[0].mxu0
      %v1468 = vadd.f32 0.0, %v1467
      %v1469 = vpop.f32.mrb[0].mxu0
      %1470 = vdwg.mxu0
      %v1471 = vadd.f32 %v1370, %v1463
      %v1472 = vadd.f32 %v1371, %v1468
      %v1473 = vld [vmem:[%s536] sm:$0xff]
      %v1474 = vld [vmem:[%s536 + $0x8] sm:$0xff]
      %v1475 = vld [vmem:[%s536 + $0x10] sm:$0x3]
      %v1476 = vld [vmem:[%s7] sm:$0xff]
      %v1477 = vld [vmem:[%s7 + $0x8] sm:$0xff]
      %v1478 = vld [vmem:[%s7 + $0x10] sm:$0xff]
      %v1479 = vld [vmem:[%s7 + $0x18] sm:$0xff]
      %v1480 = vld [vmem:[%s7 + $0x20] sm:$0xff]
      %v1481 = vld [vmem:[%s7 + $0x28] sm:$0xff]
      %v1482 = vld [vmem:[%s7 + $0x30] sm:$0xff]
      %v1483 = vld [vmem:[%s7 + $0x38] sm:$0xff]
      %v1484 = vld [vmem:[%s7 + $0x40] sm:$0xff]
      %v1485 = vld [vmem:[%s7 + $0x48] sm:$0xff]
      %v1486 = vld [vmem:[%s7 + $0x50] sm:$0xff]
      %v1487 = vld [vmem:[%s7 + $0x58] sm:$0xff]
      %v1488 = vld [vmem:[%s7 + $0x60] sm:$0xff]
      %v1489 = vld [vmem:[%s7 + $0x68] sm:$0xff]
      %v1490 = vld [vmem:[%s7 + $0x70] sm:$0xff]
      %v1491 = vld [vmem:[%s7 + $0x78] sm:$0xff]
      %1492 = vmatprep.subr.mxu0 0.0
      %1493 = vmatpush1.msra.mxu0 %v1476
      %1494 = vmatprep.subr.mxu0 0.0
      %1495 = vmatpush1.msra.mxu0 %v1477
      %1496 = vmatprep.subr.mxu0 0.0
      %1497 = vmatpush1.msra.mxu0 %v1478
      %1498 = vmatprep.subr.mxu0 0.0
      %1499 = vmatpush1.msra.mxu0 %v1479
      %1500 = vmatprep.subr.mxu0 0.0
      %1501 = vmatpush1.msra.mxu0 %v1480
      %1502 = vmatprep.subr.mxu0 0.0
      %1503 = vmatpush1.msra.mxu0 %v1481
      %1504 = vmatprep.subr.mxu0 0.0
      %1505 = vmatpush1.msra.mxu0 %v1482
      %1506 = vmatprep.subr.mxu0 0.0
      %1507 = vmatpush1.msra.mxu0 %v1483
      %1508 = vmatprep.subr.mxu0 0.0
      %1509 = vmatpush1.msra.mxu0 %v1484
      %1510 = vmatprep.subr.mxu0 0.0
      %1511 = vmatpush1.msra.mxu0 %v1485
      %1512 = vmatprep.subr.mxu0 0.0
      %1513 = vmatpush1.msra.mxu0 %v1486
      %1514 = vmatprep.subr.mxu0 0.0
      %1515 = vmatpush1.msra.mxu0 %v1487
      %1516 = vmatprep.subr.mxu0 0.0
      %1517 = vmatpush1.msra.mxu0 %v1488
      %1518 = vmatprep.subr.mxu0 0.0
      %1519 = vmatpush1.msra.mxu0 %v1489
      %1520 = vmatprep.subr.mxu0 0.0
      %1521 = vmatpush1.msra.mxu0 %v1490
      %1522 = vmatprep.subr.mxu0 0.0
      %1523 = vmatpush1.msra.mxu0 %v1491
      %1524 = vmatprep.subr.mxu0 0.0
      %1525 = vmatpush1.msra.mxu0 0.0
      %1526 = vmatprep.subr.mxu0 0.0
      %1527 = vmatpush1.msra.mxu0 0.0
      %1528 = vmatprep.subr.mxu0 0.0
      %1529 = vmatpush1.msra.mxu0 0.0
      %1530 = vmatprep.subr.mxu0 0.0
      %1531 = vmatpush1.msra.mxu0 0.0
      %1532 = vmatprep.subr.mxu0 0.0
      %1533 = vmatpush1.msra.mxu0 0.0
      %1534 = vmatprep.subr.mxu0 0.0
      %1535 = vmatpush1.msra.mxu0 0.0
      %1536 = vmatprep.subr.mxu0 0.0
      %1537 = vmatpush1.msra.mxu0 0.0
      %1538 = vmatprep.subr.mxu0 0.0
      %1539 = vmatpush1.msra.mxu0 0.0
      %1540 = vmatprep.subr.mxu0 0.0
      %1541 = vmatpush1.msra.mxu0 0.0
      %1542 = vmatprep.subr.mxu0 0.0
      %1543 = vmatpush1.msra.mxu0 0.0
      %1544 = vmatprep.subr.mxu0 0.0
      %1545 = vmatpush1.msra.mxu0 0.0
      %1546 = vmatprep.subr.mxu0 0.0
      %1547 = vmatpush1.msra.mxu0 0.0
      %1548 = vmatprep.subr.mxu0 0.0
      %1549 = vmatpush1.msra.mxu0 0.0
      %1550 = vmatprep.subr.mxu0 0.0
      %1551 = vmatpush1.msra.mxu0 0.0
      %1552 = vmatprep.subr.mxu0 0.0
      %1553 = vmatpush1.msra.mxu0 0.0
      %1554 = vmatprep.subr.mxu0 0.0
      %1555 = vmatpush1.msra.mxu0 0.0
      %1556 = vmatprep.mubr.f32.mxu0 0.0
      %1557 = vmatmul.mubr.f32.gmra.mrb[0].mxu0 %v1473
      %v1558 = vpop.f32.mrb[0].mxu0
      %v1559 = vadd.f32 0.0, %v1558
      %v1560 = vpop.f32.mrb[0].mxu0
      %1561 = vmatprep.mubr.f32.mxu0 0.0
      %1562 = vmatmul.mubr.f32.gmra.mrb[0].mxu0 %v1474
      %v1563 = vpop.f32.mrb[0].mxu0
      %v1564 = vadd.f32 0.0, %v1563
      %v1565 = vpop.f32.mrb[0].mxu0
      %1566 = vdwg.mxu0
      %v1567 = vadd.f32 %v1471, %v1559
      %v1568 = vadd.f32 %v1472, %v1564
      %s1569 = scalar_lea.vmem %s7, 128
      %v1570 = vld [vmem:[%s1569] sm:$0xff]
      %v1571 = vld [vmem:[%s1569 + $0x8] sm:$0xff]
      %v1572 = vld [vmem:[%s1569 + $0x10] sm:$0xff]
      %v1573 = vld [vmem:[%s1569 + $0x18] sm:$0xff]
      %v1574 = vld [vmem:[%s1569 + $0x20] sm:$0xff]
      %v1575 = vld [vmem:[%s1569 + $0x28] sm:$0xff]
      %v1576 = vld [vmem:[%s1569 + $0x30] sm:$0xff]
      %v1577 = vld [vmem:[%s1569 + $0x38] sm:$0xff]
      %v1578 = vld [vmem:[%s1569 + $0x40] sm:$0xff]
      %v1579 = vld [vmem:[%s1569 + $0x48] sm:$0xff]
      %v1580 = vld [vmem:[%s1569 + $0x50] sm:$0xff]
      %v1581 = vld [vmem:[%s1569 + $0x58] sm:$0xff]
      %v1582 = vld [vmem:[%s1569 + $0x60] sm:$0xff]
      %v1583 = vld [vmem:[%s1569 + $0x68] sm:$0xff]
      %v1584 = vld [vmem:[%s1569 + $0x70] sm:$0xff]
      %v1585 = vld [vmem:[%s1569 + $0x78] sm:$0xff]
      %v1589 = vrot.slane %v1473, 1
      %v1590 = vrot.slane %v1474, 1
      %v1591 = vsel %vm609, %v1589, %v1590
      %v1592 = vrot.slane %v1475, 1
      %v1593 = vsel %vm609, %v1590, %v1592
      %1596 = vmatprep.subr.mxu0 0.0
      %1597 = vmatpush1.msra.mxu0 %v1570
      %1598 = vmatprep.subr.mxu0 0.0
      %1599 = vmatpush1.msra.mxu0 %v1571
      %1600 = vmatprep.subr.mxu0 0.0
      %1601 = vmatpush1.msra.mxu0 %v1572
      %1602 = vmatprep.subr.mxu0 0.0
      %1603 = vmatpush1.msra.mxu0 %v1573
      %1604 = vmatprep.subr.mxu0 0.0
      %1605 = vmatpush1.msra.mxu0 %v1574
      %1606 = vmatprep.subr.mxu0 0.0
      %1607 = vmatpush1.msra.mxu0 %v1575
      %1608 = vmatprep.subr.mxu0 0.0
      %1609 = vmatpush1.msra.mxu0 %v1576
      %1610 = vmatprep.subr.mxu0 0.0
      %1611 = vmatpush1.msra.mxu0 %v1577
      %1612 = vmatprep.subr.mxu0 0.0
      %1613 = vmatpush1.msra.mxu0 %v1578
      %1614 = vmatprep.subr.mxu0 0.0
      %1615 = vmatpush1.msra.mxu0 %v1579
      %1616 = vmatprep.subr.mxu0 0.0
      %1617 = vmatpush1.msra.mxu0 %v1580
      %1618 = vmatprep.subr.mxu0 0.0
      %1619 = vmatpush1.msra.mxu0 %v1581
      %1620 = vmatprep.subr.mxu0 0.0
      %1621 = vmatpush1.msra.mxu0 %v1582
      %1622 = vmatprep.subr.mxu0 0.0
      %1623 = vmatpush1.msra.mxu0 %v1583
      %1624 = vmatprep.subr.mxu0 0.0
      %1625 = vmatpush1.msra.mxu0 %v1584
      %1626 = vmatprep.subr.mxu0 0.0
      %1627 = vmatpush1.msra.mxu0 %v1585
      %1628 = vmatprep.subr.mxu0 0.0
      %1629 = vmatpush1.msra.mxu0 0.0
      %1630 = vmatprep.subr.mxu0 0.0
      %1631 = vmatpush1.msra.mxu0 0.0
      %1632 = vmatprep.subr.mxu0 0.0
      %1633 = vmatpush1.msra.mxu0 0.0
      %1634 = vmatprep.subr.mxu0 0.0
      %1635 = vmatpush1.msra.mxu0 0.0
      %1636 = vmatprep.subr.mxu0 0.0
      %1637 = vmatpush1.msra.mxu0 0.0
      %1638 = vmatprep.subr.mxu0 0.0
      %1639 = vmatpush1.msra.mxu0 0.0
      %1640 = vmatprep.subr.mxu0 0.0
      %1641 = vmatpush1.msra.mxu0 0.0
      %1642 = vmatprep.subr.mxu0 0.0
      %1643 = vmatpush1.msra.mxu0 0.0
      %1644 = vmatprep.subr.mxu0 0.0
      %1645 = vmatpush1.msra.mxu0 0.0
      %1646 = vmatprep.subr.mxu0 0.0
      %1647 = vmatpush1.msra.mxu0 0.0
      %1648 = vmatprep.subr.mxu0 0.0
      %1649 = vmatpush1.msra.mxu0 0.0
      %1650 = vmatprep.subr.mxu0 0.0
      %1651 = vmatpush1.msra.mxu0 0.0
      %1652 = vmatprep.subr.mxu0 0.0
      %1653 = vmatpush1.msra.mxu0 0.0
      %1654 = vmatprep.subr.mxu0 0.0
      %1655 = vmatpush1.msra.mxu0 0.0
      %1656 = vmatprep.subr.mxu0 0.0
      %1657 = vmatpush1.msra.mxu0 0.0
      %1658 = vmatprep.subr.mxu0 0.0
      %1659 = vmatpush1.msra.mxu0 0.0
      %1660 = vmatprep.mubr.f32.mxu0 0.0
      %1661 = vmatmul.mubr.f32.gmra.mrb[0].mxu0 %v1591
      %v1662 = vpop.f32.mrb[0].mxu0
      %v1663 = vadd.f32 0.0, %v1662
      %v1664 = vpop.f32.mrb[0].mxu0
      %1665 = vmatprep.mubr.f32.mxu0 0.0
      %1666 = vmatmul.mubr.f32.gmra.mrb[0].mxu0 %v1593
      %v1667 = vpop.f32.mrb[0].mxu0
      %v1668 = vadd.f32 0.0, %v1667
      %v1669 = vpop.f32.mrb[0].mxu0
      %1670 = vdwg.mxu0
      %v1671 = vadd.f32 %v1567, %v1663
      %v1672 = vadd.f32 %v1568, %v1668
      %s1673 = scalar_lea.vmem %s7, 256
      %v1674 = vld [vmem:[%s1673] sm:$0xff]
      %v1675 = vld [vmem:[%s1673 + $0x8] sm:$0xff]
      %v1676 = vld [vmem:[%s1673 + $0x10] sm:$0xff]
      %v1677 = vld [vmem:[%s1673 + $0x18] sm:$0xff]
      %v1678 = vld [vmem:[%s1673 + $0x20] sm:$0xff]
      %v1679 = vld [vmem:[%s1673 + $0x28] sm:$0xff]
      %v1680 = vld [vmem:[%s1673 + $0x30] sm:$0xff]
      %v1681 = vld [vmem:[%s1673 + $0x38] sm:$0xff]
      %v1682 = vld [vmem:[%s1673 + $0x40] sm:$0xff]
      %v1683 = vld [vmem:[%s1673 + $0x48] sm:$0xff]
      %v1684 = vld [vmem:[%s1673 + $0x50] sm:$0xff]
      %v1685 = vld [vmem:[%s1673 + $0x58] sm:$0xff]
      %v1686 = vld [vmem:[%s1673 + $0x60] sm:$0xff]
      %v1687 = vld [vmem:[%s1673 + $0x68] sm:$0xff]
      %v1688 = vld [vmem:[%s1673 + $0x70] sm:$0xff]
      %v1689 = vld [vmem:[%s1673 + $0x78] sm:$0xff]
      %v1690 = vrot.slane %v1473, 2
      %v1691 = vrot.slane %v1474, 2
      %v1692 = vsel %vm784, %v1690, %v1691
      %v1693 = vrot.slane %v1475, 2
      %v1694 = vsel %vm784, %v1691, %v1693
      %1697 = vmatprep.subr.mxu0 0.0
      %1698 = vmatpush1.msra.mxu0 %v1674
      %1699 = vmatprep.subr.mxu0 0.0
      %1700 = vmatpush1.msra.mxu0 %v1675
      %1701 = vmatprep.subr.mxu0 0.0
      %1702 = vmatpush1.msra.mxu0 %v1676
      %1703 = vmatprep.subr.mxu0 0.0
      %1704 = vmatpush1.msra.mxu0 %v1677
      %1705 = vmatprep.subr.mxu0 0.0
      %1706 = vmatpush1.msra.mxu0 %v1678
      %1707 = vmatprep.subr.mxu0 0.0
      %1708 = vmatpush1.msra.mxu0 %v1679
      %1709 = vmatprep.subr.mxu0 0.0
      %1710 = vmatpush1.msra.mxu0 %v1680
      %1711 = vmatprep.subr.mxu0 0.0
      %1712 = vmatpush1.msra.mxu0 %v1681
      %1713 = vmatprep.subr.mxu0 0.0
      %1714 = vmatpush1.msra.mxu0 %v1682
      %1715 = vmatprep.subr.mxu0 0.0
      %1716 = vmatpush1.msra.mxu0 %v1683
      %1717 = vmatprep.subr.mxu0 0.0
      %1718 = vmatpush1.msra.mxu0 %v1684
      %1719 = vmatprep.subr.mxu0 0.0
      %1720 = vmatpush1.msra.mxu0 %v1685
      %1721 = vmatprep.subr.mxu0 0.0
      %1722 = vmatpush1.msra.mxu0 %v1686
      %1723 = vmatprep.subr.mxu0 0.0
      %1724 = vmatpush1.msra.mxu0 %v1687
      %1725 = vmatprep.subr.mxu0 0.0
      %1726 = vmatpush1.msra.mxu0 %v1688
      %1727 = vmatprep.subr.mxu0 0.0
      %1728 = vmatpush1.msra.mxu0 %v1689
      %1729 = vmatprep.subr.mxu0 0.0
      %1730 = vmatpush1.msra.mxu0 0.0
      %1731 = vmatprep.subr.mxu0 0.0
      %1732 = vmatpush1.msra.mxu0 0.0
      %1733 = vmatprep.subr.mxu0 0.0
      %1734 = vmatpush1.msra.mxu0 0.0
      %1735 = vmatprep.subr.mxu0 0.0
      %1736 = vmatpush1.msra.mxu0 0.0
      %1737 = vmatprep.subr.mxu0 0.0
      %1738 = vmatpush1.msra.mxu0 0.0
      %1739 = vmatprep.subr.mxu0 0.0
      %1740 = vmatpush1.msra.mxu0 0.0
      %1741 = vmatprep.subr.mxu0 0.0
      %1742 = vmatpush1.msra.mxu0 0.0
      %1743 = vmatprep.subr.mxu0 0.0
      %1744 = vmatpush1.msra.mxu0 0.0
      %1745 = vmatprep.subr.mxu0 0.0
      %1746 = vmatpush1.msra.mxu0 0.0
      %1747 = vmatprep.subr.mxu0 0.0
      %1748 = vmatpush1.msra.mxu0 0.0
      %1749 = vmatprep.subr.mxu0 0.0
      %1750 = vmatpush1.msra.mxu0 0.0
      %1751 = vmatprep.subr.mxu0 0.0
      %1752 = vmatpush1.msra.mxu0 0.0
      %1753 = vmatprep.subr.mxu0 0.0
      %1754 = vmatpush1.msra.mxu0 0.0
      %1755 = vmatprep.subr.mxu0 0.0
      %1756 = vmatpush1.msra.mxu0 0.0
      %1757 = vmatprep.subr.mxu0 0.0
      %1758 = vmatpush1.msra.mxu0 0.0
      %1759 = vmatprep.subr.mxu0 0.0
      %1760 = vmatpush1.msra.mxu0 0.0
      %1761 = vmatprep.mubr.f32.mxu0 0.0
      %1762 = vmatmul.mubr.f32.gmra.mrb[0].mxu0 %v1692
      %v1763 = vpop.f32.mrb[0].mxu0
      %v1764 = vadd.f32 0.0, %v1763
      %v1765 = vpop.f32.mrb[0].mxu0
      %1766 = vmatprep.mubr.f32.mxu0 0.0
      %1767 = vmatmul.mubr.f32.gmra.mrb[0].mxu0 %v1694
      %v1768 = vpop.f32.mrb[0].mxu0
      %v1769 = vadd.f32 0.0, %v1768
      %v1770 = vpop.f32.mrb[0].mxu0
      %1771 = vdwg.mxu0
      %v1772 = vadd.f32 %v1671, %v1764
      %v1773 = vadd.f32 %v1672, %v1769
      %v1774 = vld [vmem:[%s546] sm:$0xff]
      %v1775 = vld [vmem:[%s546 + $0x8] sm:$0xff]
      %v1776 = vld [vmem:[%s546 + $0x10] sm:$0x3]
      %s1777 = scalar_lea.vmem %s7, 384
      %v1778 = vld [vmem:[%s1777] sm:$0xff]
      %v1779 = vld [vmem:[%s1777 + $0x8] sm:$0xff]
      %v1780 = vld [vmem:[%s1777 + $0x10] sm:$0xff]
      %v1781 = vld [vmem:[%s1777 + $0x18] sm:$0xff]
      %v1782 = vld [vmem:[%s1777 + $0x20] sm:$0xff]
      %v1783 = vld [vmem:[%s1777 + $0x28] sm:$0xff]
      %v1784 = vld [vmem:[%s1777 + $0x30] sm:$0xff]
      %v1785 = vld [vmem:[%s1777 + $0x38] sm:$0xff]
      %v1786 = vld [vmem:[%s1777 + $0x40] sm:$0xff]
      %v1787 = vld [vmem:[%s1777 + $0x48] sm:$0xff]
      %v1788 = vld [vmem:[%s1777 + $0x50] sm:$0xff]
      %v1789 = vld [vmem:[%s1777 + $0x58] sm:$0xff]
      %v1790 = vld [vmem:[%s1777 + $0x60] sm:$0xff]
      %v1791 = vld [vmem:[%s1777 + $0x68] sm:$0xff]
      %v1792 = vld [vmem:[%s1777 + $0x70] sm:$0xff]
      %v1793 = vld [vmem:[%s1777 + $0x78] sm:$0xff]
      %1794 = vmatprep.subr.mxu0 0.0
      %1795 = vmatpush1.msra.mxu0 %v1778
      %1796 = vmatprep.subr.mxu0 0.0
      %1797 = vmatpush1.msra.mxu0 %v1779
      %1798 = vmatprep.subr.mxu0 0.0
      %1799 = vmatpush1.msra.mxu0 %v1780
      %1800 = vmatprep.subr.mxu0 0.0
      %1801 = vmatpush1.msra.mxu0 %v1781
      %1802 = vmatprep.subr.mxu0 0.0
      %1803 = vmatpush1.msra.mxu0 %v1782
      %1804 = vmatprep.subr.mxu0 0.0
      %1805 = vmatpush1.msra.mxu0 %v1783
      %1806 = vmatprep.subr.mxu0 0.0
      %1807 = vmatpush1.msra.mxu0 %v1784
      %1808 = vmatprep.subr.mxu0 0.0
      %1809 = vmatpush1.msra.mxu0 %v1785
      %1810 = vmatprep.subr.mxu0 0.0
      %1811 = vmatpush1.msra.mxu0 %v1786
      %1812 = vmatprep.subr.mxu0 0.0
      %1813 = vmatpush1.msra.mxu0 %v1787
      %1814 = vmatprep.subr.mxu0 0.0
      %1815 = vmatpush1.msra.mxu0 %v1788
      %1816 = vmatprep.subr.mxu0 0.0
      %1817 = vmatpush1.msra.mxu0 %v1789
      %1818 = vmatprep.subr.mxu0 0.0
      %1819 = vmatpush1.msra.mxu0 %v1790
      %1820 = vmatprep.subr.mxu0 0.0
      %1821 = vmatpush1.msra.mxu0 %v1791
      %1822 = vmatprep.subr.mxu0 0.0
      %1823 = vmatpush1.msra.mxu0 %v1792
      %1824 = vmatprep.subr.mxu0 0.0
      %1825 = vmatpush1.msra.mxu0 %v1793
      %1826 = vmatprep.subr.mxu0 0.0
      %1827 = vmatpush1.msra.mxu0 0.0
      %1828 = vmatprep.subr.mxu0 0.0
      %1829 = vmatpush1.msra.mxu0 0.0
      %1830 = vmatprep.subr.mxu0 0.0
      %1831 = vmatpush1.msra.mxu0 0.0
      %1832 = vmatprep.subr.mxu0 0.0
      %1833 = vmatpush1.msra.mxu0 0.0
      %1834 = vmatprep.subr.mxu0 0.0
      %1835 = vmatpush1.msra.mxu0 0.0
      %1836 = vmatprep.subr.mxu0 0.0
      %1837 = vmatpush1.msra.mxu0 0.0
      %1838 = vmatprep.subr.mxu0 0.0
      %1839 = vmatpush1.msra.mxu0 0.0
      %1840 = vmatprep.subr.mxu0 0.0
      %1841 = vmatpush1.msra.mxu0 0.0
      %1842 = vmatprep.subr.mxu0 0.0
      %1843 = vmatpush1.msra.mxu0 0.0
      %1844 = vmatprep.subr.mxu0 0.0
      %1845 = vmatpush1.msra.mxu0 0.0
      %1846 = vmatprep.subr.mxu0 0.0
      %1847 = vmatpush1.msra.mxu0 0.0
      %1848 = vmatprep.subr.mxu0 0.0
      %1849 = vmatpush1.msra.mxu0 0.0
      %1850 = vmatprep.subr.mxu0 0.0
      %1851 = vmatpush1.msra.mxu0 0.0
      %1852 = vmatprep.subr.mxu0 0.0
      %1853 = vmatpush1.msra.mxu0 0.0
      %1854 = vmatprep.subr.mxu0 0.0
      %1855 = vmatpush1.msra.mxu0 0.0
      %1856 = vmatprep.subr.mxu0 0.0
      %1857 = vmatpush1.msra.mxu0 0.0
      %1858 = vmatprep.mubr.f32.mxu0 0.0
      %1859 = vmatmul.mubr.f32.gmra.mrb[0].mxu0 %v1774
      %v1860 = vpop.f32.mrb[0].mxu0
      %v1861 = vadd.f32 0.0, %v1860
      %v1862 = vpop.f32.mrb[0].mxu0
      %1863 = vmatprep.mubr.f32.mxu0 0.0
      %1864 = vmatmul.mubr.f32.gmra.mrb[0].mxu0 %v1775
      %v1865 = vpop.f32.mrb[0].mxu0
      %v1866 = vadd.f32 0.0, %v1865
      %v1867 = vpop.f32.mrb[0].mxu0
      %1868 = vdwg.mxu0
      %v1869 = vadd.f32 %v1772, %v1861
      %v1870 = vadd.f32 %v1773, %v1866
      %s1871 = scalar_lea.vmem %s7, 512
      %v1872 = vld [vmem:[%s1871] sm:$0xff]
      %v1873 = vld [vmem:[%s1871 + $0x8] sm:$0xff]
      %v1874 = vld [vmem:[%s1871 + $0x10] sm:$0xff]
      %v1875 = vld [vmem:[%s1871 + $0x18] sm:$0xff]
      %v1876 = vld [vmem:[%s1871 + $0x20] sm:$0xff]
      %v1877 = vld [vmem:[%s1871 + $0x28] sm:$0xff]
      %v1878 = vld [vmem:[%s1871 + $0x30] sm:$0xff]
      %v1879 = vld [vmem:[%s1871 + $0x38] sm:$0xff]
      %v1880 = vld [vmem:[%s1871 + $0x40] sm:$0xff]
      %v1881 = vld [vmem:[%s1871 + $0x48] sm:$0xff]
      %v1882 = vld [vmem:[%s1871 + $0x50] sm:$0xff]
      %v1883 = vld [vmem:[%s1871 + $0x58] sm:$0xff]
      %v1884 = vld [vmem:[%s1871 + $0x60] sm:$0xff]
      %v1885 = vld [vmem:[%s1871 + $0x68] sm:$0xff]
      %v1886 = vld [vmem:[%s1871 + $0x70] sm:$0xff]
      %v1887 = vld [vmem:[%s1871 + $0x78] sm:$0xff]
      %v1891 = vrot.slane %v1774, 1
      %v1892 = vrot.slane %v1775, 1
      %v1893 = vsel %vm609, %v1891, %v1892
      %v1894 = vrot.slane %v1776, 1
      %v1895 = vsel %vm609, %v1892, %v1894
      %1898 = vmatprep.subr.mxu0 0.0
      %1899 = vmatpush1.msra.mxu0 %v1872
      %1900 = vmatprep.subr.mxu0 0.0
      %1901 = vmatpush1.msra.mxu0 %v1873
      %1902 = vmatprep.subr.mxu0 0.0
      %1903 = vmatpush1.msra.mxu0 %v1874
      %1904 = vmatprep.subr.mxu0 0.0
      %1905 = vmatpush1.msra.mxu0 %v1875
      %1906 = vmatprep.subr.mxu0 0.0
      %1907 = vmatpush1.msra.mxu0 %v1876
      %1908 = vmatprep.subr.mxu0 0.0
      %1909 = vmatpush1.msra.mxu0 %v1877
      %1910 = vmatprep.subr.mxu0 0.0
      %1911 = vmatpush1.msra.mxu0 %v1878
      %1912 = vmatprep.subr.mxu0 0.0
      %1913 = vmatpush1.msra.mxu0 %v1879
      %1914 = vmatprep.subr.mxu0 0.0
      %1915 = vmatpush1.msra.mxu0 %v1880
      %1916 = vmatprep.subr.mxu0 0.0
      %1917 = vmatpush1.msra.mxu0 %v1881
      %1918 = vmatprep.subr.mxu0 0.0
      %1919 = vmatpush1.msra.mxu0 %v1882
      %1920 = vmatprep.subr.mxu0 0.0
      %1921 = vmatpush1.msra.mxu0 %v1883
      %1922 = vmatprep.subr.mxu0 0.0
      %1923 = vmatpush1.msra.mxu0 %v1884
      %1924 = vmatprep.subr.mxu0 0.0
      %1925 = vmatpush1.msra.mxu0 %v1885
      %1926 = vmatprep.subr.mxu0 0.0
      %1927 = vmatpush1.msra.mxu0 %v1886
      %1928 = vmatprep.subr.mxu0 0.0
      %1929 = vmatpush1.msra.mxu0 %v1887
      %1930 = vmatprep.subr.mxu0 0.0
      %1931 = vmatpush1.msra.mxu0 0.0
      %1932 = vmatprep.subr.mxu0 0.0
      %1933 = vmatpush1.msra.mxu0 0.0
      %1934 = vmatprep.subr.mxu0 0.0
      %1935 = vmatpush1.msra.mxu0 0.0
      %1936 = vmatprep.subr.mxu0 0.0
      %1937 = vmatpush1.msra.mxu0 0.0
      %1938 = vmatprep.subr.mxu0 0.0
      %1939 = vmatpush1.msra.mxu0 0.0
      %1940 = vmatprep.subr.mxu0 0.0
      %1941 = vmatpush1.msra.mxu0 0.0
      %1942 = vmatprep.subr.mxu0 0.0
      %1943 = vmatpush1.msra.mxu0 0.0
      %1944 = vmatprep.subr.mxu0 0.0
      %1945 = vmatpush1.msra.mxu0 0.0
      %1946 = vmatprep.subr.mxu0 0.0
      %1947 = vmatpush1.msra.mxu0 0.0
      %1948 = vmatprep.subr.mxu0 0.0
      %1949 = vmatpush1.msra.mxu0 0.0
      %1950 = vmatprep.subr.mxu0 0.0
      %1951 = vmatpush1.msra.mxu0 0.0
      %1952 = vmatprep.subr.mxu0 0.0
      %1953 = vmatpush1.msra.mxu0 0.0
      %1954 = vmatprep.subr.mxu0 0.0
      %1955 = vmatpush1.msra.mxu0 0.0
      %1956 = vmatprep.subr.mxu0 0.0
      %1957 = vmatpush1.msra.mxu0 0.0
      %1958 = vmatprep.subr.mxu0 0.0
      %1959 = vmatpush1.msra.mxu0 0.0
      %1960 = vmatprep.subr.mxu0 0.0
      %1961 = vmatpush1.msra.mxu0 0.0
      %1962 = vmatprep.mubr.f32.mxu0 0.0
      %1963 = vmatmul.mubr.f32.gmra.mrb[0].mxu0 %v1893
      %v1964 = vpop.f32.mrb[0].mxu0
      %v1965 = vadd.f32 0.0, %v1964
      %v1966 = vpop.f32.mrb[0].mxu0
      %1967 = vmatprep.mubr.f32.mxu0 0.0
      %1968 = vmatmul.mubr.f32.gmra.mrb[0].mxu0 %v1895
      %v1969 = vpop.f32.mrb[0].mxu0
      %v1970 = vadd.f32 0.0, %v1969
      %v1971 = vpop.f32.mrb[0].mxu0
      %1972 = vdwg.mxu0
      %v1973 = vadd.f32 %v1869, %v1965
      %v1974 = vadd.f32 %v1870, %v1970
      %s1975 = scalar_lea.vmem %s7, 640
      %v1976 = vld [vmem:[%s1975] sm:$0xff]
      %v1977 = vld [vmem:[%s1975 + $0x8] sm:$0xff]
      %v1978 = vld [vmem:[%s1975 + $0x10] sm:$0xff]
      %v1979 = vld [vmem:[%s1975 + $0x18] sm:$0xff]
      %v1980 = vld [vmem:[%s1975 + $0x20] sm:$0xff]
      %v1981 = vld [vmem:[%s1975 + $0x28] sm:$0xff]
      %v1982 = vld [vmem:[%s1975 + $0x30] sm:$0xff]
      %v1983 = vld [vmem:[%s1975 + $0x38] sm:$0xff]
      %v1984 = vld [vmem:[%s1975 + $0x40] sm:$0xff]
      %v1985 = vld [vmem:[%s1975 + $0x48] sm:$0xff]
      %v1986 = vld [vmem:[%s1975 + $0x50] sm:$0xff]
      %v1987 = vld [vmem:[%s1975 + $0x58] sm:$0xff]
      %v1988 = vld [vmem:[%s1975 + $0x60] sm:$0xff]
      %v1989 = vld [vmem:[%s1975 + $0x68] sm:$0xff]
      %v1990 = vld [vmem:[%s1975 + $0x70] sm:$0xff]
      %v1991 = vld [vmem:[%s1975 + $0x78] sm:$0xff]
      %v1992 = vrot.slane %v1774, 2
      %v1993 = vrot.slane %v1775, 2
      %v1994 = vsel %vm784, %v1992, %v1993
      %v1995 = vrot.slane %v1776, 2
      %v1996 = vsel %vm784, %v1993, %v1995
      %1999 = vmatprep.subr.mxu0 0.0
      %2000 = vmatpush1.msra.mxu0 %v1976
      %2001 = vmatprep.subr.mxu0 0.0
      %2002 = vmatpush1.msra.mxu0 %v1977
      %2003 = vmatprep.subr.mxu0 0.0
      %2004 = vmatpush1.msra.mxu0 %v1978
      %2005 = vmatprep.subr.mxu0 0.0
      %2006 = vmatpush1.msra.mxu0 %v1979
      %2007 = vmatprep.subr.mxu0 0.0
      %2008 = vmatpush1.msra.mxu0 %v1980
      %2009 = vmatprep.subr.mxu0 0.0
      %2010 = vmatpush1.msra.mxu0 %v1981
      %2011 = vmatprep.subr.mxu0 0.0
      %2012 = vmatpush1.msra.mxu0 %v1982
      %2013 = vmatprep.subr.mxu0 0.0
      %2014 = vmatpush1.msra.mxu0 %v1983
      %2015 = vmatprep.subr.mxu0 0.0
      %2016 = vmatpush1.msra.mxu0 %v1984
      %2017 = vmatprep.subr.mxu0 0.0
      %2018 = vmatpush1.msra.mxu0 %v1985
      %2019 = vmatprep.subr.mxu0 0.0
      %2020 = vmatpush1.msra.mxu0 %v1986
      %2021 = vmatprep.subr.mxu0 0.0
      %2022 = vmatpush1.msra.mxu0 %v1987
      %2023 = vmatprep.subr.mxu0 0.0
      %2024 = vmatpush1.msra.mxu0 %v1988
      %2025 = vmatprep.subr.mxu0 0.0
      %2026 = vmatpush1.msra.mxu0 %v1989
      %2027 = vmatprep.subr.mxu0 0.0
      %2028 = vmatpush1.msra.mxu0 %v1990
      %2029 = vmatprep.subr.mxu0 0.0
      %2030 = vmatpush1.msra.mxu0 %v1991
      %2031 = vmatprep.subr.mxu0 0.0
      %2032 = vmatpush1.msra.mxu0 0.0
      %2033 = vmatprep.subr.mxu0 0.0
      %2034 = vmatpush1.msra.mxu0 0.0
      %2035 = vmatprep.subr.mxu0 0.0
      %2036 = vmatpush1.msra.mxu0 0.0
      %2037 = vmatprep.subr.mxu0 0.0
      %2038 = vmatpush1.msra.mxu0 0.0
      %2039 = vmatprep.subr.mxu0 0.0
      %2040 = vmatpush1.msra.mxu0 0.0
      %2041 = vmatprep.subr.mxu0 0.0
      %2042 = vmatpush1.msra.mxu0 0.0
      %2043 = vmatprep.subr.mxu0 0.0
      %2044 = vmatpush1.msra.mxu0 0.0
      %2045 = vmatprep.subr.mxu0 0.0
      %2046 = vmatpush1.msra.mxu0 0.0
      %2047 = vmatprep.subr.mxu0 0.0
      %2048 = vmatpush1.msra.mxu0 0.0
      %2049 = vmatprep.subr.mxu0 0.0
      %2050 = vmatpush1.msra.mxu0 0.0
      %2051 = vmatprep.subr.mxu0 0.0
      %2052 = vmatpush1.msra.mxu0 0.0
      %2053 = vmatprep.subr.mxu0 0.0
      %2054 = vmatpush1.msra.mxu0 0.0
      %2055 = vmatprep.subr.mxu0 0.0
      %2056 = vmatpush1.msra.mxu0 0.0
      %2057 = vmatprep.subr.mxu0 0.0
      %2058 = vmatpush1.msra.mxu0 0.0
      %2059 = vmatprep.subr.mxu0 0.0
      %2060 = vmatpush1.msra.mxu0 0.0
      %2061 = vmatprep.subr.mxu0 0.0
      %2062 = vmatpush1.msra.mxu0 0.0
      %2063 = vmatprep.mubr.f32.mxu0 0.0
      %2064 = vmatmul.mubr.f32.gmra.mrb[0].mxu0 %v1994
      %v2065 = vpop.f32.mrb[0].mxu0
      %v2066 = vadd.f32 0.0, %v2065
      %v2067 = vpop.f32.mrb[0].mxu0
      %2068 = vmatprep.mubr.f32.mxu0 0.0
      %2069 = vmatmul.mubr.f32.gmra.mrb[0].mxu0 %v1996
      %v2070 = vpop.f32.mrb[0].mxu0
      %v2071 = vadd.f32 0.0, %v2070
      %v2072 = vpop.f32.mrb[0].mxu0
      %2073 = vdwg.mxu0
      %v2074 = vadd.f32 %v1973, %v2066
      %v2075 = vadd.f32 %v1974, %v2071
      %v2076 = vld [vmem:[%s557] sm:$0xff]
      %v2077 = vld [vmem:[%s557 + $0x8] sm:$0xff]
      %v2078 = vld [vmem:[%s557 + $0x10] sm:$0x3]
      %s2079 = scalar_lea.vmem %s7, 768
      %v2080 = vld [vmem:[%s2079] sm:$0xff]
      %v2081 = vld [vmem:[%s2079 + $0x8] sm:$0xff]
      %v2082 = vld [vmem:[%s2079 + $0x10] sm:$0xff]
      %v2083 = vld [vmem:[%s2079 + $0x18] sm:$0xff]
      %v2084 = vld [vmem:[%s2079 + $0x20] sm:$0xff]
      %v2085 = vld [vmem:[%s2079 + $0x28] sm:$0xff]
      %v2086 = vld [vmem:[%s2079 + $0x30] sm:$0xff]
      %v2087 = vld [vmem:[%s2079 + $0x38] sm:$0xff]
      %v2088 = vld [vmem:[%s2079 + $0x40] sm:$0xff]
      %v2089 = vld [vmem:[%s2079 + $0x48] sm:$0xff]
      %v2090 = vld [vmem:[%s2079 + $0x50] sm:$0xff]
      %v2091 = vld [vmem:[%s2079 + $0x58] sm:$0xff]
      %v2092 = vld [vmem:[%s2079 + $0x60] sm:$0xff]
      %v2093 = vld [vmem:[%s2079 + $0x68] sm:$0xff]
      %v2094 = vld [vmem:[%s2079 + $0x70] sm:$0xff]
      %v2095 = vld [vmem:[%s2079 + $0x78] sm:$0xff]
      %2096 = vmatprep.subr.mxu0 0.0
      %2097 = vmatpush1.msra.mxu0 %v2080
      %2098 = vmatprep.subr.mxu0 0.0
      %2099 = vmatpush1.msra.mxu0 %v2081
      %2100 = vmatprep.subr.mxu0 0.0
      %2101 = vmatpush1.msra.mxu0 %v2082
      %2102 = vmatprep.subr.mxu0 0.0
      %2103 = vmatpush1.msra.mxu0 %v2083
      %2104 = vmatprep.subr.mxu0 0.0
      %2105 = vmatpush1.msra.mxu0 %v2084
      %2106 = vmatprep.subr.mxu0 0.0
      %2107 = vmatpush1.msra.mxu0 %v2085
      %2108 = vmatprep.subr.mxu0 0.0
      %2109 = vmatpush1.msra.mxu0 %v2086
      %2110 = vmatprep.subr.mxu0 0.0
      %2111 = vmatpush1.msra.mxu0 %v2087
      %2112 = vmatprep.subr.mxu0 0.0
      %2113 = vmatpush1.msra.mxu0 %v2088
      %2114 = vmatprep.subr.mxu0 0.0
      %2115 = vmatpush1.msra.mxu0 %v2089
      %2116 = vmatprep.subr.mxu0 0.0
      %2117 = vmatpush1.msra.mxu0 %v2090
      %2118 = vmatprep.subr.mxu0 0.0
      %2119 = vmatpush1.msra.mxu0 %v2091
      %2120 = vmatprep.subr.mxu0 0.0
      %2121 = vmatpush1.msra.mxu0 %v2092
      %2122 = vmatprep.subr.mxu0 0.0
      %2123 = vmatpush1.msra.mxu0 %v2093
      %2124 = vmatprep.subr.mxu0 0.0
      %2125 = vmatpush1.msra.mxu0 %v2094
      %2126 = vmatprep.subr.mxu0 0.0
      %2127 = vmatpush1.msra.mxu0 %v2095
      %2128 = vmatprep.subr.mxu0 0.0
      %2129 = vmatpush1.msra.mxu0 0.0
      %2130 = vmatprep.subr.mxu0 0.0
      %2131 = vmatpush1.msra.mxu0 0.0
      %2132 = vmatprep.subr.mxu0 0.0
      %2133 = vmatpush1.msra.mxu0 0.0
      %2134 = vmatprep.subr.mxu0 0.0
      %2135 = vmatpush1.msra.mxu0 0.0
      %2136 = vmatprep.subr.mxu0 0.0
      %2137 = vmatpush1.msra.mxu0 0.0
      %2138 = vmatprep.subr.mxu0 0.0
      %2139 = vmatpush1.msra.mxu0 0.0
      %2140 = vmatprep.subr.mxu0 0.0
      %2141 = vmatpush1.msra.mxu0 0.0
      %2142 = vmatprep.subr.mxu0 0.0
      %2143 = vmatpush1.msra.mxu0 0.0
      %2144 = vmatprep.subr.mxu0 0.0
      %2145 = vmatpush1.msra.mxu0 0.0
      %2146 = vmatprep.subr.mxu0 0.0
      %2147 = vmatpush1.msra.mxu0 0.0
      %2148 = vmatprep.subr.mxu0 0.0
      %2149 = vmatpush1.msra.mxu0 0.0
      %2150 = vmatprep.subr.mxu0 0.0
      %2151 = vmatpush1.msra.mxu0 0.0
      %2152 = vmatprep.subr.mxu0 0.0
      %2153 = vmatpush1.msra.mxu0 0.0
      %2154 = vmatprep.subr.mxu0 0.0
      %2155 = vmatpush1.msra.mxu0 0.0
      %2156 = vmatprep.subr.mxu0 0.0
      %2157 = vmatpush1.msra.mxu0 0.0
      %2158 = vmatprep.subr.mxu0 0.0
      %2159 = vmatpush1.msra.mxu0 0.0
      %2160 = vmatprep.mubr.f32.mxu0 0.0
      %2161 = vmatmul.mubr.f32.gmra.mrb[0].mxu0 %v2076
      %v2162 = vpop.f32.mrb[0].mxu0
      %v2163 = vadd.f32 0.0, %v2162
      %v2164 = vpop.f32.mrb[0].mxu0
      %2165 = vmatprep.mubr.f32.mxu0 0.0
      %2166 = vmatmul.mubr.f32.gmra.mrb[0].mxu0 %v2077
      %v2167 = vpop.f32.mrb[0].mxu0
      %v2168 = vadd.f32 0.0, %v2167
      %v2169 = vpop.f32.mrb[0].mxu0
      %2170 = vdwg.mxu0
      %v2171 = vadd.f32 %v2074, %v2163
      %v2172 = vadd.f32 %v2075, %v2168
      %s2173 = scalar_lea.vmem %s7, 896
      %v2174 = vld [vmem:[%s2173] sm:$0xff]
      %v2175 = vld [vmem:[%s2173 + $0x8] sm:$0xff]
      %v2176 = vld [vmem:[%s2173 + $0x10] sm:$0xff]
      %v2177 = vld [vmem:[%s2173 + $0x18] sm:$0xff]
      %v2178 = vld [vmem:[%s2173 + $0x20] sm:$0xff]
      %v2179 = vld [vmem:[%s2173 + $0x28] sm:$0xff]
      %v2180 = vld [vmem:[%s2173 + $0x30] sm:$0xff]
      %v2181 = vld [vmem:[%s2173 + $0x38] sm:$0xff]
      %v2182 = vld [vmem:[%s2173 + $0x40] sm:$0xff]
      %v2183 = vld [vmem:[%s2173 + $0x48] sm:$0xff]
      %v2184 = vld [vmem:[%s2173 + $0x50] sm:$0xff]
      %v2185 = vld [vmem:[%s2173 + $0x58] sm:$0xff]
      %v2186 = vld [vmem:[%s2173 + $0x60] sm:$0xff]
      %v2187 = vld [vmem:[%s2173 + $0x68] sm:$0xff]
      %v2188 = vld [vmem:[%s2173 + $0x70] sm:$0xff]
      %v2189 = vld [vmem:[%s2173 + $0x78] sm:$0xff]
      %v2193 = vrot.slane %v2076, 1
      %v2194 = vrot.slane %v2077, 1
      %v2195 = vsel %vm609, %v2193, %v2194
      %v2196 = vrot.slane %v2078, 1
      %v2197 = vsel %vm609, %v2194, %v2196
      %2200 = vmatprep.subr.mxu0 0.0
      %2201 = vmatpush1.msra.mxu0 %v2174
      %2202 = vmatprep.subr.mxu0 0.0
      %2203 = vmatpush1.msra.mxu0 %v2175
      %2204 = vmatprep.subr.mxu0 0.0
      %2205 = vmatpush1.msra.mxu0 %v2176
      %2206 = vmatprep.subr.mxu0 0.0
      %2207 = vmatpush1.msra.mxu0 %v2177
      %2208 = vmatprep.subr.mxu0 0.0
      %2209 = vmatpush1.msra.mxu0 %v2178
      %2210 = vmatprep.subr.mxu0 0.0
      %2211 = vmatpush1.msra.mxu0 %v2179
      %2212 = vmatprep.subr.mxu0 0.0
      %2213 = vmatpush1.msra.mxu0 %v2180
      %2214 = vmatprep.subr.mxu0 0.0
      %2215 = vmatpush1.msra.mxu0 %v2181
      %2216 = vmatprep.subr.mxu0 0.0
      %2217 = vmatpush1.msra.mxu0 %v2182
      %2218 = vmatprep.subr.mxu0 0.0
      %2219 = vmatpush1.msra.mxu0 %v2183
      %2220 = vmatprep.subr.mxu0 0.0
      %2221 = vmatpush1.msra.mxu0 %v2184
      %2222 = vmatprep.subr.mxu0 0.0
      %2223 = vmatpush1.msra.mxu0 %v2185
      %2224 = vmatprep.subr.mxu0 0.0
      %2225 = vmatpush1.msra.mxu0 %v2186
      %2226 = vmatprep.subr.mxu0 0.0
      %2227 = vmatpush1.msra.mxu0 %v2187
      %2228 = vmatprep.subr.mxu0 0.0
      %2229 = vmatpush1.msra.mxu0 %v2188
      %2230 = vmatprep.subr.mxu0 0.0
      %2231 = vmatpush1.msra.mxu0 %v2189
      %2232 = vmatprep.subr.mxu0 0.0
      %2233 = vmatpush1.msra.mxu0 0.0
      %2234 = vmatprep.subr.mxu0 0.0
      %2235 = vmatpush1.msra.mxu0 0.0
      %2236 = vmatprep.subr.mxu0 0.0
      %2237 = vmatpush1.msra.mxu0 0.0
      %2238 = vmatprep.subr.mxu0 0.0
      %2239 = vmatpush1.msra.mxu0 0.0
      %2240 = vmatprep.subr.mxu0 0.0
      %2241 = vmatpush1.msra.mxu0 0.0
      %2242 = vmatprep.subr.mxu0 0.0
      %2243 = vmatpush1.msra.mxu0 0.0
      %2244 = vmatprep.subr.mxu0 0.0
      %2245 = vmatpush1.msra.mxu0 0.0
      %2246 = vmatprep.subr.mxu0 0.0
      %2247 = vmatpush1.msra.mxu0 0.0
      %2248 = vmatprep.subr.mxu0 0.0
      %2249 = vmatpush1.msra.mxu0 0.0
      %2250 = vmatprep.subr.mxu0 0.0
      %2251 = vmatpush1.msra.mxu0 0.0
      %2252 = vmatprep.subr.mxu0 0.0
      %2253 = vmatpush1.msra.mxu0 0.0
      %2254 = vmatprep.subr.mxu0 0.0
      %2255 = vmatpush1.msra.mxu0 0.0
      %2256 = vmatprep.subr.mxu0 0.0
      %2257 = vmatpush1.msra.mxu0 0.0
      %2258 = vmatprep.subr.mxu0 0.0
      %2259 = vmatpush1.msra.mxu0 0.0
      %2260 = vmatprep.subr.mxu0 0.0
      %2261 = vmatpush1.msra.mxu0 0.0
      %2262 = vmatprep.subr.mxu0 0.0
      %2263 = vmatpush1.msra.mxu0 0.0
      %2264 = vmatprep.mubr.f32.mxu0 0.0
      %2265 = vmatmul.mubr.f32.gmra.mrb[0].mxu0 %v2195
      %v2266 = vpop.f32.mrb[0].mxu0
      %v2267 = vadd.f32 0.0, %v2266
      %v2268 = vpop.f32.mrb[0].mxu0
      %2269 = vmatprep.mubr.f32.mxu0 0.0
      %2270 = vmatmul.mubr.f32.gmra.mrb[0].mxu0 %v2197
      %v2271 = vpop.f32.mrb[0].mxu0
      %v2272 = vadd.f32 0.0, %v2271
      %v2273 = vpop.f32.mrb[0].mxu0
      %2274 = vdwg.mxu0
      %v2275 = vadd.f32 %v2171, %v2267
      %v2276 = vadd.f32 %v2172, %v2272
      %s2277 = scalar_lea.vmem %s7, 1024
      %v2278 = vld [vmem:[%s2277] sm:$0xff]
      %v2279 = vld [vmem:[%s2277 + $0x8] sm:$0xff]
      %v2280 = vld [vmem:[%s2277 + $0x10] sm:$0xff]
      %v2281 = vld [vmem:[%s2277 + $0x18] sm:$0xff]
      %v2282 = vld [vmem:[%s2277 + $0x20] sm:$0xff]
      %v2283 = vld [vmem:[%s2277 + $0x28] sm:$0xff]
      %v2284 = vld [vmem:[%s2277 + $0x30] sm:$0xff]
      %v2285 = vld [vmem:[%s2277 + $0x38] sm:$0xff]
      %v2286 = vld [vmem:[%s2277 + $0x40] sm:$0xff]
      %v2287 = vld [vmem:[%s2277 + $0x48] sm:$0xff]
      %v2288 = vld [vmem:[%s2277 + $0x50] sm:$0xff]
      %v2289 = vld [vmem:[%s2277 + $0x58] sm:$0xff]
      %v2290 = vld [vmem:[%s2277 + $0x60] sm:$0xff]
      %v2291 = vld [vmem:[%s2277 + $0x68] sm:$0xff]
      %v2292 = vld [vmem:[%s2277 + $0x70] sm:$0xff]
      %v2293 = vld [vmem:[%s2277 + $0x78] sm:$0xff]
      %v2294 = vrot.slane %v2076, 2
      %v2295 = vrot.slane %v2077, 2
      %v2296 = vsel %vm784, %v2294, %v2295
      %v2297 = vrot.slane %v2078, 2
      %v2298 = vsel %vm784, %v2295, %v2297
      %2301 = vmatprep.subr.mxu0 0.0
      %2302 = vmatpush1.msra.mxu0 %v2278
      %2303 = vmatprep.subr.mxu0 0.0
      %2304 = vmatpush1.msra.mxu0 %v2279
      %2305 = vmatprep.subr.mxu0 0.0
      %2306 = vmatpush1.msra.mxu0 %v2280
      %2307 = vmatprep.subr.mxu0 0.0
      %2308 = vmatpush1.msra.mxu0 %v2281
      %2309 = vmatprep.subr.mxu0 0.0
      %2310 = vmatpush1.msra.mxu0 %v2282
      %2311 = vmatprep.subr.mxu0 0.0
      %2312 = vmatpush1.msra.mxu0 %v2283
      %2313 = vmatprep.subr.mxu0 0.0
      %2314 = vmatpush1.msra.mxu0 %v2284
      %2315 = vmatprep.subr.mxu0 0.0
      %2316 = vmatpush1.msra.mxu0 %v2285
      %2317 = vmatprep.subr.mxu0 0.0
      %2318 = vmatpush1.msra.mxu0 %v2286
      %2319 = vmatprep.subr.mxu0 0.0
      %2320 = vmatpush1.msra.mxu0 %v2287
      %2321 = vmatprep.subr.mxu0 0.0
      %2322 = vmatpush1.msra.mxu0 %v2288
      %2323 = vmatprep.subr.mxu0 0.0
      %2324 = vmatpush1.msra.mxu0 %v2289
      %2325 = vmatprep.subr.mxu0 0.0
      %2326 = vmatpush1.msra.mxu0 %v2290
      %2327 = vmatprep.subr.mxu0 0.0
      %2328 = vmatpush1.msra.mxu0 %v2291
      %2329 = vmatprep.subr.mxu0 0.0
      %2330 = vmatpush1.msra.mxu0 %v2292
      %2331 = vmatprep.subr.mxu0 0.0
      %2332 = vmatpush1.msra.mxu0 %v2293
      %2333 = vmatprep.subr.mxu0 0.0
      %2334 = vmatpush1.msra.mxu0 0.0
      %2335 = vmatprep.subr.mxu0 0.0
      %2336 = vmatpush1.msra.mxu0 0.0
      %2337 = vmatprep.subr.mxu0 0.0
      %2338 = vmatpush1.msra.mxu0 0.0
      %2339 = vmatprep.subr.mxu0 0.0
      %2340 = vmatpush1.msra.mxu0 0.0
      %2341 = vmatprep.subr.mxu0 0.0
      %2342 = vmatpush1.msra.mxu0 0.0
      %2343 = vmatprep.subr.mxu0 0.0
      %2344 = vmatpush1.msra.mxu0 0.0
      %2345 = vmatprep.subr.mxu0 0.0
      %2346 = vmatpush1.msra.mxu0 0.0
      %2347 = vmatprep.subr.mxu0 0.0
      %2348 = vmatpush1.msra.mxu0 0.0
      %2349 = vmatprep.subr.mxu0 0.0
      %2350 = vmatpush1.msra.mxu0 0.0
      %2351 = vmatprep.subr.mxu0 0.0
      %2352 = vmatpush1.msra.mxu0 0.0
      %2353 = vmatprep.subr.mxu0 0.0
      %2354 = vmatpush1.msra.mxu0 0.0
      %2355 = vmatprep.subr.mxu0 0.0
      %2356 = vmatpush1.msra.mxu0 0.0
      %2357 = vmatprep.subr.mxu0 0.0
      %2358 = vmatpush1.msra.mxu0 0.0
      %2359 = vmatprep.subr.mxu0 0.0
      %2360 = vmatpush1.msra.mxu0 0.0
      %2361 = vmatprep.subr.mxu0 0.0
      %2362 = vmatpush1.msra.mxu0 0.0
      %2363 = vmatprep.subr.mxu0 0.0
      %2364 = vmatpush1.msra.mxu0 0.0
      %2365 = vmatprep.mubr.f32.mxu0 0.0
      %2366 = vmatmul.mubr.f32.gmra.mrb[0].mxu0 %v2296
      %v2367 = vpop.f32.mrb[0].mxu0
      %v2368 = vadd.f32 0.0, %v2367
      %v2369 = vpop.f32.mrb[0].mxu0
      %2370 = vmatprep.mubr.f32.mxu0 0.0
      %2371 = vmatmul.mubr.f32.gmra.mrb[0].mxu0 %v2298
      %v2372 = vpop.f32.mrb[0].mxu0
      %v2373 = vadd.f32 0.0, %v2372
      %v2374 = vpop.f32.mrb[0].mxu0
      %2375 = vdwg.mxu0
      %v2376 = vadd.f32 %v2275, %v2368
      %v2377 = vadd.f32 %v2276, %v2373
      %vm2380 = vcmask 1040384
      %v2381 = vrot.slane %v2376, 7
      %v2382 = vrot.slane %v2377, 7
      %v2383 = vsel %vm2380, %v2381, %v2382
      %v2387 = vsel %vm2380, 0.0, %v2381
      %v2388 = vsel %vm2380, %v2382, 0.0
      %2389 = vst [vmem:[%s568] sm:$0xff] %v2387
      %2390 = vst [vmem:[%s568 + $0x8] sm:$0xff] %v2383
      %2391 = vst [vmem:[%s568 + $0x10] sm:$0x3] %v2388
      %p2392 = scmp.eq.s32.totalorder %s25, 0
      %p2393 = scmp.eq.s32.totalorder %s26, 0
      %p2394 = pnand %p2392, %p2393
      %p2395 = pneg %p2394
      // Predicated region
      $region53: #{up_forward.5} parent=51 // pred_check
        _
      $region54: #{up_forward.5} parent=51 // pred_check_branch
        %2397 = sbr.rel (%p2394) target = $region56
      $region55: #{up_forward.5} parent=51 // pred_region
        %2398 = vst [vmem:[%s9] sm:$0x3] 0.0
      $region56: #{up_forward.5} parent=51 // pred_fallthru
        _
      %v2399 = vld [vmem:[%s9] sm:$0x3]
      %v2400 = vadd.f32 %v2376, %v2377
      %v2401 = vrot.slane %v2400, 4
      %v2402 = vadd.f32 %v2400, %v2401
      %v2403 = vrot.slane %v2402, 2
      %v2404 = vadd.f32 %v2402, %v2403
      %v2405 = vrot.slane %v2404, 1
      %v2406 = vadd.f32 %v2404, %v2405
      %v2407 = vmul.f32 %v2376, %v2376
      %v2408 = vmul.f32 %v2377, %v2377
      %v2409 = vadd.f32 %v2407, %v2408
      %v2410 = vrot.slane %v2409, 4
      %v2411 = vadd.f32 %v2409, %v2410
      %v2412 = vrot.slane %v2411, 2
      %v2413 = vadd.f32 %v2411, %v2412
      %v2414 = vrot.slane %v2413, 1
      %v2415 = vadd.f32 %v2413, %v2414
      %v2416 = vsel %vm2380, %v2406, %v2415
      %v2417 = vadd.f32 %v2399, %v2416
      %2418 = vst [vmem:[%s9] sm:$0x3] %v2417
      %s2419 = sadd.s32 %s26, 1
      %p2420 = scmp.lt.s32.totalorder %s25, 1
      %s2421 = scalar_select %p2420, %s25, 1
      %p2422 = scmp.lt.s32.totalorder %s2419, 17
      %s2423 = scalar_select %p2422, %s2419, 17
      %s2424 = smul.addr %s2423, 3
      %s2425 = smul.addr %s2421, 54
      %s2426 = sadd.s32 %s2424, %s2425
      %s2427 = smul.addr %s2426, 8
      %s2428 = scalar_lea.vmem %s8, %s2427
      // Predicated region
      $region57: #{up_forward.5} parent=51 // pred_check
        %p2429 = pneg %p273
      $region58: #{up_forward.5} parent=51 // pred_check_branch
        %2431 = sbr.rel (%p2429) target = $region60
      $region59: #{up_forward.5} parent=51 // pred_region
        %s2432 = sadd.s32 %s26, 1
      $region60: #{up_forward.5} parent=51 // pred_fallthru
        _
      // Predicated region
      $region61: #{up_forward.5} parent=51 // pred_check
        %p2433 = pneg %p294
      $region62: #{up_forward.5} parent=51 // pred_check_branch
        %2435 = sbr.rel (%p2433) target = $region64
      $region63: #{up_forward.5} parent=51 // pred_region
        _
      $region64: #{up_forward.5} parent=51 // pred_fallthru
        _
      // Predicated region
      $region65: #{up_forward.5} parent=51 // pred_check
        %p2436 = pneg %p294
      $region66: #{up_forward.5} parent=51 // pred_check_branch
        %2438 = sbr.rel (%p2436) target = $region68
      $region67: #{up_forward.5} parent=51 // pred_region
        _
      $region68: #{up_forward.5} parent=51 // pred_fallthru
        _
    $region52: #{up_forward.5} parent=5 // pred_fallthru
      _
    %p2439 = scmp.le.s32.totalorder 2, %s16
    // Predicated region
    $region69: #{up_forward.5} parent=5 // pred_check
      %p2440 = pneg %p2439
    $region70: #{up_forward.5} parent=5 // pred_check_branch
      %2442 = sbr.rel (%p2440) target = $region72
    $region71: #{up_forward.5} parent=5 // pred_region
      %s2443 = ssub.s32 %s16, 2
      // Predicated region
      $region73: #{up_forward.5} parent=71 // pred_check
        %p2444 = pneg %p279
      $region74: #{up_forward.5} parent=71 // pred_check_branch
        %2446 = sbr.rel (%p2444) target = $region76
      $region75: #{up_forward.5} parent=71 // pred_region
        %s2447 = sadd.s32 %s28, 1
        %p2448 = scmp.lt.s32.totalorder %s27, 1
        %s2449 = scalar_select %p2448, %s27, 1
        %p2450 = scmp.lt.s32.totalorder %s2447, 17
        %s2451 = scalar_select %p2450, %s2447, 17
        %s2452 = smul.addr %s2451, 3
        %s2453 = smul.addr %s2449, 54
        %s2454 = sadd.s32 %s2452, %s2453
        %s2455 = smul.addr %s2454, 8
        %s2456 = scalar_lea.vmem %s8, %s2455
      $region76: #{up_forward.5} parent=71 // pred_fallthru
        _
    $region72: #{up_forward.5} parent=5 // pred_fallthru
      _
  $region6: #{up_forward.5} parent=0 // loop_footer
    %s20 = sadd.s32 1, %s16
  $region7: #{up_forward.5} parent=0 // loop_footer_branch
    %15 = sbr.rel target = $region3
  $region8: #{up_forward.5} parent=0 // loop_exit
    _

</llo_original>
